<compile_context>
chip_gen: v6e
topology: v6e:2x2x1
jax: 0.10.0
libtpu: 0.0.40
codegen_flags: <defaults>
</compile_context>

<pallas_src>
import math
import functools

import jax
import jax.numpy as jnp
from jax.experimental import pallas as pl
from jax.experimental.pallas import tpu as pltpu

# ----------------------------------------------------------------------------
# Config (small synthetic sizes consistent with the module's __init__)
# ----------------------------------------------------------------------------
CFG = dict(
    hidden_size=32,
    num_heads=4,
    num_layers=2,
    dropout_rate=0.0,              # dropout is identity at inference
    moverz_lambda_max=10000.0,
    moverz_lambda_min=0.001,
    product_max_charge=2,
    precursor_max_charge=3,
    ms2_max_peak_count=256,
    n_term_ion=("b",),
    c_term_ion=("y",),
)
PEAK_CLASS_VOCAB = CFG["product_max_charge"] * 6 + 2 + CFG["precursor_max_charge"] + 1 + 30  # 48
ASTRAL_FILTERING = False  # TODO(synk): global `astral_filtering` undefined in reference; default off.
K_TAPS = 5                # kernel size of the dilated conv stack
CONV_DIL2 = 2             # dilation of the second conv in each module


# ----------------------------------------------------------------------------
# The single fused Pallas kernel
# ----------------------------------------------------------------------------
def _rnova_fwd_kernel(
        # fused conv (im2col conv1, stacked conv2)
        x1_ref, w1_ref, b1_ref, w2_ref, b2_ref,
        # moverz / absolute / gnova
        mz_sin_ref, mw_ref, mb_ref, emb_ref, gn_ref, gw_ref, gb_ref,
        # input LN
        ilng_ref, ilnb_ref,
        # rotary tables (tiled over q|k of all heads)
        cos2_ref, sin2_ref,
        # stacked per-layer weights (leading dim = num_layers)
        ln1g_ref, ln1b_ref, qkvw_ref, qkvb_ref, rotw_ref, rotb_ref,
        ow_ref, ob_ref, ln2g_ref, ln2b_ref, f1w_ref, f1b_ref, f2w_ref, f2b_ref,
        # output LN
        olng_ref, olnb_ref,
        # out + scratch
        o_ref, hbuf_ref,
        *, num_heads, num_layers, seq_len, ktaps, dil2):
    f32 = jnp.float32
    L = seq_len
    H = mz_sin_ref.shape[-1]
    H2 = 2 * H
    Dh = H // num_heads
    pad2 = (ktaps // 2) * dil2
    scale = 1.0 / math.sqrt(Dh)

    def layernorm(v, g, b):
        mu = jnp.mean(v, axis=-1, keepdims=True)
        vc = v - mu
        var = jnp.mean(vc * vc, axis=-1, keepdims=True)
        return vc * jax.lax.rsqrt(var + 1e-5) * g + b

    # ---------------- input stage ----------------
    # TODO(synk): DilatedConvolutionModule source unavailable; assumed two dilated
    # Conv1d layers (kernel=5, dilations 1 and 2, 'same' padding) with GELU between.
    # conv1 of BOTH branches: one im2col matmul -> (L, 2H)
    h1 = jnp.dot(x1_ref[...], w1_ref[...], preferred_element_type=f32) + b1_ref[...]
    h1 = jax.nn.gelu(h1, approximate=True)
    # zero only the pad rows (middle rows fully overwritten)
    hbuf_ref[0:pad2, :] = jnp.zeros((pad2, H2), f32)
    hbuf_ref[pad2 + L:pad2 + L + pad2, :] = jnp.zeros((pad2, H2), f32)
    hbuf_ref[pad2:pad2 + L, :] = h1
    # conv2 of both branches fused along the contraction (K = 2H); branch sum is free
    xgram_info = jnp.zeros((L, H), f32) + b2_ref[...]
    for t in range(ktaps):                       # static unroll over taps
        xgram_info = xgram_info + jnp.dot(hbuf_ref[t * dil2:t * dil2 + L, :], w2_ref[t],
                                          preferred_element_type=f32)

    # moverz embedding: Linear(sinusoidal(mz))
    moverz_emb = jnp.dot(mz_sin_ref[...], mw_ref[...], preferred_element_type=f32) + mb_ref[...]

    # gnova GLU: one (L, 2H) matmul, split in-kernel
    gl = jnp.dot(gn_ref[...], gw_ref[...], preferred_element_type=f32) + gb_ref[...]
    gnova_glu = gl[:, :H] * jax.nn.sigmoid(gl[:, H:])

    x = moverz_emb + emb_ref[...] + xgram_info + gnova_glu
    x = layernorm(x, ilng_ref[...], ilnb_ref[...])

    cos2 = cos2_ref[...]          # (L, 2H)
    sin2 = sin2_ref[...]          # (L, 2H)  (sign of rotate_half already folded into rot weights)

    # ---------------- encoder layers (static unroll) ----------------
    # TODO(synk): RNovaEncoderLayer source unavailable; assumed pre-LN transformer
    # layer with per-head rotary encoding driven by the relative m/z embedding.
    for l in range(num_layers):
        # --- attention block ---
        xn = layernorm(x, ln1g_ref[l], ln1b_ref[l])
        qkv = jnp.dot(xn, qkvw_ref[l], preferred_element_type=f32) + qkvb_ref[l]   # (L, 3H)
        rot = jnp.dot(xn, rotw_ref[l], preferred_element_type=f32) + rotb_ref[l]   # (L, 2H) = rotate_half(q|k)
        qk = qkv[:, :H2] * cos2 + rot * sin2                                        # roped q|k, full slab
        v_all = qkv[:, H2:]

        ow = ow_ref[l]
        acc = jnp.zeros((L, H), f32) + ob_ref[l]           # per-head O-proj accumulation (no concat)
        for h in range(num_heads):                          # static unroll; static lane slices
            q = qk[:, h * Dh:(h + 1) * Dh]
            k = qk[:, H + h * Dh:H + (h + 1) * Dh]
            v = v_all[:, h * Dh:(h + 1) * Dh]
            s = jax.lax.dot_general(q, k, (((1,), (1,)), ((), ())),
                                    preferred_element_type=f32) * scale
            m = jnp.max(s, axis=-1, keepdims=True)
            p = jnp.exp(s - m)
            p = p * pl.reciprocal(jnp.sum(p, axis=-1, keepdims=True), approx=True)
            hv = jnp.dot(p, v, preferred_element_type=f32)
            acc = acc + jnp.dot(hv, ow[h * Dh:(h + 1) * Dh, :], preferred_element_type=f32)
        x = x + acc

        # --- feed-forward block ---
        xn = layernorm(x, ln2g_ref[l], ln2b_ref[l])
        ff = jax.nn.gelu(jnp.dot(xn, f1w_ref[l], preferred_element_type=f32) + f1b_ref[l],
                         approximate=True)
        x = x + jnp.dot(ff, f2w_ref[l], preferred_element_type=f32) + f2b_ref[l]

    # ---------------- output LayerNorm ----------------
    o_ref[...] = layernorm(x, olng_ref[...], olnb_ref[...]).astype(o_ref.dtype)


# ----------------------------------------------------------------------------
# JAX glue (data-dependent gathers / concat and the sinusoidal tables)
# ----------------------------------------------------------------------------
def sinusoidal_embedding(mz, dim, lambda_max, lambda_min):
    # TODO(synk): SinusoidalPositionEmbedding source unavailable; standard GNova-style
    # geometric wavelength sweep [lambda_min, lambda_max], out = [sin | cos].
    base = lambda_min / (2.0 * math.pi)
    scale = lambda_max / lambda_min
    div_term = base * scale ** (jnp.arange(0, dim, 2, dtype=jnp.float32) / dim)
    ang = mz[:, None] / div_term[None, :]
    return jnp.concatenate([jnp.sin(ang), jnp.cos(ang)], axis=-1).astype(jnp.float32)


def process_gnova_feature(gnova_out, size_dict, ms1_sort, ms2_sort,
                          ms1_multi, ms2_multi, precursor_charge, cfg):
    num_ms1 = size_dict["ms1"]
    ms1 = gnova_out[:, :num_ms1, :]
    ms2 = gnova_out[:, num_ms1:, :]
    if ASTRAL_FILTERING:
        if ms1_multi is not None:
            ms1 = ms1[:, ms1_multi, :]
        ms2 = ms2[:, ms2_multi, :]
    ms1 = jnp.concatenate([ms1 for _ in range(1, cfg["precursor_max_charge"] + 1)], axis=1)
    ms1 = ms1[:, ms1_sort, :]
    ms2_list = []
    for _ion in cfg["n_term_ion"]:
        for charge in range(1, cfg["product_max_charge"] + 1):
            if precursor_charge == 2 and charge > 1:
                continue
            ms2_list.append(ms2)
    for _ion in cfg["c_term_ion"]:
        for charge in range(1, cfg["product_max_charge"] + 1):
            if precursor_charge == 2 and charge > 1:
                continue
            ms2_list.append(ms2)
    ms2 = jnp.concatenate(ms2_list, axis=1)
    ms2 = ms2[:, ms2_sort, :]
    D = ms1.shape[-1]
    zero = jnp.zeros((1, 1, D), jnp.float32)
    ms2 = jnp.concatenate([zero, ms2, zero], axis=1)
    return jnp.concatenate([ms1, ms2], axis=1)


def process_all_gnova_features(gnova_list, indices, sizes, precursor_charges, cfg):
    feats = []
    for i, g in enumerate(gnova_list):
        feats.append(process_gnova_feature(
            g, sizes[i], indices[i]["ms1_sort"], indices[i]["ms2_sort"],
            indices[i]["ms1_multiscan"], indices[i]["ms2_multiscan"],
            precursor_charges[i], cfg))
    return jnp.concatenate(feats, axis=0)


# ----------------------------------------------------------------------------
# Forward (to be wrapped in jax.jit by the caller)
# ----------------------------------------------------------------------------
def rnova_encoder_forward(params, cfg, moverz, xgram, feature, peak_class_index,
                          pos_index, ms1_ms2_flag, gnova_encoder_output_list,
                          meta_info_list):
    H, NH, NL = cfg["hidden_size"], cfg["num_heads"], cfg["num_layers"]
    Dh = H // NH
    half = Dh // 2
    B, L = moverz.shape
    assert B == 1, "synthetic script runs with batch=1"
    mz = moverz[0]

    # --- gnova features (data-dependent sorts/concat; XLA glue under jit) ---
    indices = [m["indices"] for m in meta_info_list]
    sizes = [m["sizes"] for m in meta_info_list]
    pcharges = [m["precursor_charge"] for m in meta_info_list]
    gnova_feat = process_all_gnova_features(gnova_encoder_output_list, indices, sizes,
                                            pcharges, cfg)[0]          # gnova_dropout identity
    assert gnova_feat.shape == (L, H)

    # --- absolute embeddings (gathers are XLA glue) ---
    mz_sin = sinusoidal_embedding(mz, H, cfg["moverz_lambda_max"], cfg["moverz_lambda_min"])
    emb_sum = (params["peak_class_emb"][peak_class_index[0]] +
               params["pos_emb"][pos_index[0]] +
               params["flag_emb"][ms1_ms2_flag[0]])

    # --- fused conv: im2col input for BOTH branches (channels = 8 feat + 1 xgram) ---
    pad1 = K_TAPS // 2
    x_cat = jnp.concatenate([feature[0], xgram[0][:, None]], axis=-1)        # (L, 9)
    x_cat_pad = jnp.pad(x_cat, ((pad1, pad1), (0, 0)))                       # (L+4, 9)
    x1 = jnp.concatenate([x_cat_pad[t:t + L] for t in range(K_TAPS)], axis=-1)  # (L, 45)
    x1 = jnp.pad(x1, ((0, 0), (0, 3)))                                       # (L, 48)

    Cin = 9
    w1_blocks = []
    for t in range(K_TAPS):
        blk = jnp.zeros((Cin, 2 * H), jnp.float32)
        blk = blk.at[:8, :H].set(params["feat_w1"][t])
        blk = blk.at[8:, H:].set(params["xg_w1"][t])
        w1_blocks.append(blk)
    w1cat = jnp.pad(jnp.concatenate(w1_blocks, axis=0), ((0, 3), (0, 0)))    # (48, 2H)
    b1cat = jnp.concatenate([params["feat_b1"], params["xg_b1"]], axis=-1)   # (1, 2H)
    w2cat = jnp.concatenate([params["feat_w2"], params["xg_w2"]], axis=1)    # (K, 2H, H)
    b2cat = params["feat_b2"] + params["xg_b2"]                              # (1, H)

    # --- rotary tables: relative embedding, identical per head (repeat_interleave) ---
    rel = sinusoidal_embedding(mz, Dh, cfg["moverz_lambda_max"], cfg["moverz_lambda_min"])
    sin_half, cos_half = rel[:, :half], rel[:, half:]
    cos_head = jnp.concatenate([cos_half, cos_half], axis=-1)                # (L, Dh)
    sin_head = jnp.concatenate([sin_half, sin_half], axis=-1)                # (L, Dh)
    cos2 = jnp.tile(cos_head, (1, 2 * NH))                                   # (L, 2H)  q|k, all heads
    sin2 = jnp.tile(sin_head, (1, 2 * NH))                                   # (L, 2H)

    # --- fold rotate_half into pre-rotated Q/K weights (no lane rotation in-kernel) ---
    R = jnp.zeros((Dh, Dh), jnp.float32)
    R = R.at[:half, half:].set(jnp.eye(half, dtype=jnp.float32))
    R = R.at[half:, :half].set(-jnp.eye(half, dtype=jnp.float32))
    Rbig = jnp.kron(jnp.eye(NH, dtype=jnp.float32), R)                       # (H, H) block-diag
    lp = params["layers"]
    rot_w = jnp.concatenate([lp["qkv_w"][:, :, :H] @ Rbig,
                             lp["qkv_w"][:, :, H:2 * H] @ Rbig], axis=-1)    # (NL, H, 2H)
    rot_b = jnp.concatenate([lp["qkv_b"][:, :, :H] @ Rbig,
                             lp["qkv_b"][:, :, H:2 * H] @ Rbig], axis=-1)    # (NL, 1, 2H)

    # --- the single fused Pallas kernel ---
    pad2 = (K_TAPS // 2) * CONV_DIL2
    kern = functools.partial(_rnova_fwd_kernel, num_heads=NH, num_layers=NL,
                             seq_len=L, ktaps=K_TAPS, dil2=CONV_DIL2)
    out = pl.pallas_call(
        kern,
        out_shape=jax.ShapeDtypeStruct((L, H), jnp.float32),
        scratch_shapes=[pltpu.VMEM((L + 2 * pad2, 2 * H), jnp.float32)],
    )(x1, w1cat, b1cat, w2cat, b2cat,
      mz_sin, params["moverz_w"], params["moverz_b"],
      emb_sum, gnova_feat, params["gnova_w"], params["gnova_b"],
      params["input_ln_g"], params["input_ln_b"],
      cos2, sin2,
      lp["ln1_g"], lp["ln1_b"], lp["qkv_w"], lp["qkv_b"], rot_w, rot_b,
      lp["o_w"], lp["o_b"], lp["ln2_g"], lp["ln2_b"],
      lp["ff1_w"], lp["ff1_b"], lp["ff2_w"], lp["ff2_b"],
      params["output_ln_g"], params["output_ln_b"])
    return out[None]  # (1, L, H)


# ----------------------------------------------------------------------------
# Deterministic parameter init
# ----------------------------------------------------------------------------
def init_params(key, cfg):
    H = cfg["hidden_size"]
    FF = 4 * H
    NL = cfg["num_layers"]
    keys = iter(jax.random.split(key, 64))

    def nrm(shape, scale=0.02):
        return scale * jax.random.normal(next(keys), shape, jnp.float32)

    p = {}
    p["moverz_w"], p["moverz_b"] = nrm((H, H)), nrm((1, H))
    p["peak_class_emb"] = nrm((PEAK_CLASS_VOCAB, H))
    p["pos_emb"] = nrm((cfg["ms2_max_peak_count"], H))
    p["flag_emb"] = nrm((2, H))

    # peak_feature_proj: DilatedConvolutionModule(8, H, 5)
    p["feat_w1"], p["feat_b1"] = nrm((K_TAPS, 8, H)), nrm((1, H))
    p["feat_w2"], p["feat_b2"] = nrm((K_TAPS, H, H)), nrm((1, H))
    # peak_xgram_proj: DilatedConvolutionModule(1, H, 5)
    p["xg_w1"], p["xg_b1"] = nrm((K_TAPS, 1, H)), nrm((1, H))
    p["xg_w2"], p["xg_b2"] = nrm((K_TAPS, H, H)), nrm((1, H))

    p["gnova_w"], p["gnova_b"] = nrm((H, 2 * H)), nrm((1, 2 * H))
    p["input_ln_g"], p["input_ln_b"] = jnp.ones((1, H), jnp.float32), jnp.zeros((1, H), jnp.float32)
    p["output_ln_g"], p["output_ln_b"] = jnp.ones((1, H), jnp.float32), jnp.zeros((1, H), jnp.float32)

    # stacked encoder layers (leading num_layers axis; statically indexed in-kernel)
    p["layers"] = dict(
        ln1_g=jnp.ones((NL, 1, H), jnp.float32), ln1_b=jnp.zeros((NL, 1, H), jnp.float32),
        qkv_w=nrm((NL, H, 3 * H)), qkv_b=nrm((NL, 1, 3 * H)),
        o_w=nrm((NL, H, H)), o_b=nrm((NL, 1, H)),
        ln2_g=jnp.ones((NL, 1, H), jnp.float32), ln2_b=jnp.zeros((NL, 1, H), jnp.float32),
        ff1_w=nrm((NL, H, FF)), ff1_b=nrm((NL, 1, FF)),
        ff2_w=nrm((NL, FF, H)), ff2_b=nrm((NL, 1, H)),
    )
    return p


# ----------------------------------------------------------------------------
# Main
# ----------------------------------------------------------------------------
if __name__ == "__main__":
    cfg = CFG
    H = cfg["hidden_size"]

    key = jax.random.PRNGKey(0)
    kp, kin = jax.random.split(key)
    params = init_params(kp, cfg)

    # synthetic gnova output / meta info
    num_ms1, num_ms2 = 2, 4
    precursor_charge = 3  # != 2 -> no charge skipping
    n_copies_ms2 = (len(cfg["n_term_ion"]) + len(cfg["c_term_ion"])) * cfg["product_max_charge"]
    L = num_ms1 * cfg["precursor_max_charge"] + num_ms2 * n_copies_ms2 + 2  # 6 + 16 + 2 = 24

    ks = jax.random.split(kin, 10)
    gnova_out = jax.random.normal(ks[0], (1, num_ms1 + num_ms2, H), jnp.float32)
    ms1_sort = jax.random.permutation(ks[1], num_ms1 * cfg["precursor_max_charge"])
    ms2_sort = jax.random.permutation(ks[2], num_ms2 * n_copies_ms2)

    moverz = 100.0 + 900.0 * jax.random.uniform(ks[3], (1, L), jnp.float32)
    xgram = jax.random.normal(ks[4], (1, L), jnp.float32)
    feature = jax.random.normal(ks[5], (1, L, 8), jnp.float32)
    peak_class_index = jax.random.randint(ks[6], (1, L), 0, PEAK_CLASS_VOCAB)
    pos_index = jax.random.randint(ks[7], (1, L), 0, cfg["ms2_max_peak_count"])
    ms1_ms2_flag = jax.random.randint(ks[8], (1, L), 0, 2)

    # whole forward under one jax.jit; static meta (sizes / precursor charge) closed over
    def forward_fn(p, mz, xg, ft, pci, pi, fl, go, s1, s2):
        meta = dict(
            indices=dict(ms1_sort=s1, ms2_sort=s2, ms1_multiscan=None, ms2_multiscan=None),
            sizes=dict(ms1=num_ms1),
            precursor_charge=precursor_charge,
        )
        return rnova_encoder_forward(p, cfg, mz, xg, ft, pci, pi, fl, [go], [meta])

    fwd = jax.jit(forward_fn)
    out = fwd(params, moverz, xgram, feature, peak_class_index, pos_index,
              ms1_ms2_flag, gnova_out, ms1_sort, ms2_sort)
    out = jax.block_until_ready(out)
    assert out.shape == (1, L, H) and out.dtype == jnp.float32
    assert bool(jnp.all(jnp.isfinite(out)))
    print("KERNEL_OK")
</pallas_src>

<mosaic_0001>
module attributes {stable_mosaic.version = 11 : i64} {
  func.func @_rnova_fwd_kernel(%arg0: memref<24x48xf32, #tpu.memory_space<vmem>>, %arg1: memref<48x64xf32, #tpu.memory_space<vmem>>, %arg2: memref<1x64xf32, #tpu.memory_space<vmem>>, %arg3: memref<5x64x32xf32, #tpu.memory_space<vmem>>, %arg4: memref<1x32xf32, #tpu.memory_space<vmem>>, %arg5: memref<24x32xf32, #tpu.memory_space<vmem>>, %arg6: memref<32x32xf32, #tpu.memory_space<vmem>>, %arg7: memref<1x32xf32, #tpu.memory_space<vmem>>, %arg8: memref<24x32xf32, #tpu.memory_space<vmem>>, %arg9: memref<24x32xf32, #tpu.memory_space<vmem>>, %arg10: memref<32x64xf32, #tpu.memory_space<vmem>>, %arg11: memref<1x64xf32, #tpu.memory_space<vmem>>, %arg12: memref<1x32xf32, #tpu.memory_space<vmem>>, %arg13: memref<1x32xf32, #tpu.memory_space<vmem>>, %arg14: memref<24x64xf32, #tpu.memory_space<vmem>>, %arg15: memref<24x64xf32, #tpu.memory_space<vmem>>, %arg16: memref<2x1x32xf32, #tpu.memory_space<vmem>>, %arg17: memref<2x1x32xf32, #tpu.memory_space<vmem>>, %arg18: memref<2x32x96xf32, #tpu.memory_space<vmem>>, %arg19: memref<2x1x96xf32, #tpu.memory_space<vmem>>, %arg20: memref<2x32x64xf32, #tpu.memory_space<vmem>>, %arg21: memref<2x1x64xf32, #tpu.memory_space<vmem>>, %arg22: memref<2x32x32xf32, #tpu.memory_space<vmem>>, %arg23: memref<2x1x32xf32, #tpu.memory_space<vmem>>, %arg24: memref<2x1x32xf32, #tpu.memory_space<vmem>>, %arg25: memref<2x1x32xf32, #tpu.memory_space<vmem>>, %arg26: memref<2x32x128xf32, #tpu.memory_space<vmem>>, %arg27: memref<2x1x128xf32, #tpu.memory_space<vmem>>, %arg28: memref<2x128x32xf32, #tpu.memory_space<vmem>>, %arg29: memref<2x1x32xf32, #tpu.memory_space<vmem>>, %arg30: memref<1x32xf32, #tpu.memory_space<vmem>>, %arg31: memref<1x32xf32, #tpu.memory_space<vmem>>, %arg32: memref<24x32xf32, #tpu.memory_space<vmem>>, %arg33: memref<32x64xf32, #tpu.memory_space<vmem>>) attributes {dimension_semantics = [], scalar_prefetch = 0 : i64, scratch_operands = 1 : i64, tpu.core_type = #tpu.core_type<tc>} {
    %c0 = arith.constant 0 : index
    %c0_0 = arith.constant 0 : index
    %0 = vector.load %arg0[%c0, %c0_0] : memref<24x48xf32, #tpu.memory_space<vmem>>, vector<24x48xf32>
    %c0_1 = arith.constant 0 : index
    %c0_2 = arith.constant 0 : index
    %1 = vector.load %arg1[%c0_1, %c0_2] : memref<48x64xf32, #tpu.memory_space<vmem>>, vector<48x64xf32>
    %cst = arith.constant dense<0.000000e+00> : vector<24x64xf32>
    %2 = tpu.matmul %0, %1, %cst {dimension_numbers = #tpu.dot_dimension_numbers<[1], [0], [0], [1], [0, 0, 1, 1], [], []>} : vector<24x48xf32>, vector<48x64xf32>, vector<24x64xf32> -> vector<24x64xf32>
    %c0_3 = arith.constant 0 : index
    %c0_4 = arith.constant 0 : index
    %3 = vector.load %arg2[%c0_3, %c0_4] : memref<1x64xf32, #tpu.memory_space<vmem>>, vector<1x64xf32>
    %4 = vector.broadcast %3 : vector<1x64xf32> to vector<24x64xf32>
    %5 = arith.addf %2, %4 : vector<24x64xf32>
    %6 = arith.mulf %5, %5 : vector<24x64xf32>
    %7 = arith.mulf %5, %6 : vector<24x64xf32>
    %cst_5 = arith.constant 4.471500e-02 : f32
    %8 = vector.broadcast %cst_5 : f32 to vector<24x64xf32>
    %9 = arith.mulf %8, %7 : vector<24x64xf32>
    %10 = arith.addf %5, %9 : vector<24x64xf32>
    %cst_6 = arith.constant 0.797884583 : f32
    %11 = vector.broadcast %cst_6 : f32 to vector<24x64xf32>
    %12 = arith.mulf %11, %10 : vector<24x64xf32>
    %13 = math.tanh %12 : vector<24x64xf32>
    %cst_7 = arith.constant 1.000000e+00 : f32
    %14 = vector.broadcast %cst_7 : f32 to vector<24x64xf32>
    %15 = arith.addf %14, %13 : vector<24x64xf32>
    %cst_8 = arith.constant 5.000000e-01 : f32
    %16 = vector.broadcast %cst_8 : f32 to vector<24x64xf32>
    %17 = arith.mulf %16, %15 : vector<24x64xf32>
    %18 = arith.mulf %5, %17 : vector<24x64xf32>
    %cst_9 = arith.constant 0.000000e+00 : f32
    %19 = vector.broadcast %cst_9 : f32 to vector<4x64xf32>
    %c0_10 = arith.constant 0 : index
    %c0_11 = arith.constant 0 : index
    %20 = vector.load %arg33[%c0_10, %c0_11] : memref<32x64xf32, #tpu.memory_space<vmem>>, vector<4x64xf32>
    tpu.vector_store %arg33[%c0_10, %c0_11], %19 {strides = array<i32>} : memref<32x64xf32, #tpu.memory_space<vmem>>, vector<4x64xf32>,
    %cst_12 = arith.constant 0.000000e+00 : f32
    %21 = vector.broadcast %cst_12 : f32 to vector<4x64xf32>
    %c28 = arith.constant 28 : index
    %c0_13 = arith.constant 0 : index
    %22 = vector.load %arg33[%c28, %c0_13] : memref<32x64xf32, #tpu.memory_space<vmem>>, vector<4x64xf32>
    tpu.vector_store %arg33[%c28, %c0_13], %21 {strides = array<i32>} : memref<32x64xf32, #tpu.memory_space<vmem>>, vector<4x64xf32>,
    %c4 = arith.constant 4 : index
    %c0_14 = arith.constant 0 : index
    %23 = vector.load %arg33[%c4, %c0_14] : memref<32x64xf32, #tpu.memory_space<vmem>>, vector<24x64xf32>
    tpu.vector_store %arg33[%c4, %c0_14], %18 {strides = array<i32>} : memref<32x64xf32, #tpu.memory_space<vmem>>, vector<24x64xf32>,
    %cst_15 = arith.constant 0.000000e+00 : f32
    %24 = vector.broadcast %cst_15 : f32 to vector<24x32xf32>
    %c0_16 = arith.constant 0 : index
    %c0_17 = arith.constant 0 : index
    %25 = vector.load %arg4[%c0_16, %c0_17] : memref<1x32xf32, #tpu.memory_space<vmem>>, vector<1x32xf32>
    %26 = vector.broadcast %25 : vector<1x32xf32> to vector<24x32xf32>
    %27 = arith.addf %24, %26 : vector<24x32xf32>
    %c0_18 = arith.constant 0 : index
    %c0_19 = arith.constant 0 : index
    %28 = vector.load %arg33[%c0_18, %c0_19] : memref<32x64xf32, #tpu.memory_space<vmem>>, vector<24x64xf32>
    %c0_20 = arith.constant 0 : index
    %c0_21 = arith.constant 0 : index
    %c0_22 = arith.constant 0 : index
    %29 = vector.load %arg3[%c0_20, %c0_21, %c0_22] : memref<5x64x32xf32, #tpu.memory_space<vmem>>, vector<1x64x32xf32>
    %30 = vector.shape_cast %29 : vector<1x64x32xf32> to vector<64x32xf32>
    %cst_23 = arith.constant dense<0.000000e+00> : vector<24x32xf32>
    %31 = tpu.matmul %28, %30, %cst_23 {dimension_numbers = #tpu.dot_dimension_numbers<[1], [0], [0], [1], [0, 0, 1, 1], [], []>} : vector<24x64xf32>, vector<64x32xf32>, vector<24x32xf32> -> vector<24x32xf32>
    %32 = arith.addf %27, %31 : vector<24x32xf32>
    %c2 = arith.constant 2 : index
    %c0_24 = arith.constant 0 : index
    %33 = vector.load %arg33[%c2, %c0_24] : memref<32x64xf32, #tpu.memory_space<vmem>>, vector<24x64xf32>
    %c1 = arith.constant 1 : index
    %c0_25 = arith.constant 0 : index
    %c0_26 = arith.constant 0 : index
    %34 = vector.load %arg3[%c1, %c0_25, %c0_26] : memref<5x64x32xf32, #tpu.memory_space<vmem>>, vector<1x64x32xf32>
    %35 = vector.shape_cast %34 : vector<1x64x32xf32> to vector<64x32xf32>
    %cst_27 = arith.constant dense<0.000000e+00> : vector<24x32xf32>
    %36 = tpu.matmul %33, %35, %cst_27 {dimension_numbers = #tpu.dot_dimension_numbers<[1], [0], [0], [1], [0, 0, 1, 1], [], []>} : vector<24x64xf32>, vector<64x32xf32>, vector<24x32xf32> -> vector<24x32xf32>
    %37 = arith.addf %32, %36 : vector<24x32xf32>
    %c4_28 = arith.constant 4 : index
    %c0_29 = arith.constant 0 : index
    %38 = vector.load %arg33[%c4_28, %c0_29] : memref<32x64xf32, #tpu.memory_space<vmem>>, vector<24x64xf32>
    %c2_30 = arith.constant 2 : index
    %c0_31 = arith.constant 0 : index
    %c0_32 = arith.constant 0 : index
    %39 = vector.load %arg3[%c2_30, %c0_31, %c0_32] : memref<5x64x32xf32, #tpu.memory_space<vmem>>, vector<1x64x32xf32>
    %40 = vector.shape_cast %39 : vector<1x64x32xf32> to vector<64x32xf32>
    %cst_33 = arith.constant dense<0.000000e+00> : vector<24x32xf32>
    %41 = tpu.matmul %38, %40, %cst_33 {dimension_numbers = #tpu.dot_dimension_numbers<[1], [0], [0], [1], [0, 0, 1, 1], [], []>} : vector<24x64xf32>, vector<64x32xf32>, vector<24x32xf32> -> vector<24x32xf32>
    %42 = arith.addf %37, %41 : vector<24x32xf32>
    %c6 = arith.constant 6 : index
    %c0_34 = arith.constant 0 : index
    %43 = vector.load %arg33[%c6, %c0_34] : memref<32x64xf32, #tpu.memory_space<vmem>>, vector<24x64xf32>
    %c3 = arith.constant 3 : index
    %c0_35 = arith.constant 0 : index
    %c0_36 = arith.constant 0 : index
    %44 = vector.load %arg3[%c3, %c0_35, %c0_36] : memref<5x64x32xf32, #tpu.memory_space<vmem>>, vector<1x64x32xf32>
    %45 = vector.shape_cast %44 : vector<1x64x32xf32> to vector<64x32xf32>
    %cst_37 = arith.constant dense<0.000000e+00> : vector<24x32xf32>
    %46 = tpu.matmul %43, %45, %cst_37 {dimension_numbers = #tpu.dot_dimension_numbers<[1], [0], [0], [1], [0, 0, 1, 1], [], []>} : vector<24x64xf32>, vector<64x32xf32>, vector<24x32xf32> -> vector<24x32xf32>
    %47 = arith.addf %42, %46 : vector<24x32xf32>
    %c8 = arith.constant 8 : index
    %c0_38 = arith.constant 0 : index
    %48 = vector.load %arg33[%c8, %c0_38] : memref<32x64xf32, #tpu.memory_space<vmem>>, vector<24x64xf32>
    %c4_39 = arith.constant 4 : index
    %c0_40 = arith.constant 0 : index
    %c0_41 = arith.constant 0 : index
    %49 = vector.load %arg3[%c4_39, %c0_40, %c0_41] : memref<5x64x32xf32, #tpu.memory_space<vmem>>, vector<1x64x32xf32>
    %50 = vector.shape_cast %49 : vector<1x64x32xf32> to vector<64x32xf32>
    %cst_42 = arith.constant dense<0.000000e+00> : vector<24x32xf32>
    %51 = tpu.matmul %48, %50, %cst_42 {dimension_numbers = #tpu.dot_dimension_numbers<[1], [0], [0], [1], [0, 0, 1, 1], [], []>} : vector<24x64xf32>, vector<64x32xf32>, vector<24x32xf32> -> vector<24x32xf32>
    %52 = arith.addf %47, %51 : vector<24x32xf32>
    %c0_43 = arith.constant 0 : index
    %c0_44 = arith.constant 0 : index
    %53 = vector.load %arg5[%c0_43, %c0_44] : memref<24x32xf32, #tpu.memory_space<vmem>>, vector<24x32xf32>
    %c0_45 = arith.constant 0 : index
    %c0_46 = arith.constant 0 : index
    %54 = vector.load %arg6[%c0_45, %c0_46] : memref<32x32xf32, #tpu.memory_space<vmem>>, vector<32x32xf32>
    %cst_47 = arith.constant dense<0.000000e+00> : vector<24x32xf32>
    %55 = tpu.matmul %53, %54, %cst_47 {dimension_numbers = #tpu.dot_dimension_numbers<[1], [0], [0], [1], [0, 0, 1, 1], [], []>} : vector<24x32xf32>, vector<32x32xf32>, vector<24x32xf32> -> vector<24x32xf32>
    %c0_48 = arith.constant 0 : index
    %c0_49 = arith.constant 0 : index
    %56 = vector.load %arg7[%c0_48, %c0_49] : memref<1x32xf32, #tpu.memory_space<vmem>>, vector<1x32xf32>
    %57 = vector.broadcast %56 : vector<1x32xf32> to vector<24x32xf32>
    %58 = arith.addf %55, %57 : vector<24x32xf32>
    %c0_50 = arith.constant 0 : index
    %c0_51 = arith.constant 0 : index
    %59 = vector.load %arg9[%c0_50, %c0_51] : memref<24x32xf32, #tpu.memory_space<vmem>>, vector<24x32xf32>
    %c0_52 = arith.constant 0 : index
    %c0_53 = arith.constant 0 : index
    %60 = vector.load %arg10[%c0_52, %c0_53] : memref<32x64xf32, #tpu.memory_space<vmem>>, vector<32x64xf32>
    %cst_54 = arith.constant dense<0.000000e+00> : vector<24x64xf32>
    %61 = tpu.matmul %59, %60, %cst_54 {dimension_numbers = #tpu.dot_dimension_numbers<[1], [0], [0], [1], [0, 0, 1, 1], [], []>} : vector<24x32xf32>, vector<32x64xf32>, vector<24x64xf32> -> vector<24x64xf32>
    %c0_55 = arith.constant 0 : index
    %c0_56 = arith.constant 0 : index
    %62 = vector.load %arg11[%c0_55, %c0_56] : memref<1x64xf32, #tpu.memory_space<vmem>>, vector<1x64xf32>
    %63 = vector.broadcast %62 : vector<1x64xf32> to vector<24x64xf32>
    %64 = arith.addf %61, %63 : vector<24x64xf32>
    %65 = vector.extract_strided_slice %64 {offsets = [0, 0], sizes = [24, 32], strides = [1, 1]} : vector<24x64xf32> to vector<24x32xf32>
    %66 = vector.extract_strided_slice %64 {offsets = [0, 32], sizes = [24, 32], strides = [1, 1]} : vector<24x64xf32> to vector<24x32xf32>
    %67 = arith.negf %66 : vector<24x32xf32>
    %68 = math.exp %67 : vector<24x32xf32>
    %cst_57 = arith.constant 1.000000e+00 : f32
    %69 = vector.broadcast %cst_57 : f32 to vector<24x32xf32>
    %70 = arith.addf %69, %68 : vector<24x32xf32>
    %71 = arith.divf %69, %70 : vector<24x32xf32>
    %72 = arith.mulf %65, %71 : vector<24x32xf32>
    %c0_58 = arith.constant 0 : index
    %c0_59 = arith.constant 0 : index
    %73 = vector.load %arg8[%c0_58, %c0_59] : memref<24x32xf32, #tpu.memory_space<vmem>>, vector<24x32xf32>
    %74 = arith.addf %58, %73 : vector<24x32xf32>
    %75 = arith.addf %74, %52 : vector<24x32xf32>
    %76 = arith.addf %75, %72 : vector<24x32xf32>
    %c0_60 = arith.constant 0 : index
    %c0_61 = arith.constant 0 : index
    %77 = vector.load %arg12[%c0_60, %c0_61] : memref<1x32xf32, #tpu.memory_space<vmem>>, vector<1x32xf32>
    %c0_62 = arith.constant 0 : index
    %c0_63 = arith.constant 0 : index
    %78 = vector.load %arg13[%c0_62, %c0_63] : memref<1x32xf32, #tpu.memory_space<vmem>>, vector<1x32xf32>
    %cst_64 = arith.constant dense<0.000000e+00> : vector<24xf32>
    %79 = vector.multi_reduction <add>, %76, %cst_64 [1] : vector<24x32xf32> to vector<24xf32>
    %80 = vector.shape_cast %79 : vector<24xf32> to vector<24x1xf32>
    %cst_65 = arith.constant 3.200000e+01 : f32
    %81 = vector.broadcast %cst_65 : f32 to vector<24x1xf32>
    %82 = arith.divf %80, %81 : vector<24x1xf32>
    %83 = vector.broadcast %82 : vector<24x1xf32> to vector<24x32xf32>
    %84 = arith.subf %76, %83 : vector<24x32xf32>
    %85 = arith.mulf %84, %84 : vector<24x32xf32>
    %cst_66 = arith.constant dense<0.000000e+00> : vector<24xf32>
    %86 = vector.multi_reduction <add>, %85, %cst_66 [1] : vector<24x32xf32> to vector<24xf32>
    %87 = vector.shape_cast %86 : vector<24xf32> to vector<24x1xf32>
    %cst_67 = arith.constant 3.200000e+01 : f32
    %88 = vector.broadcast %cst_67 : f32 to vector<24x1xf32>
    %89 = arith.divf %87, %88 : vector<24x1xf32>
    %cst_68 = arith.constant 9.99999974E-6 : f32
    %90 = vector.broadcast %cst_68 : f32 to vector<24x1xf32>
    %91 = arith.addf %89, %90 : vector<24x1xf32>
    %92 = math.rsqrt %91 : vector<24x1xf32>
    %93 = vector.broadcast %92 : vector<24x1xf32> to vector<24x32xf32>
    %94 = arith.mulf %84, %93 : vector<24x32xf32>
    %95 = vector.broadcast %77 : vector<1x32xf32> to vector<24x32xf32>
    %96 = arith.mulf %94, %95 : vector<24x32xf32>
    %97 = vector.broadcast %78 : vector<1x32xf32> to vector<24x32xf32>
    %98 = arith.addf %96, %97 : vector<24x32xf32>
    %c0_69 = arith.constant 0 : index
    %c0_70 = arith.constant 0 : index
    %99 = vector.load %arg14[%c0_69, %c0_70] : memref<24x64xf32, #tpu.memory_space<vmem>>, vector<24x64xf32>
    %c0_71 = arith.constant 0 : index
    %c0_72 = arith.constant 0 : index
    %100 = vector.load %arg15[%c0_71, %c0_72] : memref<24x64xf32, #tpu.memory_space<vmem>>, vector<24x64xf32>
    %c0_73 = arith.constant 0 : index
    %c0_74 = arith.constant 0 : index
    %c0_75 = arith.constant 0 : index
    %101 = vector.load %arg16[%c0_73, %c0_74, %c0_75] : memref<2x1x32xf32, #tpu.memory_space<vmem>>, vector<1x1x32xf32>
    %102 = vector.shape_cast %101 : vector<1x1x32xf32> to vector<1x32xf32>
    %c0_76 = arith.constant 0 : index
    %c0_77 = arith.constant 0 : index
    %c0_78 = arith.constant 0 : index
    %103 = vector.load %arg17[%c0_76, %c0_77, %c0_78] : memref<2x1x32xf32, #tpu.memory_space<vmem>>, vector<1x1x32xf32>
    %104 = vector.shape_cast %103 : vector<1x1x32xf32> to vector<1x32xf32>
    %cst_79 = arith.constant dense<0.000000e+00> : vector<24xf32>
    %105 = vector.multi_reduction <add>, %98, %cst_79 [1] : vector<24x32xf32> to vector<24xf32>
    %106 = vector.shape_cast %105 : vector<24xf32> to vector<24x1xf32>
    %cst_80 = arith.constant 3.200000e+01 : f32
    %107 = vector.broadcast %cst_80 : f32 to vector<24x1xf32>
    %108 = arith.divf %106, %107 : vector<24x1xf32>
    %109 = vector.broadcast %108 : vector<24x1xf32> to vector<24x32xf32>
    %110 = arith.subf %98, %109 : vector<24x32xf32>
    %111 = arith.mulf %110, %110 : vector<24x32xf32>
    %cst_81 = arith.constant dense<0.000000e+00> : vector<24xf32>
    %112 = vector.multi_reduction <add>, %111, %cst_81 [1] : vector<24x32xf32> to vector<24xf32>
    %113 = vector.shape_cast %112 : vector<24xf32> to vector<24x1xf32>
    %cst_82 = arith.constant 3.200000e+01 : f32
    %114 = vector.broadcast %cst_82 : f32 to vector<24x1xf32>
    %115 = arith.divf %113, %114 : vector<24x1xf32>
    %cst_83 = arith.constant 9.99999974E-6 : f32
    %116 = vector.broadcast %cst_83 : f32 to vector<24x1xf32>
    %117 = arith.addf %115, %116 : vector<24x1xf32>
    %118 = math.rsqrt %117 : vector<24x1xf32>
    %119 = vector.broadcast %118 : vector<24x1xf32> to vector<24x32xf32>
    %120 = arith.mulf %110, %119 : vector<24x32xf32>
    %121 = vector.broadcast %102 : vector<1x32xf32> to vector<24x32xf32>
    %122 = arith.mulf %120, %121 : vector<24x32xf32>
    %123 = vector.broadcast %104 : vector<1x32xf32> to vector<24x32xf32>
    %124 = arith.addf %122, %123 : vector<24x32xf32>
    %c0_84 = arith.constant 0 : index
    %c0_85 = arith.constant 0 : index
    %c0_86 = arith.constant 0 : index
    %125 = vector.load %arg18[%c0_84, %c0_85, %c0_86] : memref<2x32x96xf32, #tpu.memory_space<vmem>>, vector<1x32x96xf32>
    %126 = vector.shape_cast %125 : vector<1x32x96xf32> to vector<32x96xf32>
    %cst_87 = arith.constant dense<0.000000e+00> : vector<24x96xf32>
    %127 = tpu.matmul %124, %126, %cst_87 {dimension_numbers = #tpu.dot_dimension_numbers<[1], [0], [0], [1], [0, 0, 1, 1], [], []>} : vector<24x32xf32>, vector<32x96xf32>, vector<24x96xf32> -> vector<24x96xf32>
    %c0_88 = arith.constant 0 : index
    %c0_89 = arith.constant 0 : index
    %c0_90 = arith.constant 0 : index
    %128 = vector.load %arg19[%c0_88, %c0_89, %c0_90] : memref<2x1x96xf32, #tpu.memory_space<vmem>>, vector<1x1x96xf32>
    %129 = vector.shape_cast %128 : vector<1x1x96xf32> to vector<1x96xf32>
    %130 = vector.broadcast %129 : vector<1x96xf32> to vector<24x96xf32>
    %131 = arith.addf %127, %130 : vector<24x96xf32>
    %c0_91 = arith.constant 0 : index
    %c0_92 = arith.constant 0 : index
    %c0_93 = arith.constant 0 : index
    %132 = vector.load %arg20[%c0_91, %c0_92, %c0_93] : memref<2x32x64xf32, #tpu.memory_space<vmem>>, vector<1x32x64xf32>
    %133 = vector.shape_cast %132 : vector<1x32x64xf32> to vector<32x64xf32>
    %cst_94 = arith.constant dense<0.000000e+00> : vector<24x64xf32>
    %134 = tpu.matmul %124, %133, %cst_94 {dimension_numbers = #tpu.dot_dimension_numbers<[1], [0], [0], [1], [0, 0, 1, 1], [], []>} : vector<24x32xf32>, vector<32x64xf32>, vector<24x64xf32> -> vector<24x64xf32>
    %c0_95 = arith.constant 0 : index
    %c0_96 = arith.constant 0 : index
    %c0_97 = arith.constant 0 : index
    %135 = vector.load %arg21[%c0_95, %c0_96, %c0_97] : memref<2x1x64xf32, #tpu.memory_space<vmem>>, vector<1x1x64xf32>
    %136 = vector.shape_cast %135 : vector<1x1x64xf32> to vector<1x64xf32>
    %137 = vector.broadcast %136 : vector<1x64xf32> to vector<24x64xf32>
    %138 = arith.addf %134, %137 : vector<24x64xf32>
    %139 = vector.extract_strided_slice %131 {offsets = [0, 0], sizes = [24, 64], strides = [1, 1]} : vector<24x96xf32> to vector<24x64xf32>
    %140 = arith.mulf %139, %99 : vector<24x64xf32>
    %141 = arith.mulf %138, %100 : vector<24x64xf32>
    %142 = arith.addf %140, %141 : vector<24x64xf32>
    %143 = vector.extract_strided_slice %131 {offsets = [0, 64], sizes = [24, 32], strides = [1, 1]} : vector<24x96xf32> to vector<24x32xf32>
    %c0_98 = arith.constant 0 : index
    %c0_99 = arith.constant 0 : index
    %c0_100 = arith.constant 0 : index
    %144 = vector.load %arg22[%c0_98, %c0_99, %c0_100] : memref<2x32x32xf32, #tpu.memory_space<vmem>>, vector<1x32x32xf32>
    %145 = vector.shape_cast %144 : vector<1x32x32xf32> to vector<32x32xf32>
    %cst_101 = arith.constant 0.000000e+00 : f32
    %146 = vector.broadcast %cst_101 : f32 to vector<24x32xf32>
    %c0_102 = arith.constant 0 : index
    %c0_103 = arith.constant 0 : index
    %c0_104 = arith.constant 0 : index
    %147 = vector.load %arg23[%c0_102, %c0_103, %c0_104] : memref<2x1x32xf32, #tpu.memory_space<vmem>>, vector<1x1x32xf32>
    %148 = vector.shape_cast %147 : vector<1x1x32xf32> to vector<1x32xf32>
    %149 = vector.broadcast %148 : vector<1x32xf32> to vector<24x32xf32>
    %150 = arith.addf %146, %149 : vector<24x32xf32>
    %151 = vector.extract_strided_slice %142 {offsets = [0, 0], sizes = [24, 8], strides = [1, 1]} : vector<24x64xf32> to vector<24x8xf32>
    %152 = vector.extract_strided_slice %142 {offsets = [0, 32], sizes = [24, 8], strides = [1, 1]} : vector<24x64xf32> to vector<24x8xf32>
    %153 = vector.extract_strided_slice %143 {offsets = [0, 0], sizes = [24, 8], strides = [1, 1]} : vector<24x32xf32> to vector<24x8xf32>
    %cst_105 = arith.constant dense<0.000000e+00> : vector<24x24xf32>
    %154 = tpu.matmul %151, %152, %cst_105 {dimension_numbers = #tpu.dot_dimension_numbers<[1], [1], [0], [0], [0, 0, 1, 0], [], []>} : vector<24x8xf32>, vector<24x8xf32>, vector<24x24xf32> -> vector<24x24xf32>
    %cst_106 = arith.constant 0.353553385 : f32
    %155 = vector.broadcast %cst_106 : f32 to vector<24x24xf32>
    %156 = arith.mulf %154, %155 : vector<24x24xf32>
    %cst_107 = arith.constant dense<0xFF800000> : vector<24xf32>
    %157 = vector.multi_reduction <maximumf>, %156, %cst_107 [1] : vector<24x24xf32> to vector<24xf32>
    %158 = vector.shape_cast %157 : vector<24xf32> to vector<24x1xf32>
    %159 = vector.broadcast %158 : vector<24x1xf32> to vector<24x24xf32>
    %160 = arith.subf %156, %159 : vector<24x24xf32>
    %161 = math.exp %160 : vector<24x24xf32>
    %cst_108 = arith.constant dense<0.000000e+00> : vector<24xf32>
    %162 = vector.multi_reduction <add>, %161, %cst_108 [1] : vector<24x24xf32> to vector<24xf32>
    %163 = vector.shape_cast %162 : vector<24xf32> to vector<24x1xf32>
    %164 = tpu.reciprocal %163 {approx = true} : vector<24x1xf32> -> vector<24x1xf32>
    %165 = vector.broadcast %164 : vector<24x1xf32> to vector<24x24xf32>
    %166 = arith.mulf %161, %165 : vector<24x24xf32>
    %cst_109 = arith.constant dense<0.000000e+00> : vector<24x8xf32>
    %167 = tpu.matmul %166, %153, %cst_109 {dimension_numbers = #tpu.dot_dimension_numbers<[1], [0], [0], [1], [0, 0, 1, 1], [], []>} : vector<24x24xf32>, vector<24x8xf32>, vector<24x8xf32> -> vector<24x8xf32>
    %168 = vector.extract_strided_slice %145 {offsets = [0, 0], sizes = [8, 32], strides = [1, 1]} : vector<32x32xf32> to vector<8x32xf32>
    %cst_110 = arith.constant dense<0.000000e+00> : vector<24x32xf32>
    %169 = tpu.matmul %167, %168, %cst_110 {dimension_numbers = #tpu.dot_dimension_numbers<[1], [0], [0], [1], [0, 0, 1, 1], [], []>} : vector<24x8xf32>, vector<8x32xf32>, vector<24x32xf32> -> vector<24x32xf32>
    %170 = arith.addf %150, %169 : vector<24x32xf32>
    %171 = vector.extract_strided_slice %142 {offsets = [0, 8], sizes = [24, 8], strides = [1, 1]} : vector<24x64xf32> to vector<24x8xf32>
    %172 = vector.extract_strided_slice %142 {offsets = [0, 40], sizes = [24, 8], strides = [1, 1]} : vector<24x64xf32> to vector<24x8xf32>
    %173 = vector.extract_strided_slice %143 {offsets = [0, 8], sizes = [24, 8], strides = [1, 1]} : vector<24x32xf32> to vector<24x8xf32>
    %cst_111 = arith.constant dense<0.000000e+00> : vector<24x24xf32>
    %174 = tpu.matmul %171, %172, %cst_111 {dimension_numbers = #tpu.dot_dimension_numbers<[1], [1], [0], [0], [0, 0, 1, 0], [], []>} : vector<24x8xf32>, vector<24x8xf32>, vector<24x24xf32> -> vector<24x24xf32>
    %cst_112 = arith.constant 0.353553385 : f32
    %175 = vector.broadcast %cst_112 : f32 to vector<24x24xf32>
    %176 = arith.mulf %174, %175 : vector<24x24xf32>
    %cst_113 = arith.constant dense<0xFF800000> : vector<24xf32>
    %177 = vector.multi_reduction <maximumf>, %176, %cst_113 [1] : vector<24x24xf32> to vector<24xf32>
    %178 = vector.shape_cast %177 : vector<24xf32> to vector<24x1xf32>
    %179 = vector.broadcast %178 : vector<24x1xf32> to vector<24x24xf32>
    %180 = arith.subf %176, %179 : vector<24x24xf32>
    %181 = math.exp %180 : vector<24x24xf32>
    %cst_114 = arith.constant dense<0.000000e+00> : vector<24xf32>
    %182 = vector.multi_reduction <add>, %181, %cst_114 [1] : vector<24x24xf32> to vector<24xf32>
    %183 = vector.shape_cast %182 : vector<24xf32> to vector<24x1xf32>
    %184 = tpu.reciprocal %183 {approx = true} : vector<24x1xf32> -> vector<24x1xf32>
    %185 = vector.broadcast %184 : vector<24x1xf32> to vector<24x24xf32>
    %186 = arith.mulf %181, %185 : vector<24x24xf32>
    %cst_115 = arith.constant dense<0.000000e+00> : vector<24x8xf32>
    %187 = tpu.matmul %186, %173, %cst_115 {dimension_numbers = #tpu.dot_dimension_numbers<[1], [0], [0], [1], [0, 0, 1, 1], [], []>} : vector<24x24xf32>, vector<24x8xf32>, vector<24x8xf32> -> vector<24x8xf32>
    %188 = vector.extract_strided_slice %145 {offsets = [8, 0], sizes = [8, 32], strides = [1, 1]} : vector<32x32xf32> to vector<8x32xf32>
    %cst_116 = arith.constant dense<0.000000e+00> : vector<24x32xf32>
    %189 = tpu.matmul %187, %188, %cst_116 {dimension_numbers = #tpu.dot_dimension_numbers<[1], [0], [0], [1], [0, 0, 1, 1], [], []>} : vector<24x8xf32>, vector<8x32xf32>, vector<24x32xf32> -> vector<24x32xf32>
    %190 = arith.addf %170, %189 : vector<24x32xf32>
    %191 = vector.extract_strided_slice %142 {offsets = [0, 16], sizes = [24, 8], strides = [1, 1]} : vector<24x64xf32> to vector<24x8xf32>
    %192 = vector.extract_strided_slice %142 {offsets = [0, 48], sizes = [24, 8], strides = [1, 1]} : vector<24x64xf32> to vector<24x8xf32>
    %193 = vector.extract_strided_slice %143 {offsets = [0, 16], sizes = [24, 8], strides = [1, 1]} : vector<24x32xf32> to vector<24x8xf32>
    %cst_117 = arith.constant dense<0.000000e+00> : vector<24x24xf32>
    %194 = tpu.matmul %191, %192, %cst_117 {dimension_numbers = #tpu.dot_dimension_numbers<[1], [1], [0], [0], [0, 0, 1, 0], [], []>} : vector<24x8xf32>, vector<24x8xf32>, vector<24x24xf32> -> vector<24x24xf32>
    %cst_118 = arith.constant 0.353553385 : f32
    %195 = vector.broadcast %cst_118 : f32 to vector<24x24xf32>
    %196 = arith.mulf %194, %195 : vector<24x24xf32>
    %cst_119 = arith.constant dense<0xFF800000> : vector<24xf32>
    %197 = vector.multi_reduction <maximumf>, %196, %cst_119 [1] : vector<24x24xf32> to vector<24xf32>
    %198 = vector.shape_cast %197 : vector<24xf32> to vector<24x1xf32>
    %199 = vector.broadcast %198 : vector<24x1xf32> to vector<24x24xf32>
    %200 = arith.subf %196, %199 : vector<24x24xf32>
    %201 = math.exp %200 : vector<24x24xf32>
    %cst_120 = arith.constant dense<0.000000e+00> : vector<24xf32>
    %202 = vector.multi_reduction <add>, %201, %cst_120 [1] : vector<24x24xf32> to vector<24xf32>
    %203 = vector.shape_cast %202 : vector<24xf32> to vector<24x1xf32>
    %204 = tpu.reciprocal %203 {approx = true} : vector<24x1xf32> -> vector<24x1xf32>
    %205 = vector.broadcast %204 : vector<24x1xf32> to vector<24x24xf32>
    %206 = arith.mulf %201, %205 : vector<24x24xf32>
    %cst_121 = arith.constant dense<0.000000e+00> : vector<24x8xf32>
    %207 = tpu.matmul %206, %193, %cst_121 {dimension_numbers = #tpu.dot_dimension_numbers<[1], [0], [0], [1], [0, 0, 1, 1], [], []>} : vector<24x24xf32>, vector<24x8xf32>, vector<24x8xf32> -> vector<24x8xf32>
    %208 = vector.extract_strided_slice %145 {offsets = [16, 0], sizes = [8, 32], strides = [1, 1]} : vector<32x32xf32> to vector<8x32xf32>
    %cst_122 = arith.constant dense<0.000000e+00> : vector<24x32xf32>
    %209 = tpu.matmul %207, %208, %cst_122 {dimension_numbers = #tpu.dot_dimension_numbers<[1], [0], [0], [1], [0, 0, 1, 1], [], []>} : vector<24x8xf32>, vector<8x32xf32>, vector<24x32xf32> -> vector<24x32xf32>
    %210 = arith.addf %190, %209 : vector<24x32xf32>
    %211 = vector.extract_strided_slice %142 {offsets = [0, 24], sizes = [24, 8], strides = [1, 1]} : vector<24x64xf32> to vector<24x8xf32>
    %212 = vector.extract_strided_slice %142 {offsets = [0, 56], sizes = [24, 8], strides = [1, 1]} : vector<24x64xf32> to vector<24x8xf32>
    %213 = vector.extract_strided_slice %143 {offsets = [0, 24], sizes = [24, 8], strides = [1, 1]} : vector<24x32xf32> to vector<24x8xf32>
    %cst_123 = arith.constant dense<0.000000e+00> : vector<24x24xf32>
    %214 = tpu.matmul %211, %212, %cst_123 {dimension_numbers = #tpu.dot_dimension_numbers<[1], [1], [0], [0], [0, 0, 1, 0], [], []>} : vector<24x8xf32>, vector<24x8xf32>, vector<24x24xf32> -> vector<24x24xf32>
    %cst_124 = arith.constant 0.353553385 : f32
    %215 = vector.broadcast %cst_124 : f32 to vector<24x24xf32>
    %216 = arith.mulf %214, %215 : vector<24x24xf32>
    %cst_125 = arith.constant dense<0xFF800000> : vector<24xf32>
    %217 = vector.multi_reduction <maximumf>, %216, %cst_125 [1] : vector<24x24xf32> to vector<24xf32>
    %218 = vector.shape_cast %217 : vector<24xf32> to vector<24x1xf32>
    %219 = vector.broadcast %218 : vector<24x1xf32> to vector<24x24xf32>
    %220 = arith.subf %216, %219 : vector<24x24xf32>
    %221 = math.exp %220 : vector<24x24xf32>
    %cst_126 = arith.constant dense<0.000000e+00> : vector<24xf32>
    %222 = vector.multi_reduction <add>, %221, %cst_126 [1] : vector<24x24xf32> to vector<24xf32>
    %223 = vector.shape_cast %222 : vector<24xf32> to vector<24x1xf32>
    %224 = tpu.reciprocal %223 {approx = true} : vector<24x1xf32> -> vector<24x1xf32>
    %225 = vector.broadcast %224 : vector<24x1xf32> to vector<24x24xf32>
    %226 = arith.mulf %221, %225 : vector<24x24xf32>
    %cst_127 = arith.constant dense<0.000000e+00> : vector<24x8xf32>
    %227 = tpu.matmul %226, %213, %cst_127 {dimension_numbers = #tpu.dot_dimension_numbers<[1], [0], [0], [1], [0, 0, 1, 1], [], []>} : vector<24x24xf32>, vector<24x8xf32>, vector<24x8xf32> -> vector<24x8xf32>
    %228 = vector.extract_strided_slice %145 {offsets = [24, 0], sizes = [8, 32], strides = [1, 1]} : vector<32x32xf32> to vector<8x32xf32>
    %cst_128 = arith.constant dense<0.000000e+00> : vector<24x32xf32>
    %229 = tpu.matmul %227, %228, %cst_128 {dimension_numbers = #tpu.dot_dimension_numbers<[1], [0], [0], [1], [0, 0, 1, 1], [], []>} : vector<24x8xf32>, vector<8x32xf32>, vector<24x32xf32> -> vector<24x32xf32>
    %230 = arith.addf %210, %229 : vector<24x32xf32>
    %231 = arith.addf %98, %230 : vector<24x32xf32>
    %c0_129 = arith.constant 0 : index
    %c0_130 = arith.constant 0 : index
    %c0_131 = arith.constant 0 : index
    %232 = vector.load %arg24[%c0_129, %c0_130, %c0_131] : memref<2x1x32xf32, #tpu.memory_space<vmem>>, vector<1x1x32xf32>
    %233 = vector.shape_cast %232 : vector<1x1x32xf32> to vector<1x32xf32>
    %c0_132 = arith.constant 0 : index
    %c0_133 = arith.constant 0 : index
    %c0_134 = arith.constant 0 : index
    %234 = vector.load %arg25[%c0_132, %c0_133, %c0_134] : memref<2x1x32xf32, #tpu.memory_space<vmem>>, vector<1x1x32xf32>
    %235 = vector.shape_cast %234 : vector<1x1x32xf32> to vector<1x32xf32>
    %cst_135 = arith.constant dense<0.000000e+00> : vector<24xf32>
    %236 = vector.multi_reduction <add>, %231, %cst_135 [1] : vector<24x32xf32> to vector<24xf32>
    %237 = vector.shape_cast %236 : vector<24xf32> to vector<24x1xf32>
    %cst_136 = arith.constant 3.200000e+01 : f32
    %238 = vector.broadcast %cst_136 : f32 to vector<24x1xf32>
    %239 = arith.divf %237, %238 : vector<24x1xf32>
    %240 = vector.broadcast %239 : vector<24x1xf32> to vector<24x32xf32>
    %241 = arith.subf %231, %240 : vector<24x32xf32>
    %242 = arith.mulf %241, %241 : vector<24x32xf32>
    %cst_137 = arith.constant dense<0.000000e+00> : vector<24xf32>
    %243 = vector.multi_reduction <add>, %242, %cst_137 [1] : vector<24x32xf32> to vector<24xf32>
    %244 = vector.shape_cast %243 : vector<24xf32> to vector<24x1xf32>
    %cst_138 = arith.constant 3.200000e+01 : f32
    %245 = vector.broadcast %cst_138 : f32 to vector<24x1xf32>
    %246 = arith.divf %244, %245 : vector<24x1xf32>
    %cst_139 = arith.constant 9.99999974E-6 : f32
    %247 = vector.broadcast %cst_139 : f32 to vector<24x1xf32>
    %248 = arith.addf %246, %247 : vector<24x1xf32>
    %249 = math.rsqrt %248 : vector<24x1xf32>
    %250 = vector.broadcast %249 : vector<24x1xf32> to vector<24x32xf32>
    %251 = arith.mulf %241, %250 : vector<24x32xf32>
    %252 = vector.broadcast %233 : vector<1x32xf32> to vector<24x32xf32>
    %253 = arith.mulf %251, %252 : vector<24x32xf32>
    %254 = vector.broadcast %235 : vector<1x32xf32> to vector<24x32xf32>
    %255 = arith.addf %253, %254 : vector<24x32xf32>
    %c0_140 = arith.constant 0 : index
    %c0_141 = arith.constant 0 : index
    %c0_142 = arith.constant 0 : index
    %256 = vector.load %arg26[%c0_140, %c0_141, %c0_142] : memref<2x32x128xf32, #tpu.memory_space<vmem>>, vector<1x32x128xf32>
    %257 = vector.shape_cast %256 : vector<1x32x128xf32> to vector<32x128xf32>
    %cst_143 = arith.constant dense<0.000000e+00> : vector<24x128xf32>
    %258 = tpu.matmul %255, %257, %cst_143 {dimension_numbers = #tpu.dot_dimension_numbers<[1], [0], [0], [1], [0, 0, 1, 1], [], []>} : vector<24x32xf32>, vector<32x128xf32>, vector<24x128xf32> -> vector<24x128xf32>
    %c0_144 = arith.constant 0 : index
    %c0_145 = arith.constant 0 : index
    %c0_146 = arith.constant 0 : index
    %259 = vector.load %arg27[%c0_144, %c0_145, %c0_146] : memref<2x1x128xf32, #tpu.memory_space<vmem>>, vector<1x1x128xf32>
    %260 = vector.shape_cast %259 : vector<1x1x128xf32> to vector<1x128xf32>
    %261 = vector.broadcast %260 : vector<1x128xf32> to vector<24x128xf32>
    %262 = arith.addf %258, %261 : vector<24x128xf32>
    %263 = arith.mulf %262, %262 : vector<24x128xf32>
    %264 = arith.mulf %262, %263 : vector<24x128xf32>
    %cst_147 = arith.constant 4.471500e-02 : f32
    %265 = vector.broadcast %cst_147 : f32 to vector<24x128xf32>
    %266 = arith.mulf %265, %264 : vector<24x128xf32>
    %267 = arith.addf %262, %266 : vector<24x128xf32>
    %cst_148 = arith.constant 0.797884583 : f32
    %268 = vector.broadcast %cst_148 : f32 to vector<24x128xf32>
    %269 = arith.mulf %268, %267 : vector<24x128xf32>
    %270 = math.tanh %269 : vector<24x128xf32>
    %cst_149 = arith.constant 1.000000e+00 : f32
    %271 = vector.broadcast %cst_149 : f32 to vector<24x128xf32>
    %272 = arith.addf %271, %270 : vector<24x128xf32>
    %cst_150 = arith.constant 5.000000e-01 : f32
    %273 = vector.broadcast %cst_150 : f32 to vector<24x128xf32>
    %274 = arith.mulf %273, %272 : vector<24x128xf32>
    %275 = arith.mulf %262, %274 : vector<24x128xf32>
    %c0_151 = arith.constant 0 : index
    %c0_152 = arith.constant 0 : index
    %c0_153 = arith.constant 0 : index
    %276 = vector.load %arg28[%c0_151, %c0_152, %c0_153] : memref<2x128x32xf32, #tpu.memory_space<vmem>>, vector<1x128x32xf32>
    %277 = vector.shape_cast %276 : vector<1x128x32xf32> to vector<128x32xf32>
    %cst_154 = arith.constant dense<0.000000e+00> : vector<24x32xf32>
    %278 = tpu.matmul %275, %277, %cst_154 {dimension_numbers = #tpu.dot_dimension_numbers<[1], [0], [0], [1], [0, 0, 1, 1], [], []>} : vector<24x128xf32>, vector<128x32xf32>, vector<24x32xf32> -> vector<24x32xf32>
    %279 = arith.addf %231, %278 : vector<24x32xf32>
    %c0_155 = arith.constant 0 : index
    %c0_156 = arith.constant 0 : index
    %c0_157 = arith.constant 0 : index
    %280 = vector.load %arg29[%c0_155, %c0_156, %c0_157] : memref<2x1x32xf32, #tpu.memory_space<vmem>>, vector<1x1x32xf32>
    %281 = vector.shape_cast %280 : vector<1x1x32xf32> to vector<1x32xf32>
    %282 = vector.broadcast %281 : vector<1x32xf32> to vector<24x32xf32>
    %283 = arith.addf %279, %282 : vector<24x32xf32>
    %c1_158 = arith.constant 1 : index
    %c0_159 = arith.constant 0 : index
    %c0_160 = arith.constant 0 : index
    %284 = vector.load %arg16[%c1_158, %c0_159, %c0_160] : memref<2x1x32xf32, #tpu.memory_space<vmem>>, vector<1x1x32xf32>
    %285 = vector.shape_cast %284 : vector<1x1x32xf32> to vector<1x32xf32>
    %c1_161 = arith.constant 1 : index
    %c0_162 = arith.constant 0 : index
    %c0_163 = arith.constant 0 : index
    %286 = vector.load %arg17[%c1_161, %c0_162, %c0_163] : memref<2x1x32xf32, #tpu.memory_space<vmem>>, vector<1x1x32xf32>
    %287 = vector.shape_cast %286 : vector<1x1x32xf32> to vector<1x32xf32>
    %cst_164 = arith.constant dense<0.000000e+00> : vector<24xf32>
    %288 = vector.multi_reduction <add>, %283, %cst_164 [1] : vector<24x32xf32> to vector<24xf32>
    %289 = vector.shape_cast %288 : vector<24xf32> to vector<24x1xf32>
    %cst_165 = arith.constant 3.200000e+01 : f32
    %290 = vector.broadcast %cst_165 : f32 to vector<24x1xf32>
    %291 = arith.divf %289, %290 : vector<24x1xf32>
    %292 = vector.broadcast %291 : vector<24x1xf32> to vector<24x32xf32>
    %293 = arith.subf %283, %292 : vector<24x32xf32>
    %294 = arith.mulf %293, %293 : vector<24x32xf32>
    %cst_166 = arith.constant dense<0.000000e+00> : vector<24xf32>
    %295 = vector.multi_reduction <add>, %294, %cst_166 [1] : vector<24x32xf32> to vector<24xf32>
    %296 = vector.shape_cast %295 : vector<24xf32> to vector<24x1xf32>
    %cst_167 = arith.constant 3.200000e+01 : f32
    %297 = vector.broadcast %cst_167 : f32 to vector<24x1xf32>
    %298 = arith.divf %296, %297 : vector<24x1xf32>
    %cst_168 = arith.constant 9.99999974E-6 : f32
    %299 = vector.broadcast %cst_168 : f32 to vector<24x1xf32>
    %300 = arith.addf %298, %299 : vector<24x1xf32>
    %301 = math.rsqrt %300 : vector<24x1xf32>
    %302 = vector.broadcast %301 : vector<24x1xf32> to vector<24x32xf32>
    %303 = arith.mulf %293, %302 : vector<24x32xf32>
    %304 = vector.broadcast %285 : vector<1x32xf32> to vector<24x32xf32>
    %305 = arith.mulf %303, %304 : vector<24x32xf32>
    %306 = vector.broadcast %287 : vector<1x32xf32> to vector<24x32xf32>
    %307 = arith.addf %305, %306 : vector<24x32xf32>
    %c1_169 = arith.constant 1 : index
    %c0_170 = arith.constant 0 : index
    %c0_171 = arith.constant 0 : index
    %308 = vector.load %arg18[%c1_169, %c0_170, %c0_171] : memref<2x32x96xf32, #tpu.memory_space<vmem>>, vector<1x32x96xf32>
    %309 = vector.shape_cast %308 : vector<1x32x96xf32> to vector<32x96xf32>
    %cst_172 = arith.constant dense<0.000000e+00> : vector<24x96xf32>
    %310 = tpu.matmul %307, %309, %cst_172 {dimension_numbers = #tpu.dot_dimension_numbers<[1], [0], [0], [1], [0, 0, 1, 1], [], []>} : vector<24x32xf32>, vector<32x96xf32>, vector<24x96xf32> -> vector<24x96xf32>
    %c1_173 = arith.constant 1 : index
    %c0_174 = arith.constant 0 : index
    %c0_175 = arith.constant 0 : index
    %311 = vector.load %arg19[%c1_173, %c0_174, %c0_175] : memref<2x1x96xf32, #tpu.memory_space<vmem>>, vector<1x1x96xf32>
    %312 = vector.shape_cast %311 : vector<1x1x96xf32> to vector<1x96xf32>
    %313 = vector.broadcast %312 : vector<1x96xf32> to vector<24x96xf32>
    %314 = arith.addf %310, %313 : vector<24x96xf32>
    %c1_176 = arith.constant 1 : index
    %c0_177 = arith.constant 0 : index
    %c0_178 = arith.constant 0 : index
    %315 = vector.load %arg20[%c1_176, %c0_177, %c0_178] : memref<2x32x64xf32, #tpu.memory_space<vmem>>, vector<1x32x64xf32>
    %316 = vector.shape_cast %315 : vector<1x32x64xf32> to vector<32x64xf32>
    %cst_179 = arith.constant dense<0.000000e+00> : vector<24x64xf32>
    %317 = tpu.matmul %307, %316, %cst_179 {dimension_numbers = #tpu.dot_dimension_numbers<[1], [0], [0], [1], [0, 0, 1, 1], [], []>} : vector<24x32xf32>, vector<32x64xf32>, vector<24x64xf32> -> vector<24x64xf32>
    %c1_180 = arith.constant 1 : index
    %c0_181 = arith.constant 0 : index
    %c0_182 = arith.constant 0 : index
    %318 = vector.load %arg21[%c1_180, %c0_181, %c0_182] : memref<2x1x64xf32, #tpu.memory_space<vmem>>, vector<1x1x64xf32>
    %319 = vector.shape_cast %318 : vector<1x1x64xf32> to vector<1x64xf32>
    %320 = vector.broadcast %319 : vector<1x64xf32> to vector<24x64xf32>
    %321 = arith.addf %317, %320 : vector<24x64xf32>
    %322 = vector.extract_strided_slice %314 {offsets = [0, 0], sizes = [24, 64], strides = [1, 1]} : vector<24x96xf32> to vector<24x64xf32>
    %323 = arith.mulf %322, %99 : vector<24x64xf32>
    %324 = arith.mulf %321, %100 : vector<24x64xf32>
    %325 = arith.addf %323, %324 : vector<24x64xf32>
    %326 = vector.extract_strided_slice %314 {offsets = [0, 64], sizes = [24, 32], strides = [1, 1]} : vector<24x96xf32> to vector<24x32xf32>
    %c1_183 = arith.constant 1 : index
    %c0_184 = arith.constant 0 : index
    %c0_185 = arith.constant 0 : index
    %327 = vector.load %arg22[%c1_183, %c0_184, %c0_185] : memref<2x32x32xf32, #tpu.memory_space<vmem>>, vector<1x32x32xf32>
    %328 = vector.shape_cast %327 : vector<1x32x32xf32> to vector<32x32xf32>
    %cst_186 = arith.constant 0.000000e+00 : f32
    %329 = vector.broadcast %cst_186 : f32 to vector<24x32xf32>
    %c1_187 = arith.constant 1 : index
    %c0_188 = arith.constant 0 : index
    %c0_189 = arith.constant 0 : index
    %330 = vector.load %arg23[%c1_187, %c0_188, %c0_189] : memref<2x1x32xf32, #tpu.memory_space<vmem>>, vector<1x1x32xf32>
    %331 = vector.shape_cast %330 : vector<1x1x32xf32> to vector<1x32xf32>
    %332 = vector.broadcast %331 : vector<1x32xf32> to vector<24x32xf32>
    %333 = arith.addf %329, %332 : vector<24x32xf32>
    %334 = vector.extract_strided_slice %325 {offsets = [0, 0], sizes = [24, 8], strides = [1, 1]} : vector<24x64xf32> to vector<24x8xf32>
    %335 = vector.extract_strided_slice %325 {offsets = [0, 32], sizes = [24, 8], strides = [1, 1]} : vector<24x64xf32> to vector<24x8xf32>
    %336 = vector.extract_strided_slice %326 {offsets = [0, 0], sizes = [24, 8], strides = [1, 1]} : vector<24x32xf32> to vector<24x8xf32>
    %cst_190 = arith.constant dense<0.000000e+00> : vector<24x24xf32>
    %337 = tpu.matmul %334, %335, %cst_190 {dimension_numbers = #tpu.dot_dimension_numbers<[1], [1], [0], [0], [0, 0, 1, 0], [], []>} : vector<24x8xf32>, vector<24x8xf32>, vector<24x24xf32> -> vector<24x24xf32>
    %cst_191 = arith.constant 0.353553385 : f32
    %338 = vector.broadcast %cst_191 : f32 to vector<24x24xf32>
    %339 = arith.mulf %337, %338 : vector<24x24xf32>
    %cst_192 = arith.constant dense<0xFF800000> : vector<24xf32>
    %340 = vector.multi_reduction <maximumf>, %339, %cst_192 [1] : vector<24x24xf32> to vector<24xf32>
    %341 = vector.shape_cast %340 : vector<24xf32> to vector<24x1xf32>
    %342 = vector.broadcast %341 : vector<24x1xf32> to vector<24x24xf32>
    %343 = arith.subf %339, %342 : vector<24x24xf32>
    %344 = math.exp %343 : vector<24x24xf32>
    %cst_193 = arith.constant dense<0.000000e+00> : vector<24xf32>
    %345 = vector.multi_reduction <add>, %344, %cst_193 [1] : vector<24x24xf32> to vector<24xf32>
    %346 = vector.shape_cast %345 : vector<24xf32> to vector<24x1xf32>
    %347 = tpu.reciprocal %346 {approx = true} : vector<24x1xf32> -> vector<24x1xf32>
    %348 = vector.broadcast %347 : vector<24x1xf32> to vector<24x24xf32>
    %349 = arith.mulf %344, %348 : vector<24x24xf32>
    %cst_194 = arith.constant dense<0.000000e+00> : vector<24x8xf32>
    %350 = tpu.matmul %349, %336, %cst_194 {dimension_numbers = #tpu.dot_dimension_numbers<[1], [0], [0], [1], [0, 0, 1, 1], [], []>} : vector<24x24xf32>, vector<24x8xf32>, vector<24x8xf32> -> vector<24x8xf32>
    %351 = vector.extract_strided_slice %328 {offsets = [0, 0], sizes = [8, 32], strides = [1, 1]} : vector<32x32xf32> to vector<8x32xf32>
    %cst_195 = arith.constant dense<0.000000e+00> : vector<24x32xf32>
    %352 = tpu.matmul %350, %351, %cst_195 {dimension_numbers = #tpu.dot_dimension_numbers<[1], [0], [0], [1], [0, 0, 1, 1], [], []>} : vector<24x8xf32>, vector<8x32xf32>, vector<24x32xf32> -> vector<24x32xf32>
    %353 = arith.addf %333, %352 : vector<24x32xf32>
    %354 = vector.extract_strided_slice %325 {offsets = [0, 8], sizes = [24, 8], strides = [1, 1]} : vector<24x64xf32> to vector<24x8xf32>
    %355 = vector.extract_strided_slice %325 {offsets = [0, 40], sizes = [24, 8], strides = [1, 1]} : vector<24x64xf32> to vector<24x8xf32>
    %356 = vector.extract_strided_slice %326 {offsets = [0, 8], sizes = [24, 8], strides = [1, 1]} : vector<24x32xf32> to vector<24x8xf32>
    %cst_196 = arith.constant dense<0.000000e+00> : vector<24x24xf32>
    %357 = tpu.matmul %354, %355, %cst_196 {dimension_numbers = #tpu.dot_dimension_numbers<[1], [1], [0], [0], [0, 0, 1, 0], [], []>} : vector<24x8xf32>, vector<24x8xf32>, vector<24x24xf32> -> vector<24x24xf32>
    %cst_197 = arith.constant 0.353553385 : f32
    %358 = vector.broadcast %cst_197 : f32 to vector<24x24xf32>
    %359 = arith.mulf %357, %358 : vector<24x24xf32>
    %cst_198 = arith.constant dense<0xFF800000> : vector<24xf32>
    %360 = vector.multi_reduction <maximumf>, %359, %cst_198 [1] : vector<24x24xf32> to vector<24xf32>
    %361 = vector.shape_cast %360 : vector<24xf32> to vector<24x1xf32>
    %362 = vector.broadcast %361 : vector<24x1xf32> to vector<24x24xf32>
    %363 = arith.subf %359, %362 : vector<24x24xf32>
    %364 = math.exp %363 : vector<24x24xf32>
    %cst_199 = arith.constant dense<0.000000e+00> : vector<24xf32>
    %365 = vector.multi_reduction <add>, %364, %cst_199 [1] : vector<24x24xf32> to vector<24xf32>
    %366 = vector.shape_cast %365 : vector<24xf32> to vector<24x1xf32>
    %367 = tpu.reciprocal %366 {approx = true} : vector<24x1xf32> -> vector<24x1xf32>
    %368 = vector.broadcast %367 : vector<24x1xf32> to vector<24x24xf32>
    %369 = arith.mulf %364, %368 : vector<24x24xf32>
    %cst_200 = arith.constant dense<0.000000e+00> : vector<24x8xf32>
    %370 = tpu.matmul %369, %356, %cst_200 {dimension_numbers = #tpu.dot_dimension_numbers<[1], [0], [0], [1], [0, 0, 1, 1], [], []>} : vector<24x24xf32>, vector<24x8xf32>, vector<24x8xf32> -> vector<24x8xf32>
    %371 = vector.extract_strided_slice %328 {offsets = [8, 0], sizes = [8, 32], strides = [1, 1]} : vector<32x32xf32> to vector<8x32xf32>
    %cst_201 = arith.constant dense<0.000000e+00> : vector<24x32xf32>
    %372 = tpu.matmul %370, %371, %cst_201 {dimension_numbers = #tpu.dot_dimension_numbers<[1], [0], [0], [1], [0, 0, 1, 1], [], []>} : vector<24x8xf32>, vector<8x32xf32>, vector<24x32xf32> -> vector<24x32xf32>
    %373 = arith.addf %353, %372 : vector<24x32xf32>
    %374 = vector.extract_strided_slice %325 {offsets = [0, 16], sizes = [24, 8], strides = [1, 1]} : vector<24x64xf32> to vector<24x8xf32>
    %375 = vector.extract_strided_slice %325 {offsets = [0, 48], sizes = [24, 8], strides = [1, 1]} : vector<24x64xf32> to vector<24x8xf32>
    %376 = vector.extract_strided_slice %326 {offsets = [0, 16], sizes = [24, 8], strides = [1, 1]} : vector<24x32xf32> to vector<24x8xf32>
    %cst_202 = arith.constant dense<0.000000e+00> : vector<24x24xf32>
    %377 = tpu.matmul %374, %375, %cst_202 {dimension_numbers = #tpu.dot_dimension_numbers<[1], [1], [0], [0], [0, 0, 1, 0], [], []>} : vector<24x8xf32>, vector<24x8xf32>, vector<24x24xf32> -> vector<24x24xf32>
    %cst_203 = arith.constant 0.353553385 : f32
    %378 = vector.broadcast %cst_203 : f32 to vector<24x24xf32>
    %379 = arith.mulf %377, %378 : vector<24x24xf32>
    %cst_204 = arith.constant dense<0xFF800000> : vector<24xf32>
    %380 = vector.multi_reduction <maximumf>, %379, %cst_204 [1] : vector<24x24xf32> to vector<24xf32>
    %381 = vector.shape_cast %380 : vector<24xf32> to vector<24x1xf32>
    %382 = vector.broadcast %381 : vector<24x1xf32> to vector<24x24xf32>
    %383 = arith.subf %379, %382 : vector<24x24xf32>
    %384 = math.exp %383 : vector<24x24xf32>
    %cst_205 = arith.constant dense<0.000000e+00> : vector<24xf32>
    %385 = vector.multi_reduction <add>, %384, %cst_205 [1] : vector<24x24xf32> to vector<24xf32>
    %386 = vector.shape_cast %385 : vector<24xf32> to vector<24x1xf32>
    %387 = tpu.reciprocal %386 {approx = true} : vector<24x1xf32> -> vector<24x1xf32>
    %388 = vector.broadcast %387 : vector<24x1xf32> to vector<24x24xf32>
    %389 = arith.mulf %384, %388 : vector<24x24xf32>
    %cst_206 = arith.constant dense<0.000000e+00> : vector<24x8xf32>
    %390 = tpu.matmul %389, %376, %cst_206 {dimension_numbers = #tpu.dot_dimension_numbers<[1], [0], [0], [1], [0, 0, 1, 1], [], []>} : vector<24x24xf32>, vector<24x8xf32>, vector<24x8xf32> -> vector<24x8xf32>
    %391 = vector.extract_strided_slice %328 {offsets = [16, 0], sizes = [8, 32], strides = [1, 1]} : vector<32x32xf32> to vector<8x32xf32>
    %cst_207 = arith.constant dense<0.000000e+00> : vector<24x32xf32>
    %392 = tpu.matmul %390, %391, %cst_207 {dimension_numbers = #tpu.dot_dimension_numbers<[1], [0], [0], [1], [0, 0, 1, 1], [], []>} : vector<24x8xf32>, vector<8x32xf32>, vector<24x32xf32> -> vector<24x32xf32>
    %393 = arith.addf %373, %392 : vector<24x32xf32>
    %394 = vector.extract_strided_slice %325 {offsets = [0, 24], sizes = [24, 8], strides = [1, 1]} : vector<24x64xf32> to vector<24x8xf32>
    %395 = vector.extract_strided_slice %325 {offsets = [0, 56], sizes = [24, 8], strides = [1, 1]} : vector<24x64xf32> to vector<24x8xf32>
    %396 = vector.extract_strided_slice %326 {offsets = [0, 24], sizes = [24, 8], strides = [1, 1]} : vector<24x32xf32> to vector<24x8xf32>
    %cst_208 = arith.constant dense<0.000000e+00> : vector<24x24xf32>
    %397 = tpu.matmul %394, %395, %cst_208 {dimension_numbers = #tpu.dot_dimension_numbers<[1], [1], [0], [0], [0, 0, 1, 0], [], []>} : vector<24x8xf32>, vector<24x8xf32>, vector<24x24xf32> -> vector<24x24xf32>
    %cst_209 = arith.constant 0.353553385 : f32
    %398 = vector.broadcast %cst_209 : f32 to vector<24x24xf32>
    %399 = arith.mulf %397, %398 : vector<24x24xf32>
    %cst_210 = arith.constant dense<0xFF800000> : vector<24xf32>
    %400 = vector.multi_reduction <maximumf>, %399, %cst_210 [1] : vector<24x24xf32> to vector<24xf32>
    %401 = vector.shape_cast %400 : vector<24xf32> to vector<24x1xf32>
    %402 = vector.broadcast %401 : vector<24x1xf32> to vector<24x24xf32>
    %403 = arith.subf %399, %402 : vector<24x24xf32>
    %404 = math.exp %403 : vector<24x24xf32>
    %cst_211 = arith.constant dense<0.000000e+00> : vector<24xf32>
    %405 = vector.multi_reduction <add>, %404, %cst_211 [1] : vector<24x24xf32> to vector<24xf32>
    %406 = vector.shape_cast %405 : vector<24xf32> to vector<24x1xf32>
    %407 = tpu.reciprocal %406 {approx = true} : vector<24x1xf32> -> vector<24x1xf32>
    %408 = vector.broadcast %407 : vector<24x1xf32> to vector<24x24xf32>
    %409 = arith.mulf %404, %408 : vector<24x24xf32>
    %cst_212 = arith.constant dense<0.000000e+00> : vector<24x8xf32>
    %410 = tpu.matmul %409, %396, %cst_212 {dimension_numbers = #tpu.dot_dimension_numbers<[1], [0], [0], [1], [0, 0, 1, 1], [], []>} : vector<24x24xf32>, vector<24x8xf32>, vector<24x8xf32> -> vector<24x8xf32>
    %411 = vector.extract_strided_slice %328 {offsets = [24, 0], sizes = [8, 32], strides = [1, 1]} : vector<32x32xf32> to vector<8x32xf32>
    %cst_213 = arith.constant dense<0.000000e+00> : vector<24x32xf32>
    %412 = tpu.matmul %410, %411, %cst_213 {dimension_numbers = #tpu.dot_dimension_numbers<[1], [0], [0], [1], [0, 0, 1, 1], [], []>} : vector<24x8xf32>, vector<8x32xf32>, vector<24x32xf32> -> vector<24x32xf32>
    %413 = arith.addf %393, %412 : vector<24x32xf32>
    %414 = arith.addf %283, %413 : vector<24x32xf32>
    %c1_214 = arith.constant 1 : index
    %c0_215 = arith.constant 0 : index
    %c0_216 = arith.constant 0 : index
    %415 = vector.load %arg24[%c1_214, %c0_215, %c0_216] : memref<2x1x32xf32, #tpu.memory_space<vmem>>, vector<1x1x32xf32>
    %416 = vector.shape_cast %415 : vector<1x1x32xf32> to vector<1x32xf32>
    %c1_217 = arith.constant 1 : index
    %c0_218 = arith.constant 0 : index
    %c0_219 = arith.constant 0 : index
    %417 = vector.load %arg25[%c1_217, %c0_218, %c0_219] : memref<2x1x32xf32, #tpu.memory_space<vmem>>, vector<1x1x32xf32>
    %418 = vector.shape_cast %417 : vector<1x1x32xf32> to vector<1x32xf32>
    %cst_220 = arith.constant dense<0.000000e+00> : vector<24xf32>
    %419 = vector.multi_reduction <add>, %414, %cst_220 [1] : vector<24x32xf32> to vector<24xf32>
    %420 = vector.shape_cast %419 : vector<24xf32> to vector<24x1xf32>
    %cst_221 = arith.constant 3.200000e+01 : f32
    %421 = vector.broadcast %cst_221 : f32 to vector<24x1xf32>
    %422 = arith.divf %420, %421 : vector<24x1xf32>
    %423 = vector.broadcast %422 : vector<24x1xf32> to vector<24x32xf32>
    %424 = arith.subf %414, %423 : vector<24x32xf32>
    %425 = arith.mulf %424, %424 : vector<24x32xf32>
    %cst_222 = arith.constant dense<0.000000e+00> : vector<24xf32>
    %426 = vector.multi_reduction <add>, %425, %cst_222 [1] : vector<24x32xf32> to vector<24xf32>
    %427 = vector.shape_cast %426 : vector<24xf32> to vector<24x1xf32>
    %cst_223 = arith.constant 3.200000e+01 : f32
    %428 = vector.broadcast %cst_223 : f32 to vector<24x1xf32>
    %429 = arith.divf %427, %428 : vector<24x1xf32>
    %cst_224 = arith.constant 9.99999974E-6 : f32
    %430 = vector.broadcast %cst_224 : f32 to vector<24x1xf32>
    %431 = arith.addf %429, %430 : vector<24x1xf32>
    %432 = math.rsqrt %431 : vector<24x1xf32>
    %433 = vector.broadcast %432 : vector<24x1xf32> to vector<24x32xf32>
    %434 = arith.mulf %424, %433 : vector<24x32xf32>
    %435 = vector.broadcast %416 : vector<1x32xf32> to vector<24x32xf32>
    %436 = arith.mulf %434, %435 : vector<24x32xf32>
    %437 = vector.broadcast %418 : vector<1x32xf32> to vector<24x32xf32>
    %438 = arith.addf %436, %437 : vector<24x32xf32>
    %c1_225 = arith.constant 1 : index
    %c0_226 = arith.constant 0 : index
    %c0_227 = arith.constant 0 : index
    %439 = vector.load %arg26[%c1_225, %c0_226, %c0_227] : memref<2x32x128xf32, #tpu.memory_space<vmem>>, vector<1x32x128xf32>
    %440 = vector.shape_cast %439 : vector<1x32x128xf32> to vector<32x128xf32>
    %cst_228 = arith.constant dense<0.000000e+00> : vector<24x128xf32>
    %441 = tpu.matmul %438, %440, %cst_228 {dimension_numbers = #tpu.dot_dimension_numbers<[1], [0], [0], [1], [0, 0, 1, 1], [], []>} : vector<24x32xf32>, vector<32x128xf32>, vector<24x128xf32> -> vector<24x128xf32>
    %c1_229 = arith.constant 1 : index
    %c0_230 = arith.constant 0 : index
    %c0_231 = arith.constant 0 : index
    %442 = vector.load %arg27[%c1_229, %c0_230, %c0_231] : memref<2x1x128xf32, #tpu.memory_space<vmem>>, vector<1x1x128xf32>
    %443 = vector.shape_cast %442 : vector<1x1x128xf32> to vector<1x128xf32>
    %444 = vector.broadcast %443 : vector<1x128xf32> to vector<24x128xf32>
    %445 = arith.addf %441, %444 : vector<24x128xf32>
    %446 = arith.mulf %445, %445 : vector<24x128xf32>
    %447 = arith.mulf %445, %446 : vector<24x128xf32>
    %cst_232 = arith.constant 4.471500e-02 : f32
    %448 = vector.broadcast %cst_232 : f32 to vector<24x128xf32>
    %449 = arith.mulf %448, %447 : vector<24x128xf32>
    %450 = arith.addf %445, %449 : vector<24x128xf32>
    %cst_233 = arith.constant 0.797884583 : f32
    %451 = vector.broadcast %cst_233 : f32 to vector<24x128xf32>
    %452 = arith.mulf %451, %450 : vector<24x128xf32>
    %453 = math.tanh %452 : vector<24x128xf32>
    %cst_234 = arith.constant 1.000000e+00 : f32
    %454 = vector.broadcast %cst_234 : f32 to vector<24x128xf32>
    %455 = arith.addf %454, %453 : vector<24x128xf32>
    %cst_235 = arith.constant 5.000000e-01 : f32
    %456 = vector.broadcast %cst_235 : f32 to vector<24x128xf32>
    %457 = arith.mulf %456, %455 : vector<24x128xf32>
    %458 = arith.mulf %445, %457 : vector<24x128xf32>
    %c1_236 = arith.constant 1 : index
    %c0_237 = arith.constant 0 : index
    %c0_238 = arith.constant 0 : index
    %459 = vector.load %arg28[%c1_236, %c0_237, %c0_238] : memref<2x128x32xf32, #tpu.memory_space<vmem>>, vector<1x128x32xf32>
    %460 = vector.shape_cast %459 : vector<1x128x32xf32> to vector<128x32xf32>
    %cst_239 = arith.constant dense<0.000000e+00> : vector<24x32xf32>
    %461 = tpu.matmul %458, %460, %cst_239 {dimension_numbers = #tpu.dot_dimension_numbers<[1], [0], [0], [1], [0, 0, 1, 1], [], []>} : vector<24x128xf32>, vector<128x32xf32>, vector<24x32xf32> -> vector<24x32xf32>
    %462 = arith.addf %414, %461 : vector<24x32xf32>
    %c1_240 = arith.constant 1 : index
    %c0_241 = arith.constant 0 : index
    %c0_242 = arith.constant 0 : index
    %463 = vector.load %arg29[%c1_240, %c0_241, %c0_242] : memref<2x1x32xf32, #tpu.memory_space<vmem>>, vector<1x1x32xf32>
    %464 = vector.shape_cast %463 : vector<1x1x32xf32> to vector<1x32xf32>
    %465 = vector.broadcast %464 : vector<1x32xf32> to vector<24x32xf32>
    %466 = arith.addf %462, %465 : vector<24x32xf32>
    %c0_243 = arith.constant 0 : index
    %c0_244 = arith.constant 0 : index
    %467 = vector.load %arg30[%c0_243, %c0_244] : memref<1x32xf32, #tpu.memory_space<vmem>>, vector<1x32xf32>
    %c0_245 = arith.constant 0 : index
    %c0_246 = arith.constant 0 : index
    %468 = vector.load %arg31[%c0_245, %c0_246] : memref<1x32xf32, #tpu.memory_space<vmem>>, vector<1x32xf32>
    %cst_247 = arith.constant dense<0.000000e+00> : vector<24xf32>
    %469 = vector.multi_reduction <add>, %466, %cst_247 [1] : vector<24x32xf32> to vector<24xf32>
    %470 = vector.shape_cast %469 : vector<24xf32> to vector<24x1xf32>
    %cst_248 = arith.constant 3.200000e+01 : f32
    %471 = vector.broadcast %cst_248 : f32 to vector<24x1xf32>
    %472 = arith.divf %470, %471 : vector<24x1xf32>
    %473 = vector.broadcast %472 : vector<24x1xf32> to vector<24x32xf32>
    %474 = arith.subf %466, %473 : vector<24x32xf32>
    %475 = arith.mulf %474, %474 : vector<24x32xf32>
    %cst_249 = arith.constant dense<0.000000e+00> : vector<24xf32>
    %476 = vector.multi_reduction <add>, %475, %cst_249 [1] : vector<24x32xf32> to vector<24xf32>
    %477 = vector.shape_cast %476 : vector<24xf32> to vector<24x1xf32>
    %cst_250 = arith.constant 3.200000e+01 : f32
    %478 = vector.broadcast %cst_250 : f32 to vector<24x1xf32>
    %479 = arith.divf %477, %478 : vector<24x1xf32>
    %cst_251 = arith.constant 9.99999974E-6 : f32
    %480 = vector.broadcast %cst_251 : f32 to vector<24x1xf32>
    %481 = arith.addf %479, %480 : vector<24x1xf32>
    %482 = math.rsqrt %481 : vector<24x1xf32>
    %483 = vector.broadcast %482 : vector<24x1xf32> to vector<24x32xf32>
    %484 = arith.mulf %474, %483 : vector<24x32xf32>
    %485 = vector.broadcast %467 : vector<1x32xf32> to vector<24x32xf32>
    %486 = arith.mulf %484, %485 : vector<24x32xf32>
    %487 = vector.broadcast %468 : vector<1x32xf32> to vector<24x32xf32>
    %488 = arith.addf %486, %487 : vector<24x32xf32>
    %c0_252 = arith.constant 0 : index
    %c0_253 = arith.constant 0 : index
    %489 = vector.load %arg32[%c0_252, %c0_253] : memref<24x32xf32, #tpu.memory_space<vmem>>, vector<24x32xf32>
    tpu.vector_store %arg32[%c0_252, %c0_253], %488 {strides = array<i32>} : memref<24x32xf32, #tpu.memory_space<vmem>>, vector<24x32xf32>,
    return
  }
}

</mosaic_0001>

<llo_original>
// kernel: forward_fn.1
$region0: #{forward_fn.1}
  #allocation0 [shape = 'u32[]', space=smem, size = 0x4, offset = 0x4, fixed_abs, tag = 'smem constant byte address 0x4 - core index']
  #allocation1 [shape = 'u32[144,128]{1,0:T(1,128)}', space=vmem, size = 0x12000, scoped, tag = 'internal scratch']
  #allocation2 [shape = 'f32[32,64]{1,0:T(8,128)}', space=vmem, size = 0x4000, scoped, tag = 'scratch operand']
  %s0 = inlined_call_operand.smem [shape: u32[33], index: -1, kind: input, shape index: {}]
  %s1 = sld [smem:[%s0]]
  %s2 = scalar_lea.smem %s0, 1
  %s3 = sld [smem:[%s2]]
  %s4 = scalar_lea.smem %s0, 2
  %s5 = sld [smem:[%s4]]
  %s6 = scalar_lea.smem %s0, 3
  %s7 = sld [smem:[%s6]]
  %s8 = scalar_lea.smem %s0, 4
  %s9 = sld [smem:[%s8]]
  %s10 = scalar_lea.smem %s0, 5
  %s11 = sld [smem:[%s10]]
  %s12 = scalar_lea.smem %s0, 6
  %s13 = sld [smem:[%s12]]
  %s14 = scalar_lea.smem %s0, 7
  %s15 = sld [smem:[%s14]]
  %s16 = scalar_lea.smem %s0, 8
  %s17 = sld [smem:[%s16]]
  %s18 = scalar_lea.smem %s0, 9
  %s19 = sld [smem:[%s18]]
  %s20 = scalar_lea.smem %s0, 10
  %s21 = sld [smem:[%s20]]
  %s22 = scalar_lea.smem %s0, 11
  %s23 = sld [smem:[%s22]]
  %s24 = scalar_lea.smem %s0, 12
  %s25 = sld [smem:[%s24]]
  %s26 = scalar_lea.smem %s0, 13
  %s27 = sld [smem:[%s26]]
  %s28 = scalar_lea.smem %s0, 14
  %s29 = sld [smem:[%s28]]
  %s30 = scalar_lea.smem %s0, 15
  %s31 = sld [smem:[%s30]]
  %s32 = scalar_lea.smem %s0, 16
  %s33 = sld [smem:[%s32]]
  %s34 = scalar_lea.smem %s0, 17
  %s35 = sld [smem:[%s34]]
  %s36 = scalar_lea.smem %s0, 18
  %s37 = sld [smem:[%s36]]
  %s38 = scalar_lea.smem %s0, 19
  %s39 = sld [smem:[%s38]]
  %s40 = scalar_lea.smem %s0, 20
  %s41 = sld [smem:[%s40]]
  %s42 = scalar_lea.smem %s0, 21
  %s43 = sld [smem:[%s42]]
  %s44 = scalar_lea.smem %s0, 22
  %s45 = sld [smem:[%s44]]
  %s46 = scalar_lea.smem %s0, 23
  %s47 = sld [smem:[%s46]]
  %s48 = scalar_lea.smem %s0, 24
  %s49 = sld [smem:[%s48]]
  %s50 = scalar_lea.smem %s0, 25
  %s51 = sld [smem:[%s50]]
  %s52 = scalar_lea.smem %s0, 26
  %s53 = sld [smem:[%s52]]
  %s54 = scalar_lea.smem %s0, 27
  %s55 = sld [smem:[%s54]]
  %s56 = scalar_lea.smem %s0, 28
  %s57 = sld [smem:[%s56]]
  %s58 = scalar_lea.smem %s0, 29
  %s59 = sld [smem:[%s58]]
  %s60 = scalar_lea.smem %s0, 30
  %s61 = sld [smem:[%s60]]
  %s62 = scalar_lea.smem %s0, 31
  %s63 = sld [smem:[%s62]]
  %s64 = scalar_lea.smem %s0, 32
  %s65 = sld [smem:[%s64]]
  %s66 = sld [smem:[#allocation0]]
  $region138: #{forward_fn.1} parent=0
    _
  %s68 = ssub.s32 1, %s66
  %s69 = scalar_select 0, %s68, %s66
  $region1: #{forward_fn.1} parent=0
    #allocation3 [shape = 'u8[12288]{0}', space=vmem, size = 0x3000, scoped, tag = 'output window, operand 0, single buffered']
    #allocation4 [shape = 's32[1]{0}', space=sflag, size = 0x4, scoped, tag = 'scoped memory for forward_fn.1']
    %70 = vsyncpa [#allocation4], 0
    // Predicated region
    $region2: #{forward_fn.1} parent=1 // pred_check
      _
    $region3: #{forward_fn.1} parent=1 // pred_check_branch
      %72 = sbr.rel (0) target = $region5
    $region4: #{forward_fn.1} parent=1 // pred_region
      _
    $region5: #{forward_fn.1} parent=1 // pred_fallthru
      _
    // Predicated region
    $region6: #{forward_fn.1} parent=1 // pred_check
      _
    $region7: #{forward_fn.1} parent=1 // pred_check_branch
      %74 = sbr.rel (0) target = $region9
    $region8: #{forward_fn.1} parent=1 // pred_region
      _
    $region9: #{forward_fn.1} parent=1 // pred_fallthru
      _
    // Predicated region
    $region10: #{forward_fn.1} parent=1 // pred_check
      _
    $region11: #{forward_fn.1} parent=1 // pred_check_branch
      %76 = sbr.rel (0) target = $region13
    $region12: #{forward_fn.1} parent=1 // pred_region
      _
    $region13: #{forward_fn.1} parent=1 // pred_fallthru
      _
    // Predicated region
    $region14: #{forward_fn.1} parent=1 // pred_check
      _
    $region15: #{forward_fn.1} parent=1 // pred_check_branch
      %78 = sbr.rel (0) target = $region17
    $region16: #{forward_fn.1} parent=1 // pred_region
      _
    $region17: #{forward_fn.1} parent=1 // pred_fallthru
      _
    // Predicated region
    $region18: #{forward_fn.1} parent=1 // pred_check
      _
    $region19: #{forward_fn.1} parent=1 // pred_check_branch
      %80 = sbr.rel (0) target = $region21
    $region20: #{forward_fn.1} parent=1 // pred_region
      _
    $region21: #{forward_fn.1} parent=1 // pred_fallthru
      _
    // Predicated region
    $region22: #{forward_fn.1} parent=1 // pred_check
      _
    $region23: #{forward_fn.1} parent=1 // pred_check_branch
      %82 = sbr.rel (0) target = $region25
    $region24: #{forward_fn.1} parent=1 // pred_region
      _
    $region25: #{forward_fn.1} parent=1 // pred_fallthru
      _
    // Predicated region
    $region26: #{forward_fn.1} parent=1 // pred_check
      _
    $region27: #{forward_fn.1} parent=1 // pred_check_branch
      %84 = sbr.rel (0) target = $region29
    $region28: #{forward_fn.1} parent=1 // pred_region
      _
    $region29: #{forward_fn.1} parent=1 // pred_fallthru
      _
    // Predicated region
    $region30: #{forward_fn.1} parent=1 // pred_check
      _
    $region31: #{forward_fn.1} parent=1 // pred_check_branch
      %86 = sbr.rel (0) target = $region33
    $region32: #{forward_fn.1} parent=1 // pred_region
      _
    $region33: #{forward_fn.1} parent=1 // pred_fallthru
      _
    // Predicated region
    $region34: #{forward_fn.1} parent=1 // pred_check
      _
    $region35: #{forward_fn.1} parent=1 // pred_check_branch
      %88 = sbr.rel (0) target = $region37
    $region36: #{forward_fn.1} parent=1 // pred_region
      _
    $region37: #{forward_fn.1} parent=1 // pred_fallthru
      _
    // Predicated region
    $region38: #{forward_fn.1} parent=1 // pred_check
      _
    $region39: #{forward_fn.1} parent=1 // pred_check_branch
      %90 = sbr.rel (0) target = $region41
    $region40: #{forward_fn.1} parent=1 // pred_region
      _
    $region41: #{forward_fn.1} parent=1 // pred_fallthru
      _
    // Predicated region
    $region42: #{forward_fn.1} parent=1 // pred_check
      _
    $region43: #{forward_fn.1} parent=1 // pred_check_branch
      %92 = sbr.rel (0) target = $region45
    $region44: #{forward_fn.1} parent=1 // pred_region
      _
    $region45: #{forward_fn.1} parent=1 // pred_fallthru
      _
    // Predicated region
    $region46: #{forward_fn.1} parent=1 // pred_check
      _
    $region47: #{forward_fn.1} parent=1 // pred_check_branch
      %94 = sbr.rel (0) target = $region49
    $region48: #{forward_fn.1} parent=1 // pred_region
      _
    $region49: #{forward_fn.1} parent=1 // pred_fallthru
      _
    // Predicated region
    $region50: #{forward_fn.1} parent=1 // pred_check
      _
    $region51: #{forward_fn.1} parent=1 // pred_check_branch
      %96 = sbr.rel (0) target = $region53
    $region52: #{forward_fn.1} parent=1 // pred_region
      _
    $region53: #{forward_fn.1} parent=1 // pred_fallthru
      _
    // Predicated region
    $region54: #{forward_fn.1} parent=1 // pred_check
      _
    $region55: #{forward_fn.1} parent=1 // pred_check_branch
      %98 = sbr.rel (0) target = $region57
    $region56: #{forward_fn.1} parent=1 // pred_region
      _
    $region57: #{forward_fn.1} parent=1 // pred_fallthru
      _
    // Predicated region
    $region58: #{forward_fn.1} parent=1 // pred_check
      _
    $region59: #{forward_fn.1} parent=1 // pred_check_branch
      %100 = sbr.rel (0) target = $region61
    $region60: #{forward_fn.1} parent=1 // pred_region
      _
    $region61: #{forward_fn.1} parent=1 // pred_fallthru
      _
    // Predicated region
    $region62: #{forward_fn.1} parent=1 // pred_check
      _
    $region63: #{forward_fn.1} parent=1 // pred_check_branch
      %102 = sbr.rel (0) target = $region65
    $region64: #{forward_fn.1} parent=1 // pred_region
      _
    $region65: #{forward_fn.1} parent=1 // pred_fallthru
      _
    // Predicated region
    $region66: #{forward_fn.1} parent=1 // pred_check
      _
    $region67: #{forward_fn.1} parent=1 // pred_check_branch
      %104 = sbr.rel (0) target = $region69
    $region68: #{forward_fn.1} parent=1 // pred_region
      _
    $region69: #{forward_fn.1} parent=1 // pred_fallthru
      _
    // Predicated region
    $region70: #{forward_fn.1} parent=1 // pred_check
      _
    $region71: #{forward_fn.1} parent=1 // pred_check_branch
      %106 = sbr.rel (0) target = $region73
    $region72: #{forward_fn.1} parent=1 // pred_region
      _
    $region73: #{forward_fn.1} parent=1 // pred_fallthru
      _
    // Predicated region
    $region74: #{forward_fn.1} parent=1 // pred_check
      _
    $region75: #{forward_fn.1} parent=1 // pred_check_branch
      %108 = sbr.rel (0) target = $region77
    $region76: #{forward_fn.1} parent=1 // pred_region
      _
    $region77: #{forward_fn.1} parent=1 // pred_fallthru
      _
    // Predicated region
    $region78: #{forward_fn.1} parent=1 // pred_check
      _
    $region79: #{forward_fn.1} parent=1 // pred_check_branch
      %110 = sbr.rel (0) target = $region81
    $region80: #{forward_fn.1} parent=1 // pred_region
      _
    $region81: #{forward_fn.1} parent=1 // pred_fallthru
      _
    // Predicated region
    $region82: #{forward_fn.1} parent=1 // pred_check
      _
    $region83: #{forward_fn.1} parent=1 // pred_check_branch
      %112 = sbr.rel (0) target = $region85
    $region84: #{forward_fn.1} parent=1 // pred_region
      _
    $region85: #{forward_fn.1} parent=1 // pred_fallthru
      _
    // Predicated region
    $region86: #{forward_fn.1} parent=1 // pred_check
      _
    $region87: #{forward_fn.1} parent=1 // pred_check_branch
      %114 = sbr.rel (0) target = $region89
    $region88: #{forward_fn.1} parent=1 // pred_region
      _
    $region89: #{forward_fn.1} parent=1 // pred_fallthru
      _
    // Predicated region
    $region90: #{forward_fn.1} parent=1 // pred_check
      _
    $region91: #{forward_fn.1} parent=1 // pred_check_branch
      %116 = sbr.rel (0) target = $region93
    $region92: #{forward_fn.1} parent=1 // pred_region
      _
    $region93: #{forward_fn.1} parent=1 // pred_fallthru
      _
    // Predicated region
    $region94: #{forward_fn.1} parent=1 // pred_check
      _
    $region95: #{forward_fn.1} parent=1 // pred_check_branch
      %118 = sbr.rel (0) target = $region97
    $region96: #{forward_fn.1} parent=1 // pred_region
      _
    $region97: #{forward_fn.1} parent=1 // pred_fallthru
      _
    // Predicated region
    $region98: #{forward_fn.1} parent=1 // pred_check
      _
    $region99: #{forward_fn.1} parent=1 // pred_check_branch
      %120 = sbr.rel (0) target = $region101
    $region100: #{forward_fn.1} parent=1 // pred_region
      _
    $region101: #{forward_fn.1} parent=1 // pred_fallthru
      _
    // Predicated region
    $region102: #{forward_fn.1} parent=1 // pred_check
      _
    $region103: #{forward_fn.1} parent=1 // pred_check_branch
      %122 = sbr.rel (0) target = $region105
    $region104: #{forward_fn.1} parent=1 // pred_region
      _
    $region105: #{forward_fn.1} parent=1 // pred_fallthru
      _
    // Predicated region
    $region106: #{forward_fn.1} parent=1 // pred_check
      _
    $region107: #{forward_fn.1} parent=1 // pred_check_branch
      %124 = sbr.rel (0) target = $region109
    $region108: #{forward_fn.1} parent=1 // pred_region
      _
    $region109: #{forward_fn.1} parent=1 // pred_fallthru
      _
    // Predicated region
    $region110: #{forward_fn.1} parent=1 // pred_check
      _
    $region111: #{forward_fn.1} parent=1 // pred_check_branch
      %126 = sbr.rel (0) target = $region113
    $region112: #{forward_fn.1} parent=1 // pred_region
      _
    $region113: #{forward_fn.1} parent=1 // pred_fallthru
      _
    // Predicated region
    $region114: #{forward_fn.1} parent=1 // pred_check
      _
    $region115: #{forward_fn.1} parent=1 // pred_check_branch
      %128 = sbr.rel (0) target = $region117
    $region116: #{forward_fn.1} parent=1 // pred_region
      _
    $region117: #{forward_fn.1} parent=1 // pred_fallthru
      _
    // Predicated region
    $region118: #{forward_fn.1} parent=1 // pred_check
      _
    $region119: #{forward_fn.1} parent=1 // pred_check_branch
      %130 = sbr.rel (0) target = $region121
    $region120: #{forward_fn.1} parent=1 // pred_region
      _
    $region121: #{forward_fn.1} parent=1 // pred_fallthru
      _
    // Predicated region
    $region122: #{forward_fn.1} parent=1 // pred_check
      _
    $region123: #{forward_fn.1} parent=1 // pred_check_branch
      %132 = sbr.rel (0) target = $region125
    $region124: #{forward_fn.1} parent=1 // pred_region
      _
    $region125: #{forward_fn.1} parent=1 // pred_fallthru
      _
    // Predicated region
    $region126: #{forward_fn.1} parent=1 // pred_check
      _
    $region127: #{forward_fn.1} parent=1 // pred_check_branch
      %134 = sbr.rel (0) target = $region129
    $region128: #{forward_fn.1} parent=1 // pred_region
      _
    $region129: #{forward_fn.1} parent=1 // pred_fallthru
      _
    %v135 = vld [vmem:[%s1] sm:$0xff]
    %v136 = vld [vmem:[%s1 + $0x8] sm:$0xff]
    %v137 = vld [vmem:[%s1 + $0x10] sm:$0xff]
    %v138 = vld [vmem:[%s3] sm:$0xff]
    %v139 = vld [vmem:[%s3 + $0x8] sm:$0xff]
    %v140 = vld [vmem:[%s3 + $0x10] sm:$0xff]
    %v141 = vld [vmem:[%s3 + $0x18] sm:$0xff]
    %v142 = vld [vmem:[%s3 + $0x20] sm:$0xff]
    %v143 = vld [vmem:[%s3 + $0x28] sm:$0xff]
    %v144 = vld [vmem:[%s5] sm:$0x1]
    %v146 = vlaneseq
    %v147 = vshrl.u32 %v146, 7
    %v148 = vsub.s32 0, %v147
    %v149 = vrot.slane %v144, %v148
    %vm151 = vcmask 392192
    %v153 = vsel %vm151, %v135, 0
    %v156 = vsel %vm151, %v136, 0
    %v159 = vsel %vm151, %v137, 0
    %161 = vmatprep.subr.mxu0 0.0
    %162 = vmatpush1.msra.mxu0 0.0
    %163 = vmatprep.subr.mxu0 0.0
    %164 = vmatpush1.msra.mxu0 0.0
    %165 = vmatprep.subr.mxu0 0.0
    %166 = vmatpush1.msra.mxu0 0.0
    %167 = vmatprep.subr.mxu0 0.0
    %168 = vmatpush1.msra.mxu0 0.0
    %169 = vmatprep.subr.mxu0 0.0
    %170 = vmatpush1.msra.mxu0 0.0
    %171 = vmatprep.subr.mxu0 0.0
    %172 = vmatpush1.msra.mxu0 0.0
    %173 = vmatprep.subr.mxu0 0.0
    %174 = vmatpush1.msra.mxu0 0.0
    %175 = vmatprep.subr.mxu0 0.0
    %176 = vmatpush1.msra.mxu0 0.0
    %177 = vmatprep.subr.mxu0 0.0
    %178 = vmatpush1.msra.mxu0 0.0
    %179 = vmatprep.subr.mxu0 0.0
    %180 = vmatpush1.msra.mxu0 0.0
    %181 = vmatprep.subr.mxu0 0.0
    %182 = vmatpush1.msra.mxu0 %v143
    %183 = vmatprep.subr.mxu0 0.0
    %184 = vmatpush1.msra.mxu0 %v142
    %185 = vmatprep.subr.mxu0 0.0
    %186 = vmatpush1.msra.mxu0 %v141
    %187 = vmatprep.subr.mxu0 0.0
    %188 = vmatpush1.msra.mxu0 %v140
    %189 = vmatprep.subr.mxu0 0.0
    %190 = vmatpush1.msra.mxu0 %v139
    %191 = vmatprep.subr.mxu0 0.0
    %192 = vmatpush1.msra.mxu0 %v138
    %193 = vmatprep.subr.mxu0 0.0
    %194 = vmatpush2.msra.mxu0 0.0
    %195 = vmatprep.subr.mxu0 0.0
    %196 = vmatpush2.msra.mxu0 0.0
    %197 = vmatprep.subr.mxu0 0.0
    %198 = vmatpush2.msra.mxu0 0.0
    %199 = vmatprep.subr.mxu0 0.0
    %200 = vmatpush2.msra.mxu0 0.0
    %201 = vmatprep.subr.mxu0 0.0
    %202 = vmatpush2.msra.mxu0 0.0
    %203 = vmatprep.subr.mxu0 0.0
    %204 = vmatpush2.msra.mxu0 0.0
    %205 = vmatprep.subr.mxu0 0.0
    %206 = vmatpush2.msra.mxu0 0.0
    %207 = vmatprep.subr.mxu0 0.0
    %208 = vmatpush2.msra.mxu0 0.0
    %209 = vmatprep.subr.mxu0 0.0
    %210 = vmatpush2.msra.mxu0 0.0
    %211 = vmatprep.subr.mxu0 0.0
    %212 = vmatpush2.msra.mxu0 0.0
    %213 = vmatprep.subr.mxu0 0.0
    %214 = vmatpush2.msra.mxu0 0.0
    %215 = vmatprep.subr.mxu0 0.0
    %216 = vmatpush2.msra.mxu0 0.0
    %217 = vmatprep.subr.mxu0 0.0
    %218 = vmatpush2.msra.mxu0 0.0
    %219 = vmatprep.subr.mxu0 0.0
    %220 = vmatpush2.msra.mxu0 0.0
    %221 = vmatprep.subr.mxu0 0.0
    %222 = vmatpush2.msra.mxu0 0.0
    %223 = vmatprep.subr.mxu0 0.0
    %224 = vmatpush2.msra.mxu0 0.0
    %225 = vmatprep.mubr.f32.mxu0 0.0
    %226 = vmatmul.mubr.f32.gmra.mxu0 %v153
    %v227 = vpop.f32.mrf.mxu0
    %v228 = vadd.f32 %v149, %v227
    %v229 = vpop.f32.mrf.mxu0
    %230 = vmatprep.mubr.f32.mxu0 0.0
    %231 = vmatmul.mubr.f32.gmra.mxu0 %v156
    %v232 = vpop.f32.mrf.mxu0
    %v233 = vadd.f32 %v149, %v232
    %v234 = vpop.f32.mrf.mxu0
    %235 = vmatprep.mubr.f32.mxu0 0.0
    %236 = vmatmul.mubr.f32.gmra.mxu0 %v159
    %v237 = vpop.f32.mrf.mxu0
    %v238 = vadd.f32 %v149, %v237
    %v239 = vpop.f32.mrf.mxu0
    %240 = vdwg.mxu0
    %v241 = vmul.f32 %v228, %v228
    %v242 = vmul.f32 %v233, %v233
    %v243 = vmul.f32 %v238, %v238
    %v244 = vmul.f32 %v228, %v241
    %v245 = vmul.f32 %v233, %v242
    %v246 = vmul.f32 %v238, %v243
    %v247 = vmul.f32 %v244, 0.044715
    %v248 = vmul.f32 %v245, 0.044715
    %v249 = vmul.f32 %v246, 0.044715
    %v250 = vadd.f32 %v228, %v247
    %v251 = vadd.f32 %v233, %v248
    %v252 = vadd.f32 %v238, %v249
    %v253 = vmul.f32 %v250, 0.7978846
    %v254 = vmul.f32 %v251, 0.7978846
    %v255 = vmul.f32 %v252, 0.7978846
    %v256 = vtanh.pop %v253
    %v257 = vtanh.pop %v254
    %v258 = vtanh.pop %v255
    %v259 = vadd.f32 %v256, 1.0
    %v260 = vadd.f32 %v257, 1.0
    %v261 = vadd.f32 %v258, 1.0
    %v262 = vmul.f32 %v259, 0.5
    %v263 = vmul.f32 %v260, 0.5
    %v264 = vmul.f32 %v261, 0.5
    %v265 = vmul.f32 %v228, %v262
    %v266 = vmul.f32 %v233, %v263
    %v267 = vmul.f32 %v238, %v264
    %vm268 = vcmask 519168
    %269 = vst.msk [vmem:[#allocation2] sm:$0xf] %vm268, 0.0
    %270 = vst.msk [vmem:[#allocation2 + $0x1c] sm:$0xf] %vm268, 0.0
    %vm271 = vcmask 523264
    %272 = vst.msk [vmem:[#allocation2 + $0x4] sm:$0xff] %vm271, %v265
    %273 = vst.msk [vmem:[#allocation2 + $0xc] sm:$0xff] %vm271, %v266
    %274 = vst.msk [vmem:[#allocation2 + $0x14] sm:$0xff] %vm271, %v267
    %v275 = vld [vmem:[%s9] sm:$0x1]
    %v277 = vlaneseq
    %v278 = vshrl.u32 %v277, 7
    %v279 = vsub.s32 0, %v278
    %v280 = vrot.slane %v275, %v279
    %v282 = vadd.f32 %v280, 0.0
    %v283 = vld [vmem:[#allocation2] sm:$0xff]
    %v284 = vld [vmem:[#allocation2 + $0x8] sm:$0xff]
    %v285 = vld [vmem:[#allocation2 + $0x10] sm:$0xff]
    %v286 = vld [vmem:[%s7] sm:$0xff]
    %v287 = vld [vmem:[%s7 + $0x8] sm:$0xff]
    %v288 = vld [vmem:[%s7 + $0x10] sm:$0xff]
    %v289 = vld [vmem:[%s7 + $0x18] sm:$0xff]
    %v290 = vld [vmem:[%s7 + $0x20] sm:$0xff]
    %v291 = vld [vmem:[%s7 + $0x28] sm:$0xff]
    %v292 = vld [vmem:[%s7 + $0x30] sm:$0xff]
    %v293 = vld [vmem:[%s7 + $0x38] sm:$0xff]
    %v295 = vsel %vm271, %v283, 0
    %v298 = vsel %vm271, %v284, 0
    %v301 = vsel %vm271, %v285, 0
    %303 = vmatprep.subr.mxu0 0.0
    %304 = vmatpush1.msra.mxu0 0.0
    %305 = vmatprep.subr.mxu0 0.0
    %306 = vmatpush1.msra.mxu0 0.0
    %307 = vmatprep.subr.mxu0 0.0
    %308 = vmatpush1.msra.mxu0 0.0
    %309 = vmatprep.subr.mxu0 0.0
    %310 = vmatpush1.msra.mxu0 0.0
    %311 = vmatprep.subr.mxu0 0.0
    %312 = vmatpush1.msra.mxu0 0.0
    %313 = vmatprep.subr.mxu0 0.0
    %314 = vmatpush1.msra.mxu0 0.0
    %315 = vmatprep.subr.mxu0 0.0
    %316 = vmatpush1.msra.mxu0 0.0
    %317 = vmatprep.subr.mxu0 0.0
    %318 = vmatpush1.msra.mxu0 0.0
    %319 = vmatprep.subr.mxu0 0.0
    %320 = vmatpush1.msra.mxu0 %v293
    %321 = vmatprep.subr.mxu0 0.0
    %322 = vmatpush1.msra.mxu0 %v292
    %323 = vmatprep.subr.mxu0 0.0
    %324 = vmatpush1.msra.mxu0 %v291
    %325 = vmatprep.subr.mxu0 0.0
    %326 = vmatpush1.msra.mxu0 %v290
    %327 = vmatprep.subr.mxu0 0.0
    %328 = vmatpush1.msra.mxu0 %v289
    %329 = vmatprep.subr.mxu0 0.0
    %330 = vmatpush1.msra.mxu0 %v288
    %331 = vmatprep.subr.mxu0 0.0
    %332 = vmatpush1.msra.mxu0 %v287
    %333 = vmatprep.subr.mxu0 0.0
    %334 = vmatpush1.msra.mxu0 %v286
    %335 = vmatprep.subr.mxu0 0.0
    %336 = vmatpush2.msra.mxu0 0.0
    %337 = vmatprep.subr.mxu0 0.0
    %338 = vmatpush2.msra.mxu0 0.0
    %339 = vmatprep.subr.mxu0 0.0
    %340 = vmatpush2.msra.mxu0 0.0
    %341 = vmatprep.subr.mxu0 0.0
    %342 = vmatpush2.msra.mxu0 0.0
    %343 = vmatprep.subr.mxu0 0.0
    %344 = vmatpush2.msra.mxu0 0.0
    %345 = vmatprep.subr.mxu0 0.0
    %346 = vmatpush2.msra.mxu0 0.0
    %347 = vmatprep.subr.mxu0 0.0
    %348 = vmatpush2.msra.mxu0 0.0
    %349 = vmatprep.subr.mxu0 0.0
    %350 = vmatpush2.msra.mxu0 0.0
    %351 = vmatprep.subr.mxu0 0.0
    %352 = vmatpush2.msra.mxu0 0.0
    %353 = vmatprep.subr.mxu0 0.0
    %354 = vmatpush2.msra.mxu0 0.0
    %355 = vmatprep.subr.mxu0 0.0
    %356 = vmatpush2.msra.mxu0 0.0
    %357 = vmatprep.subr.mxu0 0.0
    %358 = vmatpush2.msra.mxu0 0.0
    %359 = vmatprep.subr.mxu0 0.0
    %360 = vmatpush2.msra.mxu0 0.0
    %361 = vmatprep.subr.mxu0 0.0
    %362 = vmatpush2.msra.mxu0 0.0
    %363 = vmatprep.subr.mxu0 0.0
    %364 = vmatpush2.msra.mxu0 0.0
    %365 = vmatprep.subr.mxu0 0.0
    %366 = vmatpush2.msra.mxu0 0.0
    %367 = vmatprep.mubr.f32.mxu0 0.0
    %368 = vmatmul.mubr.f32.gmra.mxu0 %v295
    %v369 = vpop.f32.mrf.mxu0
    %v370 = vadd.f32 0.0, %v369
    %v371 = vpop.f32.mrf.mxu0
    %372 = vmatprep.mubr.f32.mxu0 0.0
    %373 = vmatmul.mubr.f32.gmra.mxu0 %v298
    %v374 = vpop.f32.mrf.mxu0
    %v375 = vadd.f32 0.0, %v374
    %v376 = vpop.f32.mrf.mxu0
    %377 = vmatprep.mubr.f32.mxu0 0.0
    %378 = vmatmul.mubr.f32.gmra.mxu0 %v301
    %v379 = vpop.f32.mrf.mxu0
    %v380 = vadd.f32 0.0, %v379
    %v381 = vpop.f32.mrf.mxu0
    %382 = vdwg.mxu0
    %v383 = vadd.f32 %v282, %v370
    %v384 = vadd.f32 %v282, %v375
    %v385 = vadd.f32 %v282, %v380
    %v386 = vld [vmem:[#allocation2 + $0x2] sm:$0xff]
    %v387 = vld [vmem:[#allocation2 + $0xa] sm:$0xff]
    %v388 = vld [vmem:[#allocation2 + $0x12] sm:$0xff]
    %s389 = scalar_lea.vmem %s7, 64
    %v390 = vld [vmem:[%s389] sm:$0xff]
    %v391 = vld [vmem:[%s389 + $0x8] sm:$0xff]
    %v392 = vld [vmem:[%s389 + $0x10] sm:$0xff]
    %v393 = vld [vmem:[%s389 + $0x18] sm:$0xff]
    %v394 = vld [vmem:[%s389 + $0x20] sm:$0xff]
    %v395 = vld [vmem:[%s389 + $0x28] sm:$0xff]
    %v396 = vld [vmem:[%s389 + $0x30] sm:$0xff]
    %v397 = vld [vmem:[%s389 + $0x38] sm:$0xff]
    %v399 = vsel %vm271, %v386, 0
    %v402 = vsel %vm271, %v387, 0
    %v405 = vsel %vm271, %v388, 0
    %407 = vmatprep.subr.mxu0 0.0
    %408 = vmatpush1.msra.mxu0 0.0
    %409 = vmatprep.subr.mxu0 0.0
    %410 = vmatpush1.msra.mxu0 0.0
    %411 = vmatprep.subr.mxu0 0.0
    %412 = vmatpush1.msra.mxu0 0.0
    %413 = vmatprep.subr.mxu0 0.0
    %414 = vmatpush1.msra.mxu0 0.0
    %415 = vmatprep.subr.mxu0 0.0
    %416 = vmatpush1.msra.mxu0 0.0
    %417 = vmatprep.subr.mxu0 0.0
    %418 = vmatpush1.msra.mxu0 0.0
    %419 = vmatprep.subr.mxu0 0.0
    %420 = vmatpush1.msra.mxu0 0.0
    %421 = vmatprep.subr.mxu0 0.0
    %422 = vmatpush1.msra.mxu0 0.0
    %423 = vmatprep.subr.mxu0 0.0
    %424 = vmatpush1.msra.mxu0 %v397
    %425 = vmatprep.subr.mxu0 0.0
    %426 = vmatpush1.msra.mxu0 %v396
    %427 = vmatprep.subr.mxu0 0.0
    %428 = vmatpush1.msra.mxu0 %v395
    %429 = vmatprep.subr.mxu0 0.0
    %430 = vmatpush1.msra.mxu0 %v394
    %431 = vmatprep.subr.mxu0 0.0
    %432 = vmatpush1.msra.mxu0 %v393
    %433 = vmatprep.subr.mxu0 0.0
    %434 = vmatpush1.msra.mxu0 %v392
    %435 = vmatprep.subr.mxu0 0.0
    %436 = vmatpush1.msra.mxu0 %v391
    %437 = vmatprep.subr.mxu0 0.0
    %438 = vmatpush1.msra.mxu0 %v390
    %439 = vmatprep.subr.mxu0 0.0
    %440 = vmatpush2.msra.mxu0 0.0
    %441 = vmatprep.subr.mxu0 0.0
    %442 = vmatpush2.msra.mxu0 0.0
    %443 = vmatprep.subr.mxu0 0.0
    %444 = vmatpush2.msra.mxu0 0.0
    %445 = vmatprep.subr.mxu0 0.0
    %446 = vmatpush2.msra.mxu0 0.0
    %447 = vmatprep.subr.mxu0 0.0
    %448 = vmatpush2.msra.mxu0 0.0
    %449 = vmatprep.subr.mxu0 0.0
    %450 = vmatpush2.msra.mxu0 0.0
    %451 = vmatprep.subr.mxu0 0.0
    %452 = vmatpush2.msra.mxu0 0.0
    %453 = vmatprep.subr.mxu0 0.0
    %454 = vmatpush2.msra.mxu0 0.0
    %455 = vmatprep.subr.mxu0 0.0
    %456 = vmatpush2.msra.mxu0 0.0
    %457 = vmatprep.subr.mxu0 0.0
    %458 = vmatpush2.msra.mxu0 0.0
    %459 = vmatprep.subr.mxu0 0.0
    %460 = vmatpush2.msra.mxu0 0.0
    %461 = vmatprep.subr.mxu0 0.0
    %462 = vmatpush2.msra.mxu0 0.0
    %463 = vmatprep.subr.mxu0 0.0
    %464 = vmatpush2.msra.mxu0 0.0
    %465 = vmatprep.subr.mxu0 0.0
    %466 = vmatpush2.msra.mxu0 0.0
    %467 = vmatprep.subr.mxu0 0.0
    %468 = vmatpush2.msra.mxu0 0.0
    %469 = vmatprep.subr.mxu0 0.0
    %470 = vmatpush2.msra.mxu0 0.0
    %471 = vmatprep.mubr.f32.mxu0 0.0
    %472 = vmatmul.mubr.f32.gmra.mxu0 %v399
    %v473 = vpop.f32.mrf.mxu0
    %v474 = vadd.f32 0.0, %v473
    %v475 = vpop.f32.mrf.mxu0
    %476 = vmatprep.mubr.f32.mxu0 0.0
    %477 = vmatmul.mubr.f32.gmra.mxu0 %v402
    %v478 = vpop.f32.mrf.mxu0
    %v479 = vadd.f32 0.0, %v478
    %v480 = vpop.f32.mrf.mxu0
    %481 = vmatprep.mubr.f32.mxu0 0.0
    %482 = vmatmul.mubr.f32.gmra.mxu0 %v405
    %v483 = vpop.f32.mrf.mxu0
    %v484 = vadd.f32 0.0, %v483
    %v485 = vpop.f32.mrf.mxu0
    %486 = vdwg.mxu0
    %v487 = vadd.f32 %v383, %v474
    %v488 = vadd.f32 %v384, %v479
    %v489 = vadd.f32 %v385, %v484
    %v490 = vld [vmem:[#allocation2 + $0x4] sm:$0xff]
    %v491 = vld [vmem:[#allocation2 + $0xc] sm:$0xff]
    %v492 = vld [vmem:[#allocation2 + $0x14] sm:$0xff]
    %s493 = scalar_lea.vmem %s7, 128
    %v494 = vld [vmem:[%s493] sm:$0xff]
    %v495 = vld [vmem:[%s493 + $0x8] sm:$0xff]
    %v496 = vld [vmem:[%s493 + $0x10] sm:$0xff]
    %v497 = vld [vmem:[%s493 + $0x18] sm:$0xff]
    %v498 = vld [vmem:[%s493 + $0x20] sm:$0xff]
    %v499 = vld [vmem:[%s493 + $0x28] sm:$0xff]
    %v500 = vld [vmem:[%s493 + $0x30] sm:$0xff]
    %v501 = vld [vmem:[%s493 + $0x38] sm:$0xff]
    %v503 = vsel %vm271, %v490, 0
    %v506 = vsel %vm271, %v491, 0
    %v509 = vsel %vm271, %v492, 0
    %511 = vmatprep.subr.mxu0 0.0
    %512 = vmatpush1.msra.mxu0 0.0
    %513 = vmatprep.subr.mxu0 0.0
    %514 = vmatpush1.msra.mxu0 0.0
    %515 = vmatprep.subr.mxu0 0.0
    %516 = vmatpush1.msra.mxu0 0.0
    %517 = vmatprep.subr.mxu0 0.0
    %518 = vmatpush1.msra.mxu0 0.0
    %519 = vmatprep.subr.mxu0 0.0
    %520 = vmatpush1.msra.mxu0 0.0
    %521 = vmatprep.subr.mxu0 0.0
    %522 = vmatpush1.msra.mxu0 0.0
    %523 = vmatprep.subr.mxu0 0.0
    %524 = vmatpush1.msra.mxu0 0.0
    %525 = vmatprep.subr.mxu0 0.0
    %526 = vmatpush1.msra.mxu0 0.0
    %527 = vmatprep.subr.mxu0 0.0
    %528 = vmatpush1.msra.mxu0 %v501
    %529 = vmatprep.subr.mxu0 0.0
    %530 = vmatpush1.msra.mxu0 %v500
    %531 = vmatprep.subr.mxu0 0.0
    %532 = vmatpush1.msra.mxu0 %v499
    %533 = vmatprep.subr.mxu0 0.0
    %534 = vmatpush1.msra.mxu0 %v498
    %535 = vmatprep.subr.mxu0 0.0
    %536 = vmatpush1.msra.mxu0 %v497
    %537 = vmatprep.subr.mxu0 0.0
    %538 = vmatpush1.msra.mxu0 %v496
    %539 = vmatprep.subr.mxu0 0.0
    %540 = vmatpush1.msra.mxu0 %v495
    %541 = vmatprep.subr.mxu0 0.0
    %542 = vmatpush1.msra.mxu0 %v494
    %543 = vmatprep.subr.mxu0 0.0
    %544 = vmatpush2.msra.mxu0 0.0
    %545 = vmatprep.subr.mxu0 0.0
    %546 = vmatpush2.msra.mxu0 0.0
    %547 = vmatprep.subr.mxu0 0.0
    %548 = vmatpush2.msra.mxu0 0.0
    %549 = vmatprep.subr.mxu0 0.0
    %550 = vmatpush2.msra.mxu0 0.0
    %551 = vmatprep.subr.mxu0 0.0
    %552 = vmatpush2.msra.mxu0 0.0
    %553 = vmatprep.subr.mxu0 0.0
    %554 = vmatpush2.msra.mxu0 0.0
    %555 = vmatprep.subr.mxu0 0.0
    %556 = vmatpush2.msra.mxu0 0.0
    %557 = vmatprep.subr.mxu0 0.0
    %558 = vmatpush2.msra.mxu0 0.0
    %559 = vmatprep.subr.mxu0 0.0
    %560 = vmatpush2.msra.mxu0 0.0
    %561 = vmatprep.subr.mxu0 0.0
    %562 = vmatpush2.msra.mxu0 0.0
    %563 = vmatprep.subr.mxu0 0.0
    %564 = vmatpush2.msra.mxu0 0.0
    %565 = vmatprep.subr.mxu0 0.0
    %566 = vmatpush2.msra.mxu0 0.0
    %567 = vmatprep.subr.mxu0 0.0
    %568 = vmatpush2.msra.mxu0 0.0
    %569 = vmatprep.subr.mxu0 0.0
    %570 = vmatpush2.msra.mxu0 0.0
    %571 = vmatprep.subr.mxu0 0.0
    %572 = vmatpush2.msra.mxu0 0.0
    %573 = vmatprep.subr.mxu0 0.0
    %574 = vmatpush2.msra.mxu0 0.0
    %575 = vmatprep.mubr.f32.mxu0 0.0
    %576 = vmatmul.mubr.f32.gmra.mxu0 %v503
    %v577 = vpop.f32.mrf.mxu0
    %v578 = vadd.f32 0.0, %v577
    %v579 = vpop.f32.mrf.mxu0
    %580 = vmatprep.mubr.f32.mxu0 0.0
    %581 = vmatmul.mubr.f32.gmra.mxu0 %v506
    %v582 = vpop.f32.mrf.mxu0
    %v583 = vadd.f32 0.0, %v582
    %v584 = vpop.f32.mrf.mxu0
    %585 = vmatprep.mubr.f32.mxu0 0.0
    %586 = vmatmul.mubr.f32.gmra.mxu0 %v509
    %v587 = vpop.f32.mrf.mxu0
    %v588 = vadd.f32 0.0, %v587
    %v589 = vpop.f32.mrf.mxu0
    %590 = vdwg.mxu0
    %v591 = vadd.f32 %v487, %v578
    %v592 = vadd.f32 %v488, %v583
    %v593 = vadd.f32 %v489, %v588
    %v594 = vld [vmem:[#allocation2 + $0x6] sm:$0xff]
    %v595 = vld [vmem:[#allocation2 + $0xe] sm:$0xff]
    %v596 = vld [vmem:[#allocation2 + $0x16] sm:$0xff]
    %s597 = scalar_lea.vmem %s7, 192
    %v598 = vld [vmem:[%s597] sm:$0xff]
    %v599 = vld [vmem:[%s597 + $0x8] sm:$0xff]
    %v600 = vld [vmem:[%s597 + $0x10] sm:$0xff]
    %v601 = vld [vmem:[%s597 + $0x18] sm:$0xff]
    %v602 = vld [vmem:[%s597 + $0x20] sm:$0xff]
    %v603 = vld [vmem:[%s597 + $0x28] sm:$0xff]
    %v604 = vld [vmem:[%s597 + $0x30] sm:$0xff]
    %v605 = vld [vmem:[%s597 + $0x38] sm:$0xff]
    %v607 = vsel %vm271, %v594, 0
    %v610 = vsel %vm271, %v595, 0
    %v613 = vsel %vm271, %v596, 0
    %615 = vmatprep.subr.mxu0 0.0
    %616 = vmatpush1.msra.mxu0 0.0
    %617 = vmatprep.subr.mxu0 0.0
    %618 = vmatpush1.msra.mxu0 0.0
    %619 = vmatprep.subr.mxu0 0.0
    %620 = vmatpush1.msra.mxu0 0.0
    %621 = vmatprep.subr.mxu0 0.0
    %622 = vmatpush1.msra.mxu0 0.0
    %623 = vmatprep.subr.mxu0 0.0
    %624 = vmatpush1.msra.mxu0 0.0
    %625 = vmatprep.subr.mxu0 0.0
    %626 = vmatpush1.msra.mxu0 0.0
    %627 = vmatprep.subr.mxu0 0.0
    %628 = vmatpush1.msra.mxu0 0.0
    %629 = vmatprep.subr.mxu0 0.0
    %630 = vmatpush1.msra.mxu0 0.0
    %631 = vmatprep.subr.mxu0 0.0
    %632 = vmatpush1.msra.mxu0 %v605
    %633 = vmatprep.subr.mxu0 0.0
    %634 = vmatpush1.msra.mxu0 %v604
    %635 = vmatprep.subr.mxu0 0.0
    %636 = vmatpush1.msra.mxu0 %v603
    %637 = vmatprep.subr.mxu0 0.0
    %638 = vmatpush1.msra.mxu0 %v602
    %639 = vmatprep.subr.mxu0 0.0
    %640 = vmatpush1.msra.mxu0 %v601
    %641 = vmatprep.subr.mxu0 0.0
    %642 = vmatpush1.msra.mxu0 %v600
    %643 = vmatprep.subr.mxu0 0.0
    %644 = vmatpush1.msra.mxu0 %v599
    %645 = vmatprep.subr.mxu0 0.0
    %646 = vmatpush1.msra.mxu0 %v598
    %647 = vmatprep.subr.mxu0 0.0
    %648 = vmatpush2.msra.mxu0 0.0
    %649 = vmatprep.subr.mxu0 0.0
    %650 = vmatpush2.msra.mxu0 0.0
    %651 = vmatprep.subr.mxu0 0.0
    %652 = vmatpush2.msra.mxu0 0.0
    %653 = vmatprep.subr.mxu0 0.0
    %654 = vmatpush2.msra.mxu0 0.0
    %655 = vmatprep.subr.mxu0 0.0
    %656 = vmatpush2.msra.mxu0 0.0
    %657 = vmatprep.subr.mxu0 0.0
    %658 = vmatpush2.msra.mxu0 0.0
    %659 = vmatprep.subr.mxu0 0.0
    %660 = vmatpush2.msra.mxu0 0.0
    %661 = vmatprep.subr.mxu0 0.0
    %662 = vmatpush2.msra.mxu0 0.0
    %663 = vmatprep.subr.mxu0 0.0
    %664 = vmatpush2.msra.mxu0 0.0
    %665 = vmatprep.subr.mxu0 0.0
    %666 = vmatpush2.msra.mxu0 0.0
    %667 = vmatprep.subr.mxu0 0.0
    %668 = vmatpush2.msra.mxu0 0.0
    %669 = vmatprep.subr.mxu0 0.0
    %670 = vmatpush2.msra.mxu0 0.0
    %671 = vmatprep.subr.mxu0 0.0
    %672 = vmatpush2.msra.mxu0 0.0
    %673 = vmatprep.subr.mxu0 0.0
    %674 = vmatpush2.msra.mxu0 0.0
    %675 = vmatprep.subr.mxu0 0.0
    %676 = vmatpush2.msra.mxu0 0.0
    %677 = vmatprep.subr.mxu0 0.0
    %678 = vmatpush2.msra.mxu0 0.0
    %679 = vmatprep.mubr.f32.mxu0 0.0
    %680 = vmatmul.mubr.f32.gmra.mxu0 %v607
    %v681 = vpop.f32.mrf.mxu0
    %v682 = vadd.f32 0.0, %v681
    %v683 = vpop.f32.mrf.mxu0
    %684 = vmatprep.mubr.f32.mxu0 0.0
    %685 = vmatmul.mubr.f32.gmra.mxu0 %v610
    %v686 = vpop.f32.mrf.mxu0
    %v687 = vadd.f32 0.0, %v686
    %v688 = vpop.f32.mrf.mxu0
    %689 = vmatprep.mubr.f32.mxu0 0.0
    %690 = vmatmul.mubr.f32.gmra.mxu0 %v613
    %v691 = vpop.f32.mrf.mxu0
    %v692 = vadd.f32 0.0, %v691
    %v693 = vpop.f32.mrf.mxu0
    %694 = vdwg.mxu0
    %v695 = vadd.f32 %v591, %v682
    %v696 = vadd.f32 %v592, %v687
    %v697 = vadd.f32 %v593, %v692
    %v698 = vld [vmem:[#allocation2 + $0x8] sm:$0xff]
    %v699 = vld [vmem:[#allocation2 + $0x10] sm:$0xff]
    %v700 = vld [vmem:[#allocation2 + $0x18] sm:$0xff]
    %s701 = scalar_lea.vmem %s7, 256
    %v702 = vld [vmem:[%s701] sm:$0xff]
    %v703 = vld [vmem:[%s701 + $0x8] sm:$0xff]
    %v704 = vld [vmem:[%s701 + $0x10] sm:$0xff]
    %v705 = vld [vmem:[%s701 + $0x18] sm:$0xff]
    %v706 = vld [vmem:[%s701 + $0x20] sm:$0xff]
    %v707 = vld [vmem:[%s701 + $0x28] sm:$0xff]
    %v708 = vld [vmem:[%s701 + $0x30] sm:$0xff]
    %v709 = vld [vmem:[%s701 + $0x38] sm:$0xff]
    %v711 = vsel %vm271, %v698, 0
    %v714 = vsel %vm271, %v699, 0
    %v717 = vsel %vm271, %v700, 0
    %719 = vmatprep.subr.mxu0 0.0
    %720 = vmatpush1.msra.mxu0 0.0
    %721 = vmatprep.subr.mxu0 0.0
    %722 = vmatpush1.msra.mxu0 0.0
    %723 = vmatprep.subr.mxu0 0.0
    %724 = vmatpush1.msra.mxu0 0.0
    %725 = vmatprep.subr.mxu0 0.0
    %726 = vmatpush1.msra.mxu0 0.0
    %727 = vmatprep.subr.mxu0 0.0
    %728 = vmatpush1.msra.mxu0 0.0
    %729 = vmatprep.subr.mxu0 0.0
    %730 = vmatpush1.msra.mxu0 0.0
    %731 = vmatprep.subr.mxu0 0.0
    %732 = vmatpush1.msra.mxu0 0.0
    %733 = vmatprep.subr.mxu0 0.0
    %734 = vmatpush1.msra.mxu0 0.0
    %735 = vmatprep.subr.mxu0 0.0
    %736 = vmatpush1.msra.mxu0 %v709
    %737 = vmatprep.subr.mxu0 0.0
    %738 = vmatpush1.msra.mxu0 %v708
    %739 = vmatprep.subr.mxu0 0.0
    %740 = vmatpush1.msra.mxu0 %v707
    %741 = vmatprep.subr.mxu0 0.0
    %742 = vmatpush1.msra.mxu0 %v706
    %743 = vmatprep.subr.mxu0 0.0
    %744 = vmatpush1.msra.mxu0 %v705
    %745 = vmatprep.subr.mxu0 0.0
    %746 = vmatpush1.msra.mxu0 %v704
    %747 = vmatprep.subr.mxu0 0.0
    %748 = vmatpush1.msra.mxu0 %v703
    %749 = vmatprep.subr.mxu0 0.0
    %750 = vmatpush1.msra.mxu0 %v702
    %751 = vmatprep.subr.mxu0 0.0
    %752 = vmatpush2.msra.mxu0 0.0
    %753 = vmatprep.subr.mxu0 0.0
    %754 = vmatpush2.msra.mxu0 0.0
    %755 = vmatprep.subr.mxu0 0.0
    %756 = vmatpush2.msra.mxu0 0.0
    %757 = vmatprep.subr.mxu0 0.0
    %758 = vmatpush2.msra.mxu0 0.0
    %759 = vmatprep.subr.mxu0 0.0
    %760 = vmatpush2.msra.mxu0 0.0
    %761 = vmatprep.subr.mxu0 0.0
    %762 = vmatpush2.msra.mxu0 0.0
    %763 = vmatprep.subr.mxu0 0.0
    %764 = vmatpush2.msra.mxu0 0.0
    %765 = vmatprep.subr.mxu0 0.0
    %766 = vmatpush2.msra.mxu0 0.0
    %767 = vmatprep.subr.mxu0 0.0
    %768 = vmatpush2.msra.mxu0 0.0
    %769 = vmatprep.subr.mxu0 0.0
    %770 = vmatpush2.msra.mxu0 0.0
    %771 = vmatprep.subr.mxu0 0.0
    %772 = vmatpush2.msra.mxu0 0.0
    %773 = vmatprep.subr.mxu0 0.0
    %774 = vmatpush2.msra.mxu0 0.0
    %775 = vmatprep.subr.mxu0 0.0
    %776 = vmatpush2.msra.mxu0 0.0
    %777 = vmatprep.subr.mxu0 0.0
    %778 = vmatpush2.msra.mxu0 0.0
    %779 = vmatprep.subr.mxu0 0.0
    %780 = vmatpush2.msra.mxu0 0.0
    %781 = vmatprep.subr.mxu0 0.0
    %782 = vmatpush2.msra.mxu0 0.0
    %783 = vmatprep.mubr.f32.mxu0 0.0
    %784 = vmatmul.mubr.f32.gmra.mxu0 %v711
    %v785 = vpop.f32.mrf.mxu0
    %v786 = vadd.f32 0.0, %v785
    %v787 = vpop.f32.mrf.mxu0
    %788 = vmatprep.mubr.f32.mxu0 0.0
    %789 = vmatmul.mubr.f32.gmra.mxu0 %v714
    %v790 = vpop.f32.mrf.mxu0
    %v791 = vadd.f32 0.0, %v790
    %v792 = vpop.f32.mrf.mxu0
    %793 = vmatprep.mubr.f32.mxu0 0.0
    %794 = vmatmul.mubr.f32.gmra.mxu0 %v717
    %v795 = vpop.f32.mrf.mxu0
    %v796 = vadd.f32 0.0, %v795
    %v797 = vpop.f32.mrf.mxu0
    %798 = vdwg.mxu0
    %v799 = vadd.f32 %v695, %v786
    %v800 = vadd.f32 %v696, %v791
    %v801 = vadd.f32 %v697, %v796
    %v802 = vld [vmem:[%s11] sm:$0xff]
    %v803 = vld [vmem:[%s11 + $0x8] sm:$0xff]
    %v804 = vld [vmem:[%s11 + $0x10] sm:$0xff]
    %v805 = vld [vmem:[%s13] sm:$0xff]
    %v806 = vld [vmem:[%s13 + $0x8] sm:$0xff]
    %v807 = vld [vmem:[%s13 + $0x10] sm:$0xff]
    %v808 = vld [vmem:[%s13 + $0x18] sm:$0xff]
    %v809 = vld [vmem:[%s15] sm:$0x1]
    %v811 = vlaneseq
    %v812 = vshrl.u32 %v811, 7
    %v813 = vsub.s32 0, %v812
    %v814 = vrot.slane %v809, %v813
    %vm816 = vcmask 261120
    %v818 = vsel %vm816, %v802, 0
    %v821 = vsel %vm816, %v803, 0
    %v824 = vsel %vm816, %v804, 0
    %826 = vmatprep.subr.mxu0 0.0
    %827 = vmatpush1.msra.mxu0 0.0
    %828 = vmatprep.subr.mxu0 0.0
    %829 = vmatpush1.msra.mxu0 0.0
    %830 = vmatprep.subr.mxu0 0.0
    %831 = vmatpush1.msra.mxu0 0.0
    %832 = vmatprep.subr.mxu0 0.0
    %833 = vmatpush1.msra.mxu0 0.0
    %834 = vmatprep.subr.mxu0 0.0
    %835 = vmatpush1.msra.mxu0 0.0
    %836 = vmatprep.subr.mxu0 0.0
    %837 = vmatpush1.msra.mxu0 0.0
    %838 = vmatprep.subr.mxu0 0.0
    %839 = vmatpush1.msra.mxu0 0.0
    %840 = vmatprep.subr.mxu0 0.0
    %841 = vmatpush1.msra.mxu0 0.0
    %842 = vmatprep.subr.mxu0 0.0
    %843 = vmatpush1.msra.mxu0 0.0
    %844 = vmatprep.subr.mxu0 0.0
    %845 = vmatpush1.msra.mxu0 0.0
    %846 = vmatprep.subr.mxu0 0.0
    %847 = vmatpush1.msra.mxu0 0.0
    %848 = vmatprep.subr.mxu0 0.0
    %849 = vmatpush1.msra.mxu0 0.0
    %850 = vmatprep.subr.mxu0 0.0
    %851 = vmatpush1.msra.mxu0 %v808
    %852 = vmatprep.subr.mxu0 0.0
    %853 = vmatpush1.msra.mxu0 %v807
    %854 = vmatprep.subr.mxu0 0.0
    %855 = vmatpush1.msra.mxu0 %v806
    %856 = vmatprep.subr.mxu0 0.0
    %857 = vmatpush1.msra.mxu0 %v805
    %858 = vmatprep.subr.mxu0 0.0
    %859 = vmatpush2.msra.mxu0 0.0
    %860 = vmatprep.subr.mxu0 0.0
    %861 = vmatpush2.msra.mxu0 0.0
    %862 = vmatprep.subr.mxu0 0.0
    %863 = vmatpush2.msra.mxu0 0.0
    %864 = vmatprep.subr.mxu0 0.0
    %865 = vmatpush2.msra.mxu0 0.0
    %866 = vmatprep.subr.mxu0 0.0
    %867 = vmatpush2.msra.mxu0 0.0
    %868 = vmatprep.subr.mxu0 0.0
    %869 = vmatpush2.msra.mxu0 0.0
    %870 = vmatprep.subr.mxu0 0.0
    %871 = vmatpush2.msra.mxu0 0.0
    %872 = vmatprep.subr.mxu0 0.0
    %873 = vmatpush2.msra.mxu0 0.0
    %874 = vmatprep.subr.mxu0 0.0
    %875 = vmatpush2.msra.mxu0 0.0
    %876 = vmatprep.subr.mxu0 0.0
    %877 = vmatpush2.msra.mxu0 0.0
    %878 = vmatprep.subr.mxu0 0.0
    %879 = vmatpush2.msra.mxu0 0.0
    %880 = vmatprep.subr.mxu0 0.0
    %881 = vmatpush2.msra.mxu0 0.0
    %882 = vmatprep.subr.mxu0 0.0
    %883 = vmatpush2.msra.mxu0 0.0
    %884 = vmatprep.subr.mxu0 0.0
    %885 = vmatpush2.msra.mxu0 0.0
    %886 = vmatprep.subr.mxu0 0.0
    %887 = vmatpush2.msra.mxu0 0.0
    %888 = vmatprep.subr.mxu0 0.0
    %889 = vmatpush2.msra.mxu0 0.0
    %890 = vmatprep.mubr.f32.mxu0 0.0
    %891 = vmatmul.mubr.f32.gmra.mxu0 %v818
    %v892 = vpop.f32.mrf.mxu0
    %v893 = vadd.f32 %v814, %v892
    %v894 = vpop.f32.mrf.mxu0
    %895 = vmatprep.mubr.f32.mxu0 0.0
    %896 = vmatmul.mubr.f32.gmra.mxu0 %v821
    %v897 = vpop.f32.mrf.mxu0
    %v898 = vadd.f32 %v814, %v897
    %v899 = vpop.f32.mrf.mxu0
    %900 = vmatprep.mubr.f32.mxu0 0.0
    %901 = vmatmul.mubr.f32.gmra.mxu0 %v824
    %v902 = vpop.f32.mrf.mxu0
    %v903 = vadd.f32 %v814, %v902
    %v904 = vpop.f32.mrf.mxu0
    %905 = vdwg.mxu0
    %v906 = vld [vmem:[%s19] sm:$0xff]
    %v907 = vld [vmem:[%s19 + $0x8] sm:$0xff]
    %v908 = vld [vmem:[%s19 + $0x10] sm:$0xff]
    %v909 = vld [vmem:[%s21] sm:$0xff]
    %v910 = vld [vmem:[%s21 + $0x8] sm:$0xff]
    %v911 = vld [vmem:[%s21 + $0x10] sm:$0xff]
    %v912 = vld [vmem:[%s21 + $0x18] sm:$0xff]
    %v913 = vld [vmem:[%s23] sm:$0x1]
    %v915 = vlaneseq
    %v916 = vshrl.u32 %v915, 7
    %v917 = vsub.s32 0, %v916
    %v918 = vrot.slane %v913, %v917
    %v921 = vsel %vm816, %v906, 0
    %v924 = vsel %vm816, %v907, 0
    %v927 = vsel %vm816, %v908, 0
    %929 = vmatprep.subr.mxu0 0.0
    %930 = vmatpush1.msra.mxu0 0.0
    %931 = vmatprep.subr.mxu0 0.0
    %932 = vmatpush1.msra.mxu0 0.0
    %933 = vmatprep.subr.mxu0 0.0
    %934 = vmatpush1.msra.mxu0 0.0
    %935 = vmatprep.subr.mxu0 0.0
    %936 = vmatpush1.msra.mxu0 0.0
    %937 = vmatprep.subr.mxu0 0.0
    %938 = vmatpush1.msra.mxu0 0.0
    %939 = vmatprep.subr.mxu0 0.0
    %940 = vmatpush1.msra.mxu0 0.0
    %941 = vmatprep.subr.mxu0 0.0
    %942 = vmatpush1.msra.mxu0 0.0
    %943 = vmatprep.subr.mxu0 0.0
    %944 = vmatpush1.msra.mxu0 0.0
    %945 = vmatprep.subr.mxu0 0.0
    %946 = vmatpush1.msra.mxu0 0.0
    %947 = vmatprep.subr.mxu0 0.0
    %948 = vmatpush1.msra.mxu0 0.0
    %949 = vmatprep.subr.mxu0 0.0
    %950 = vmatpush1.msra.mxu0 0.0
    %951 = vmatprep.subr.mxu0 0.0
    %952 = vmatpush1.msra.mxu0 0.0
    %953 = vmatprep.subr.mxu0 0.0
    %954 = vmatpush1.msra.mxu0 %v912
    %955 = vmatprep.subr.mxu0 0.0
    %956 = vmatpush1.msra.mxu0 %v911
    %957 = vmatprep.subr.mxu0 0.0
    %958 = vmatpush1.msra.mxu0 %v910
    %959 = vmatprep.subr.mxu0 0.0
    %960 = vmatpush1.msra.mxu0 %v909
    %961 = vmatprep.subr.mxu0 0.0
    %962 = vmatpush2.msra.mxu0 0.0
    %963 = vmatprep.subr.mxu0 0.0
    %964 = vmatpush2.msra.mxu0 0.0
    %965 = vmatprep.subr.mxu0 0.0
    %966 = vmatpush2.msra.mxu0 0.0
    %967 = vmatprep.subr.mxu0 0.0
    %968 = vmatpush2.msra.mxu0 0.0
    %969 = vmatprep.subr.mxu0 0.0
    %970 = vmatpush2.msra.mxu0 0.0
    %971 = vmatprep.subr.mxu0 0.0
    %972 = vmatpush2.msra.mxu0 0.0
    %973 = vmatprep.subr.mxu0 0.0
    %974 = vmatpush2.msra.mxu0 0.0
    %975 = vmatprep.subr.mxu0 0.0
    %976 = vmatpush2.msra.mxu0 0.0
    %977 = vmatprep.subr.mxu0 0.0
    %978 = vmatpush2.msra.mxu0 0.0
    %979 = vmatprep.subr.mxu0 0.0
    %980 = vmatpush2.msra.mxu0 0.0
    %981 = vmatprep.subr.mxu0 0.0
    %982 = vmatpush2.msra.mxu0 0.0
    %983 = vmatprep.subr.mxu0 0.0
    %984 = vmatpush2.msra.mxu0 0.0
    %985 = vmatprep.subr.mxu0 0.0
    %986 = vmatpush2.msra.mxu0 0.0
    %987 = vmatprep.subr.mxu0 0.0
    %988 = vmatpush2.msra.mxu0 0.0
    %989 = vmatprep.subr.mxu0 0.0
    %990 = vmatpush2.msra.mxu0 0.0
    %991 = vmatprep.subr.mxu0 0.0
    %992 = vmatpush2.msra.mxu0 0.0
    %993 = vmatprep.mubr.f32.mxu0 0.0
    %994 = vmatmul.mubr.f32.gmra.mxu0 %v921
    %v995 = vpop.f32.mrf.mxu0
    %v996 = vadd.f32 %v918, %v995
    %v997 = vpop.f32.mrf.mxu0
    %998 = vmatprep.mubr.f32.mxu0 0.0
    %999 = vmatmul.mubr.f32.gmra.mxu0 %v924
    %v1000 = vpop.f32.mrf.mxu0
    %v1001 = vadd.f32 %v918, %v1000
    %v1002 = vpop.f32.mrf.mxu0
    %1003 = vmatprep.mubr.f32.mxu0 0.0
    %1004 = vmatmul.mubr.f32.gmra.mxu0 %v927
    %v1005 = vpop.f32.mrf.mxu0
    %v1006 = vadd.f32 %v918, %v1005
    %v1007 = vpop.f32.mrf.mxu0
    %1008 = vdwg.mxu0
    %v1009 = vxor.u32 %v996, 2147483648
    %v1010 = vxor.u32 %v1001, 2147483648
    %v1011 = vxor.u32 %v1006, 2147483648
    %v1012 = vmul.f32 %v1009, 1.442695
    %v1013 = vpow.pop %v1012
    %v1014 = vmul.f32 %v1010, 1.442695
    %v1015 = vpow.pop %v1014
    %v1016 = vmul.f32 %v1011, 1.442695
    %v1017 = vpow.pop %v1016
    %v1018 = vadd.f32 %v1013, 1.0
    %v1019 = vadd.f32 %v1015, 1.0
    %v1020 = vadd.f32 %v1017, 1.0
    %v1021 = vrcp.pop %v1018
    %v1022 = vmul.f32 1.0, %v1021
    %v1023 = vrcp.pop %v1019
    %v1024 = vmul.f32 1.0, %v1023
    %v1025 = vrcp.pop %v1020
    %v1026 = vmul.f32 1.0, %v1025
    %1030 = vrot.lane.b32.xlu0 %v1022, 96
    %v1031 = vpop.permute.xlu0 %1030
    %1032 = vrot.lane.b32.xlu0 %v1024, 96
    %v1033 = vpop.permute.xlu0 %1032
    %1034 = vrot.lane.b32.xlu0 %v1026, 96
    %v1035 = vpop.permute.xlu0 %1034
    %v1039 = vmul.f32 %v996, %v1031
    %v1040 = vmul.f32 %v1001, %v1033
    %v1041 = vmul.f32 %v1006, %v1035
    %v1042 = vld [vmem:[%s17] sm:$0xff]
    %v1043 = vld [vmem:[%s17 + $0x8] sm:$0xff]
    %v1044 = vld [vmem:[%s17 + $0x10] sm:$0xff]
    %v1045 = vadd.f32 %v893, %v1042
    %v1046 = vadd.f32 %v898, %v1043
    %v1047 = vadd.f32 %v903, %v1044
    %v1048 = vadd.f32 %v1045, %v799
    %v1049 = vadd.f32 %v1046, %v800
    %v1050 = vadd.f32 %v1047, %v801
    %v1051 = vadd.f32 %v1048, %v1039
    %v1052 = vadd.f32 %v1049, %v1040
    %v1053 = vadd.f32 %v1050, %v1041
    %v1054 = vld [vmem:[%s25] sm:$0x1]
    %v1055 = vld [vmem:[%s27] sm:$0x1]
    %v1056 = vsel %vm816, %v1051, 0.0
    %1057 = vadd.xlane.f32.xlu0 %v1056
    %v1058 = vpop.xlane.xlu0 %1057
    %v1059 = vsel %vm816, %v1052, 0.0
    %1060 = vadd.xlane.f32.xlu0 %v1059
    %v1061 = vpop.xlane.xlu0 %1060
    %v1062 = vsel %vm816, %v1053, 0.0
    %1063 = vadd.xlane.f32.xlu0 %v1062
    %v1064 = vpop.xlane.xlu0 %1063
    %v1065 = vrcp.pop 32.0
    %v1066 = vmul.f32 %v1058, %v1065
    %v1067 = vmul.f32 %v1061, %v1065
    %v1068 = vmul.f32 %v1064, %v1065
    %v1069 = vsub.f32 %v1051, %v1066
    %v1070 = vsub.f32 %v1052, %v1067
    %v1071 = vsub.f32 %v1053, %v1068
    %v1072 = vmul.f32 %v1069, %v1069
    %v1073 = vmul.f32 %v1070, %v1070
    %v1074 = vmul.f32 %v1071, %v1071
    %v1075 = vsel %vm816, %v1072, 0.0
    %1076 = vadd.xlane.f32.xlu0 %v1075
    %v1077 = vpop.xlane.xlu0 %1076
    %v1078 = vsel %vm816, %v1073, 0.0
    %1079 = vadd.xlane.f32.xlu0 %v1078
    %v1080 = vpop.xlane.xlu0 %1079
    %v1081 = vsel %vm816, %v1074, 0.0
    %1082 = vadd.xlane.f32.xlu0 %v1081
    %v1083 = vpop.xlane.xlu0 %1082
    %v1084 = vmul.f32 %v1077, %v1065
    %v1085 = vmul.f32 %v1080, %v1065
    %v1086 = vmul.f32 %v1083, %v1065
    %v1087 = vadd.f32 %v1084, 1e-05
    %v1088 = vadd.f32 %v1085, 1e-05
    %v1089 = vadd.f32 %v1086, 1e-05
    %v1090 = vrsqrt.pop %v1087
    %v1091 = vrsqrt.pop %v1088
    %v1092 = vrsqrt.pop %v1089
    %v1093 = vmul.f32 %v1069, %v1090
    %v1094 = vmul.f32 %v1070, %v1091
    %v1095 = vmul.f32 %v1071, %v1092
    %v1097 = vlaneseq
    %v1098 = vshrl.u32 %v1097, 7
    %v1099 = vsub.s32 0, %v1098
    %v1100 = vrot.slane %v1054, %v1099
    %v1102 = vmul.f32 %v1093, %v1100
    %v1103 = vmul.f32 %v1094, %v1100
    %v1104 = vmul.f32 %v1095, %v1100
    %v1106 = vlaneseq
    %v1107 = vshrl.u32 %v1106, 7
    %v1108 = vsub.s32 0, %v1107
    %v1109 = vrot.slane %v1055, %v1108
    %v1111 = vadd.f32 %v1102, %v1109
    %v1112 = vadd.f32 %v1103, %v1109
    %v1113 = vadd.f32 %v1104, %v1109
    %v1114 = vld [vmem:[%s29] sm:$0xff]
    %v1115 = vld [vmem:[%s29 + $0x8] sm:$0xff]
    %v1116 = vld [vmem:[%s29 + $0x10] sm:$0xff]
    %v1117 = vld [vmem:[%s31] sm:$0xff]
    %v1118 = vld [vmem:[%s31 + $0x8] sm:$0xff]
    %v1119 = vld [vmem:[%s31 + $0x10] sm:$0xff]
    %v1120 = vld [vmem:[%s33] sm:$0x1]
    %v1121 = vld [vmem:[%s35] sm:$0x1]
    %v1122 = vsel %vm816, %v1111, 0.0
    %1123 = vadd.xlane.f32.xlu0 %v1122
    %v1124 = vpop.xlane.xlu0 %1123
    %v1125 = vsel %vm816, %v1112, 0.0
    %1126 = vadd.xlane.f32.xlu0 %v1125
    %v1127 = vpop.xlane.xlu0 %1126
    %v1128 = vsel %vm816, %v1113, 0.0
    %1129 = vadd.xlane.f32.xlu0 %v1128
    %v1130 = vpop.xlane.xlu0 %1129
    %v1131 = vmul.f32 %v1124, %v1065
    %v1132 = vmul.f32 %v1127, %v1065
    %v1133 = vmul.f32 %v1130, %v1065
    %v1134 = vsub.f32 %v1111, %v1131
    %v1135 = vsub.f32 %v1112, %v1132
    %v1136 = vsub.f32 %v1113, %v1133
    %v1137 = vmul.f32 %v1134, %v1134
    %v1138 = vmul.f32 %v1135, %v1135
    %v1139 = vmul.f32 %v1136, %v1136
    %v1140 = vsel %vm816, %v1137, 0.0
    %1141 = vadd.xlane.f32.xlu0 %v1140
    %v1142 = vpop.xlane.xlu0 %1141
    %v1143 = vsel %vm816, %v1138, 0.0
    %1144 = vadd.xlane.f32.xlu0 %v1143
    %v1145 = vpop.xlane.xlu0 %1144
    %v1146 = vsel %vm816, %v1139, 0.0
    %1147 = vadd.xlane.f32.xlu0 %v1146
    %v1148 = vpop.xlane.xlu0 %1147
    %v1149 = vmul.f32 %v1142, %v1065
    %v1150 = vmul.f32 %v1145, %v1065
    %v1151 = vmul.f32 %v1148, %v1065
    %v1152 = vadd.f32 %v1149, 1e-05
    %v1153 = vadd.f32 %v1150, 1e-05
    %v1154 = vadd.f32 %v1151, 1e-05
    %v1155 = vrsqrt.pop %v1152
    %v1156 = vrsqrt.pop %v1153
    %v1157 = vrsqrt.pop %v1154
    %v1158 = vmul.f32 %v1134, %v1155
    %v1159 = vmul.f32 %v1135, %v1156
    %v1160 = vmul.f32 %v1136, %v1157
    %v1162 = vlaneseq
    %v1163 = vshrl.u32 %v1162, 7
    %v1164 = vsub.s32 0, %v1163
    %v1165 = vrot.slane %v1120, %v1164
    %v1167 = vmul.f32 %v1158, %v1165
    %v1168 = vmul.f32 %v1159, %v1165
    %v1169 = vmul.f32 %v1160, %v1165
    %v1171 = vlaneseq
    %v1172 = vshrl.u32 %v1171, 7
    %v1173 = vsub.s32 0, %v1172
    %v1174 = vrot.slane %v1121, %v1173
    %v1176 = vadd.f32 %v1167, %v1174
    %v1177 = vadd.f32 %v1168, %v1174
    %v1178 = vadd.f32 %v1169, %v1174
    %v1179 = vld [vmem:[%s37] sm:$0xff]
    %v1180 = vld [vmem:[%s37 + $0x8] sm:$0xff]
    %v1181 = vld [vmem:[%s37 + $0x10] sm:$0xff]
    %v1182 = vld [vmem:[%s37 + $0x18] sm:$0xff]
    %v1183 = vld [vmem:[%s39] sm:$0x1]
    %v1185 = vlaneseq
    %v1186 = vshrl.u32 %v1185, 7
    %v1187 = vsub.s32 0, %v1186
    %v1188 = vrot.slane %v1183, %v1187
    %v1191 = vsel %vm816, %v1176, 0
    %v1194 = vsel %vm816, %v1177, 0
    %v1197 = vsel %vm816, %v1178, 0
    %1199 = vmatprep.subr.mxu0 0.0
    %1200 = vmatpush1.msra.mxu0 0.0
    %1201 = vmatprep.subr.mxu0 0.0
    %1202 = vmatpush1.msra.mxu0 0.0
    %1203 = vmatprep.subr.mxu0 0.0
    %1204 = vmatpush1.msra.mxu0 0.0
    %1205 = vmatprep.subr.mxu0 0.0
    %1206 = vmatpush1.msra.mxu0 0.0
    %1207 = vmatprep.subr.mxu0 0.0
    %1208 = vmatpush1.msra.mxu0 0.0
    %1209 = vmatprep.subr.mxu0 0.0
    %1210 = vmatpush1.msra.mxu0 0.0
    %1211 = vmatprep.subr.mxu0 0.0
    %1212 = vmatpush1.msra.mxu0 0.0
    %1213 = vmatprep.subr.mxu0 0.0
    %1214 = vmatpush1.msra.mxu0 0.0
    %1215 = vmatprep.subr.mxu0 0.0
    %1216 = vmatpush1.msra.mxu0 0.0
    %1217 = vmatprep.subr.mxu0 0.0
    %1218 = vmatpush1.msra.mxu0 0.0
    %1219 = vmatprep.subr.mxu0 0.0
    %1220 = vmatpush1.msra.mxu0 0.0
    %1221 = vmatprep.subr.mxu0 0.0
    %1222 = vmatpush1.msra.mxu0 0.0
    %1223 = vmatprep.subr.mxu0 0.0
    %1224 = vmatpush1.msra.mxu0 %v1182
    %1225 = vmatprep.subr.mxu0 0.0
    %1226 = vmatpush1.msra.mxu0 %v1181
    %1227 = vmatprep.subr.mxu0 0.0
    %1228 = vmatpush1.msra.mxu0 %v1180
    %1229 = vmatprep.subr.mxu0 0.0
    %1230 = vmatpush1.msra.mxu0 %v1179
    %1231 = vmatprep.subr.mxu0 0.0
    %1232 = vmatpush2.msra.mxu0 0.0
    %1233 = vmatprep.subr.mxu0 0.0
    %1234 = vmatpush2.msra.mxu0 0.0
    %1235 = vmatprep.subr.mxu0 0.0
    %1236 = vmatpush2.msra.mxu0 0.0
    %1237 = vmatprep.subr.mxu0 0.0
    %1238 = vmatpush2.msra.mxu0 0.0
    %1239 = vmatprep.subr.mxu0 0.0
    %1240 = vmatpush2.msra.mxu0 0.0
    %1241 = vmatprep.subr.mxu0 0.0
    %1242 = vmatpush2.msra.mxu0 0.0
    %1243 = vmatprep.subr.mxu0 0.0
    %1244 = vmatpush2.msra.mxu0 0.0
    %1245 = vmatprep.subr.mxu0 0.0
    %1246 = vmatpush2.msra.mxu0 0.0
    %1247 = vmatprep.subr.mxu0 0.0
    %1248 = vmatpush2.msra.mxu0 0.0
    %1249 = vmatprep.subr.mxu0 0.0
    %1250 = vmatpush2.msra.mxu0 0.0
    %1251 = vmatprep.subr.mxu0 0.0
    %1252 = vmatpush2.msra.mxu0 0.0
    %1253 = vmatprep.subr.mxu0 0.0
    %1254 = vmatpush2.msra.mxu0 0.0
    %1255 = vmatprep.subr.mxu0 0.0
    %1256 = vmatpush2.msra.mxu0 0.0
    %1257 = vmatprep.subr.mxu0 0.0
    %1258 = vmatpush2.msra.mxu0 0.0
    %1259 = vmatprep.subr.mxu0 0.0
    %1260 = vmatpush2.msra.mxu0 0.0
    %1261 = vmatprep.subr.mxu0 0.0
    %1262 = vmatpush2.msra.mxu0 0.0
    %1263 = vmatprep.mubr.f32.mxu0 0.0
    %1264 = vmatmul.mubr.f32.gmra.mxu0 %v1191
    %v1265 = vpop.f32.mrf.mxu0
    %v1266 = vadd.f32 %v1188, %v1265
    %v1267 = vpop.f32.mrf.mxu0
    %1268 = vmatprep.mubr.f32.mxu0 0.0
    %1269 = vmatmul.mubr.f32.gmra.mxu0 %v1194
    %v1270 = vpop.f32.mrf.mxu0
    %v1271 = vadd.f32 %v1188, %v1270
    %v1272 = vpop.f32.mrf.mxu0
    %1273 = vmatprep.mubr.f32.mxu0 0.0
    %1274 = vmatmul.mubr.f32.gmra.mxu0 %v1197
    %v1275 = vpop.f32.mrf.mxu0
    %v1276 = vadd.f32 %v1188, %v1275
    %v1277 = vpop.f32.mrf.mxu0
    %1278 = vdwg.mxu0
    %v1279 = vld [vmem:[%s41] sm:$0xff]
    %v1280 = vld [vmem:[%s41 + $0x8] sm:$0xff]
    %v1281 = vld [vmem:[%s41 + $0x10] sm:$0xff]
    %v1282 = vld [vmem:[%s41 + $0x18] sm:$0xff]
    %v1283 = vld [vmem:[%s43] sm:$0x1]
    %v1285 = vlaneseq
    %v1286 = vshrl.u32 %v1285, 7
    %v1287 = vsub.s32 0, %v1286
    %v1288 = vrot.slane %v1283, %v1287
    %1290 = vmatprep.subr.mxu0 0.0
    %1291 = vmatpush1.msra.mxu0 0.0
    %1292 = vmatprep.subr.mxu0 0.0
    %1293 = vmatpush1.msra.mxu0 0.0
    %1294 = vmatprep.subr.mxu0 0.0
    %1295 = vmatpush1.msra.mxu0 0.0
    %1296 = vmatprep.subr.mxu0 0.0
    %1297 = vmatpush1.msra.mxu0 0.0
    %1298 = vmatprep.subr.mxu0 0.0
    %1299 = vmatpush1.msra.mxu0 0.0
    %1300 = vmatprep.subr.mxu0 0.0
    %1301 = vmatpush1.msra.mxu0 0.0
    %1302 = vmatprep.subr.mxu0 0.0
    %1303 = vmatpush1.msra.mxu0 0.0
    %1304 = vmatprep.subr.mxu0 0.0
    %1305 = vmatpush1.msra.mxu0 0.0
    %1306 = vmatprep.subr.mxu0 0.0
    %1307 = vmatpush1.msra.mxu0 0.0
    %1308 = vmatprep.subr.mxu0 0.0
    %1309 = vmatpush1.msra.mxu0 0.0
    %1310 = vmatprep.subr.mxu0 0.0
    %1311 = vmatpush1.msra.mxu0 0.0
    %1312 = vmatprep.subr.mxu0 0.0
    %1313 = vmatpush1.msra.mxu0 0.0
    %1314 = vmatprep.subr.mxu0 0.0
    %1315 = vmatpush1.msra.mxu0 %v1282
    %1316 = vmatprep.subr.mxu0 0.0
    %1317 = vmatpush1.msra.mxu0 %v1281
    %1318 = vmatprep.subr.mxu0 0.0
    %1319 = vmatpush1.msra.mxu0 %v1280
    %1320 = vmatprep.subr.mxu0 0.0
    %1321 = vmatpush1.msra.mxu0 %v1279
    %1322 = vmatprep.subr.mxu0 0.0
    %1323 = vmatpush2.msra.mxu0 0.0
    %1324 = vmatprep.subr.mxu0 0.0
    %1325 = vmatpush2.msra.mxu0 0.0
    %1326 = vmatprep.subr.mxu0 0.0
    %1327 = vmatpush2.msra.mxu0 0.0
    %1328 = vmatprep.subr.mxu0 0.0
    %1329 = vmatpush2.msra.mxu0 0.0
    %1330 = vmatprep.subr.mxu0 0.0
    %1331 = vmatpush2.msra.mxu0 0.0
    %1332 = vmatprep.subr.mxu0 0.0
    %1333 = vmatpush2.msra.mxu0 0.0
    %1334 = vmatprep.subr.mxu0 0.0
    %1335 = vmatpush2.msra.mxu0 0.0
    %1336 = vmatprep.subr.mxu0 0.0
    %1337 = vmatpush2.msra.mxu0 0.0
    %1338 = vmatprep.subr.mxu0 0.0
    %1339 = vmatpush2.msra.mxu0 0.0
    %1340 = vmatprep.subr.mxu0 0.0
    %1341 = vmatpush2.msra.mxu0 0.0
    %1342 = vmatprep.subr.mxu0 0.0
    %1343 = vmatpush2.msra.mxu0 0.0
    %1344 = vmatprep.subr.mxu0 0.0
    %1345 = vmatpush2.msra.mxu0 0.0
    %1346 = vmatprep.subr.mxu0 0.0
    %1347 = vmatpush2.msra.mxu0 0.0
    %1348 = vmatprep.subr.mxu0 0.0
    %1349 = vmatpush2.msra.mxu0 0.0
    %1350 = vmatprep.subr.mxu0 0.0
    %1351 = vmatpush2.msra.mxu0 0.0
    %1352 = vmatprep.subr.mxu0 0.0
    %1353 = vmatpush2.msra.mxu0 0.0
    %1354 = vmatprep.mubr.f32.mxu0 0.0
    %1355 = vmatmul.mubr.f32.gmra.mxu0 %v1191
    %v1356 = vpop.f32.mrf.mxu0
    %v1357 = vadd.f32 %v1288, %v1356
    %v1358 = vpop.f32.mrf.mxu0
    %1359 = vmatprep.mubr.f32.mxu0 0.0
    %1360 = vmatmul.mubr.f32.gmra.mxu0 %v1194
    %v1361 = vpop.f32.mrf.mxu0
    %v1362 = vadd.f32 %v1288, %v1361
    %v1363 = vpop.f32.mrf.mxu0
    %1364 = vmatprep.mubr.f32.mxu0 0.0
    %1365 = vmatmul.mubr.f32.gmra.mxu0 %v1197
    %v1366 = vpop.f32.mrf.mxu0
    %v1367 = vadd.f32 %v1288, %v1366
    %v1368 = vpop.f32.mrf.mxu0
    %1369 = vdwg.mxu0
    %v1370 = vmul.f32 %v1266, %v1114
    %v1371 = vmul.f32 %v1271, %v1115
    %v1372 = vmul.f32 %v1276, %v1116
    %v1373 = vmul.f32 %v1357, %v1117
    %v1374 = vmul.f32 %v1362, %v1118
    %v1375 = vmul.f32 %v1367, %v1119
    %v1376 = vadd.f32 %v1370, %v1373
    %v1377 = vadd.f32 %v1371, %v1374
    %v1378 = vadd.f32 %v1372, %v1375
    %v1379 = vld [vmem:[%s45] sm:$0xff]
    %v1380 = vld [vmem:[%s45 + $0x8] sm:$0xff]
    %v1381 = vld [vmem:[%s45 + $0x10] sm:$0xff]
    %v1382 = vld [vmem:[%s45 + $0x18] sm:$0xff]
    %v1383 = vld [vmem:[%s47] sm:$0x1]
    %v1385 = vlaneseq
    %v1386 = vshrl.u32 %v1385, 7
    %v1387 = vsub.s32 0, %v1386
    %v1388 = vrot.slane %v1383, %v1387
    %v1390 = vadd.f32 %v1388, 0.0
    %1394 = vrot.lane.b32.xlu0 %v1376, 96
    %v1395 = vpop.permute.xlu0 %1394
    %1396 = vrot.lane.b32.xlu0 %v1377, 96
    %v1397 = vpop.permute.xlu0 %1396
    %1398 = vrot.lane.b32.xlu0 %v1378, 96
    %v1399 = vpop.permute.xlu0 %1398
    %vm1400 = vcmask 64512
    %v1401 = vsel %vm1400, %v1376, 0
    %v1403 = vsel %vm1400, %v1377, 0
    %v1405 = vsel %vm1400, %v1378, 0
    %v1407 = vsel %vm1400, %v1395, 0
    %v1409 = vsel %vm1400, %v1397, 0
    %v1411 = vsel %vm1400, %v1399, 0
    %1413 = vmatprep.subr.mxu0 0.0
    %1414 = vmatpush1.xpose.msra.mxu0 0.0
    %1415 = vmatprep.subr.mxu0 0.0
    %1416 = vmatpush1.xpose.msra.mxu0 0.0
    %1417 = vmatprep.subr.mxu0 0.0
    %1418 = vmatpush1.xpose.msra.mxu0 0.0
    %1419 = vmatprep.subr.mxu0 0.0
    %1420 = vmatpush1.xpose.msra.mxu0 0.0
    %1421 = vmatprep.subr.mxu0 0.0
    %1422 = vmatpush1.xpose.msra.mxu0 0.0
    %1423 = vmatprep.subr.mxu0 0.0
    %1424 = vmatpush1.xpose.msra.mxu0 0.0
    %1425 = vmatprep.subr.mxu0 0.0
    %1426 = vmatpush1.xpose.msra.mxu0 0.0
    %1427 = vmatprep.subr.mxu0 0.0
    %1428 = vmatpush1.xpose.msra.mxu0 0.0
    %1429 = vmatprep.subr.mxu0 0.0
    %1430 = vmatpush1.xpose.msra.mxu0 0.0
    %1431 = vmatprep.subr.mxu0 0.0
    %1432 = vmatpush1.xpose.msra.mxu0 0.0
    %1433 = vmatprep.subr.mxu0 0.0
    %1434 = vmatpush1.xpose.msra.mxu0 0.0
    %1435 = vmatprep.subr.mxu0 0.0
    %1436 = vmatpush1.xpose.msra.mxu0 0.0
    %1437 = vmatprep.subr.mxu0 0.0
    %1438 = vmatpush1.xpose.msra.mxu0 0.0
    %1439 = vmatprep.subr.mxu0 0.0
    %1440 = vmatpush1.xpose.msra.mxu0 %v1411
    %1441 = vmatprep.subr.mxu0 0.0
    %1442 = vmatpush1.xpose.msra.mxu0 %v1409
    %1443 = vmatprep.subr.mxu0 0.0
    %1444 = vmatpush1.xpose.msra.mxu0 %v1407
    %1445 = vmatprep.subr.mxu0 0.0
    %1446 = vmatpush2.xpose.msra.mxu0 0.0
    %1447 = vmatprep.subr.mxu0 0.0
    %1448 = vmatpush2.xpose.msra.mxu0 0.0
    %1449 = vmatprep.subr.mxu0 0.0
    %1450 = vmatpush2.xpose.msra.mxu0 0.0
    %1451 = vmatprep.subr.mxu0 0.0
    %1452 = vmatpush2.xpose.msra.mxu0 0.0
    %1453 = vmatprep.subr.mxu0 0.0
    %1454 = vmatpush2.xpose.msra.mxu0 0.0
    %1455 = vmatprep.subr.mxu0 0.0
    %1456 = vmatpush2.xpose.msra.mxu0 0.0
    %1457 = vmatprep.subr.mxu0 0.0
    %1458 = vmatpush2.xpose.msra.mxu0 0.0
    %1459 = vmatprep.subr.mxu0 0.0
    %1460 = vmatpush2.xpose.msra.mxu0 0.0
    %1461 = vmatprep.subr.mxu0 0.0
    %1462 = vmatpush2.xpose.msra.mxu0 0.0
    %1463 = vmatprep.subr.mxu0 0.0
    %1464 = vmatpush2.xpose.msra.mxu0 0.0
    %1465 = vmatprep.subr.mxu0 0.0
    %1466 = vmatpush2.xpose.msra.mxu0 0.0
    %1467 = vmatprep.subr.mxu0 0.0
    %1468 = vmatpush2.xpose.msra.mxu0 0.0
    %1469 = vmatprep.subr.mxu0 0.0
    %1470 = vmatpush2.xpose.msra.mxu0 0.0
    %1471 = vmatprep.subr.mxu0 0.0
    %1472 = vmatpush2.xpose.msra.mxu0 0.0
    %1473 = vmatprep.subr.mxu0 0.0
    %1474 = vmatpush2.xpose.msra.mxu0 0.0
    %1475 = vmatprep.subr.mxu0 0.0
    %1476 = vmatpush2.xpose.msra.mxu0 0.0
    %1477 = vmatprep.mubr.f32.mxu0 0.0
    %1478 = vmatmul.mubr.f32.gmra.mxu0 %v1401
    %v1479 = vpop.f32.mrf.mxu0
    %v1480 = vadd.f32 0.0, %v1479
    %v1481 = vpop.f32.mrf.mxu0
    %1482 = vmatprep.mubr.f32.mxu0 0.0
    %1483 = vmatmul.mubr.f32.gmra.mxu0 %v1403
    %v1484 = vpop.f32.mrf.mxu0
    %v1485 = vadd.f32 0.0, %v1484
    %v1486 = vpop.f32.mrf.mxu0
    %1487 = vmatprep.mubr.f32.mxu0 0.0
    %1488 = vmatmul.mubr.f32.gmra.mxu0 %v1405
    %v1489 = vpop.f32.mrf.mxu0
    %v1490 = vadd.f32 0.0, %v1489
    %v1491 = vpop.f32.mrf.mxu0
    %1492 = vdwg.mxu0
    %v1493 = vmul.f32 %v1480, 0.35355338
    %v1494 = vmul.f32 %v1485, 0.35355338
    %v1495 = vmul.f32 %v1490, 0.35355338
    %vm1496 = vcmask 195584
    %v1497 = vsel %vm1496, %v1493, -inf
    %1498 = vmax.xlane.f32.xlu0 %v1497
    %v1499 = vpop.xlane.xlu0 %1498
    %v1500 = vsel %vm1496, %v1494, -inf
    %1501 = vmax.xlane.f32.xlu0 %v1500
    %v1502 = vpop.xlane.xlu0 %1501
    %v1503 = vsel %vm1496, %v1495, -inf
    %1504 = vmax.xlane.f32.xlu0 %v1503
    %v1505 = vpop.xlane.xlu0 %1504
    %v1506 = vsub.f32 %v1493, %v1499
    %v1507 = vsub.f32 %v1494, %v1502
    %v1508 = vsub.f32 %v1495, %v1505
    %v1509 = vmul.f32 %v1506, 1.442695
    %v1510 = vpow.pop %v1509
    %v1511 = vmul.f32 %v1507, 1.442695
    %v1512 = vpow.pop %v1511
    %v1513 = vmul.f32 %v1508, 1.442695
    %v1514 = vpow.pop %v1513
    %v1515 = vsel %vm1496, %v1510, 0.0
    %1516 = vadd.xlane.f32.xlu0 %v1515
    %v1517 = vpop.xlane.xlu0 %1516
    %v1518 = vsel %vm1496, %v1512, 0.0
    %1519 = vadd.xlane.f32.xlu0 %v1518
    %v1520 = vpop.xlane.xlu0 %1519
    %v1521 = vsel %vm1496, %v1514, 0.0
    %1522 = vadd.xlane.f32.xlu0 %v1521
    %v1523 = vpop.xlane.xlu0 %1522
    %v1524 = vrcp.pop %v1517
    %v1525 = vrcp.pop %v1520
    %v1526 = vrcp.pop %v1523
    %v1527 = vmul.f32 %v1510, %v1524
    %v1528 = vmul.f32 %v1512, %v1525
    %v1529 = vmul.f32 %v1514, %v1526
    %1533 = vrot.lane.b32.xlu0 %v1266, 64
    %v1534 = vpop.permute.xlu0 %1533
    %1535 = vrot.lane.b32.xlu0 %v1271, 64
    %v1536 = vpop.permute.xlu0 %1535
    %1537 = vrot.lane.b32.xlu0 %v1276, 64
    %v1538 = vpop.permute.xlu0 %1537
    %v1543 = vsel %vm1496, %v1527, 0
    %v1546 = vsel %vm1496, %v1528, 0
    %v1549 = vsel %vm1496, %v1529, 0
    %1551 = vmatprep.subr.mxu0 0.0
    %1552 = vmatpush1.msra.mxu0 0.0
    %1553 = vmatprep.subr.mxu0 0.0
    %1554 = vmatpush1.msra.mxu0 0.0
    %1555 = vmatprep.subr.mxu0 0.0
    %1556 = vmatpush1.msra.mxu0 0.0
    %1557 = vmatprep.subr.mxu0 0.0
    %1558 = vmatpush1.msra.mxu0 0.0
    %1559 = vmatprep.subr.mxu0 0.0
    %1560 = vmatpush1.msra.mxu0 0.0
    %1561 = vmatprep.subr.mxu0 0.0
    %1562 = vmatpush1.msra.mxu0 0.0
    %1563 = vmatprep.subr.mxu0 0.0
    %1564 = vmatpush1.msra.mxu0 0.0
    %1565 = vmatprep.subr.mxu0 0.0
    %1566 = vmatpush1.msra.mxu0 0.0
    %1567 = vmatprep.subr.mxu0 0.0
    %1568 = vmatpush1.msra.mxu0 0.0
    %1569 = vmatprep.subr.mxu0 0.0
    %1570 = vmatpush1.msra.mxu0 0.0
    %1571 = vmatprep.subr.mxu0 0.0
    %1572 = vmatpush1.msra.mxu0 0.0
    %1573 = vmatprep.subr.mxu0 0.0
    %1574 = vmatpush1.msra.mxu0 0.0
    %1575 = vmatprep.subr.mxu0 0.0
    %1576 = vmatpush1.msra.mxu0 0.0
    %1577 = vmatprep.subr.mxu0 0.0
    %1578 = vmatpush1.msra.mxu0 %v1538
    %1579 = vmatprep.subr.mxu0 0.0
    %1580 = vmatpush1.msra.mxu0 %v1536
    %1581 = vmatprep.subr.mxu0 0.0
    %1582 = vmatpush1.msra.mxu0 %v1534
    %1583 = vmatprep.subr.mxu0 0.0
    %1584 = vmatpush2.msra.mxu0 0.0
    %1585 = vmatprep.subr.mxu0 0.0
    %1586 = vmatpush2.msra.mxu0 0.0
    %1587 = vmatprep.subr.mxu0 0.0
    %1588 = vmatpush2.msra.mxu0 0.0
    %1589 = vmatprep.subr.mxu0 0.0
    %1590 = vmatpush2.msra.mxu0 0.0
    %1591 = vmatprep.subr.mxu0 0.0
    %1592 = vmatpush2.msra.mxu0 0.0
    %1593 = vmatprep.subr.mxu0 0.0
    %1594 = vmatpush2.msra.mxu0 0.0
    %1595 = vmatprep.subr.mxu0 0.0
    %1596 = vmatpush2.msra.mxu0 0.0
    %1597 = vmatprep.subr.mxu0 0.0
    %1598 = vmatpush2.msra.mxu0 0.0
    %1599 = vmatprep.subr.mxu0 0.0
    %1600 = vmatpush2.msra.mxu0 0.0
    %1601 = vmatprep.subr.mxu0 0.0
    %1602 = vmatpush2.msra.mxu0 0.0
    %1603 = vmatprep.subr.mxu0 0.0
    %1604 = vmatpush2.msra.mxu0 0.0
    %1605 = vmatprep.subr.mxu0 0.0
    %1606 = vmatpush2.msra.mxu0 0.0
    %1607 = vmatprep.subr.mxu0 0.0
    %1608 = vmatpush2.msra.mxu0 0.0
    %1609 = vmatprep.subr.mxu0 0.0
    %1610 = vmatpush2.msra.mxu0 0.0
    %1611 = vmatprep.subr.mxu0 0.0
    %1612 = vmatpush2.msra.mxu0 0.0
    %1613 = vmatprep.subr.mxu0 0.0
    %1614 = vmatpush2.msra.mxu0 0.0
    %1615 = vmatprep.mubr.f32.mxu0 0.0
    %1616 = vmatmul.mubr.f32.gmra.mxu0 %v1543
    %v1617 = vpop.f32.mrf.mxu0
    %v1618 = vadd.f32 0.0, %v1617
    %v1619 = vpop.f32.mrf.mxu0
    %1620 = vmatprep.mubr.f32.mxu0 0.0
    %1621 = vmatmul.mubr.f32.gmra.mxu0 %v1546
    %v1622 = vpop.f32.mrf.mxu0
    %v1623 = vadd.f32 0.0, %v1622
    %v1624 = vpop.f32.mrf.mxu0
    %1625 = vmatprep.mubr.f32.mxu0 0.0
    %1626 = vmatmul.mubr.f32.gmra.mxu0 %v1549
    %v1627 = vpop.f32.mrf.mxu0
    %v1628 = vadd.f32 0.0, %v1627
    %v1629 = vpop.f32.mrf.mxu0
    %1630 = vdwg.mxu0
    %v1632 = vsel %vm1400, %v1618, 0
    %v1635 = vsel %vm1400, %v1623, 0
    %v1638 = vsel %vm1400, %v1628, 0
    %1640 = vmatprep.subr.mxu0 0.0
    %1641 = vmatpush1.msra.mxu0 0.0
    %1642 = vmatprep.subr.mxu0 0.0
    %1643 = vmatpush1.msra.mxu0 0.0
    %1644 = vmatprep.subr.mxu0 0.0
    %1645 = vmatpush1.msra.mxu0 0.0
    %1646 = vmatprep.subr.mxu0 0.0
    %1647 = vmatpush1.msra.mxu0 0.0
    %1648 = vmatprep.subr.mxu0 0.0
    %1649 = vmatpush1.msra.mxu0 0.0
    %1650 = vmatprep.subr.mxu0 0.0
    %1651 = vmatpush1.msra.mxu0 0.0
    %1652 = vmatprep.subr.mxu0 0.0
    %1653 = vmatpush1.msra.mxu0 0.0
    %1654 = vmatprep.subr.mxu0 0.0
    %1655 = vmatpush1.msra.mxu0 0.0
    %1656 = vmatprep.subr.mxu0 0.0
    %1657 = vmatpush1.msra.mxu0 0.0
    %1658 = vmatprep.subr.mxu0 0.0
    %1659 = vmatpush1.msra.mxu0 0.0
    %1660 = vmatprep.subr.mxu0 0.0
    %1661 = vmatpush1.msra.mxu0 0.0
    %1662 = vmatprep.subr.mxu0 0.0
    %1663 = vmatpush1.msra.mxu0 0.0
    %1664 = vmatprep.subr.mxu0 0.0
    %1665 = vmatpush1.msra.mxu0 0.0
    %1666 = vmatprep.subr.mxu0 0.0
    %1667 = vmatpush1.msra.mxu0 0.0
    %1668 = vmatprep.subr.mxu0 0.0
    %1669 = vmatpush1.msra.mxu0 0.0
    %1670 = vmatprep.subr.mxu0 0.0
    %1671 = vmatpush1.msra.mxu0 %v1379
    %1672 = vmatprep.subr.mxu0 0.0
    %1673 = vmatpush2.msra.mxu0 0.0
    %1674 = vmatprep.subr.mxu0 0.0
    %1675 = vmatpush2.msra.mxu0 0.0
    %1676 = vmatprep.subr.mxu0 0.0
    %1677 = vmatpush2.msra.mxu0 0.0
    %1678 = vmatprep.subr.mxu0 0.0
    %1679 = vmatpush2.msra.mxu0 0.0
    %1680 = vmatprep.subr.mxu0 0.0
    %1681 = vmatpush2.msra.mxu0 0.0
    %1682 = vmatprep.subr.mxu0 0.0
    %1683 = vmatpush2.msra.mxu0 0.0
    %1684 = vmatprep.subr.mxu0 0.0
    %1685 = vmatpush2.msra.mxu0 0.0
    %1686 = vmatprep.subr.mxu0 0.0
    %1687 = vmatpush2.msra.mxu0 0.0
    %1688 = vmatprep.subr.mxu0 0.0
    %1689 = vmatpush2.msra.mxu0 0.0
    %1690 = vmatprep.subr.mxu0 0.0
    %1691 = vmatpush2.msra.mxu0 0.0
    %1692 = vmatprep.subr.mxu0 0.0
    %1693 = vmatpush2.msra.mxu0 0.0
    %1694 = vmatprep.subr.mxu0 0.0
    %1695 = vmatpush2.msra.mxu0 0.0
    %1696 = vmatprep.subr.mxu0 0.0
    %1697 = vmatpush2.msra.mxu0 0.0
    %1698 = vmatprep.subr.mxu0 0.0
    %1699 = vmatpush2.msra.mxu0 0.0
    %1700 = vmatprep.subr.mxu0 0.0
    %1701 = vmatpush2.msra.mxu0 0.0
    %1702 = vmatprep.subr.mxu0 0.0
    %1703 = vmatpush2.msra.mxu0 0.0
    %1704 = vmatprep.mubr.f32.mxu0 0.0
    %1705 = vmatmul.mubr.f32.gmra.mxu0 %v1632
    %v1706 = vpop.f32.mrf.mxu0
    %v1707 = vadd.f32 0.0, %v1706
    %v1708 = vpop.f32.mrf.mxu0
    %1709 = vmatprep.mubr.f32.mxu0 0.0
    %1710 = vmatmul.mubr.f32.gmra.mxu0 %v1635
    %v1711 = vpop.f32.mrf.mxu0
    %v1712 = vadd.f32 0.0, %v1711
    %v1713 = vpop.f32.mrf.mxu0
    %1714 = vmatprep.mubr.f32.mxu0 0.0
    %1715 = vmatmul.mubr.f32.gmra.mxu0 %v1638
    %v1716 = vpop.f32.mrf.mxu0
    %v1717 = vadd.f32 0.0, %v1716
    %v1718 = vpop.f32.mrf.mxu0
    %1719 = vdwg.mxu0
    %v1720 = vadd.f32 %v1390, %v1707
    %v1721 = vadd.f32 %v1390, %v1712
    %v1722 = vadd.f32 %v1390, %v1717
    %1723 = vrot.lane.b32.xlu0 %v1376, 120
    %v1724 = vpop.permute.xlu0 %1723
    %1725 = vrot.lane.b32.xlu0 %v1377, 120
    %v1726 = vpop.permute.xlu0 %1725
    %1727 = vrot.lane.b32.xlu0 %v1378, 120
    %v1728 = vpop.permute.xlu0 %1727
    %1729 = vrot.lane.b32.xlu0 %v1376, 88
    %v1730 = vpop.permute.xlu0 %1729
    %1731 = vrot.lane.b32.xlu0 %v1377, 88
    %v1732 = vpop.permute.xlu0 %1731
    %1733 = vrot.lane.b32.xlu0 %v1378, 88
    %v1734 = vpop.permute.xlu0 %1733
    %v1735 = vsel %vm1400, %v1724, 0
    %v1737 = vsel %vm1400, %v1726, 0
    %v1739 = vsel %vm1400, %v1728, 0
    %v1741 = vsel %vm1400, %v1730, 0
    %v1743 = vsel %vm1400, %v1732, 0
    %v1745 = vsel %vm1400, %v1734, 0
    %1747 = vmatprep.subr.mxu0 0.0
    %1748 = vmatpush1.xpose.msra.mxu0 0.0
    %1749 = vmatprep.subr.mxu0 0.0
    %1750 = vmatpush1.xpose.msra.mxu0 0.0
    %1751 = vmatprep.subr.mxu0 0.0
    %1752 = vmatpush1.xpose.msra.mxu0 0.0
    %1753 = vmatprep.subr.mxu0 0.0
    %1754 = vmatpush1.xpose.msra.mxu0 0.0
    %1755 = vmatprep.subr.mxu0 0.0
    %1756 = vmatpush1.xpose.msra.mxu0 0.0
    %1757 = vmatprep.subr.mxu0 0.0
    %1758 = vmatpush1.xpose.msra.mxu0 0.0
    %1759 = vmatprep.subr.mxu0 0.0
    %1760 = vmatpush1.xpose.msra.mxu0 0.0
    %1761 = vmatprep.subr.mxu0 0.0
    %1762 = vmatpush1.xpose.msra.mxu0 0.0
    %1763 = vmatprep.subr.mxu0 0.0
    %1764 = vmatpush1.xpose.msra.mxu0 0.0
    %1765 = vmatprep.subr.mxu0 0.0
    %1766 = vmatpush1.xpose.msra.mxu0 0.0
    %1767 = vmatprep.subr.mxu0 0.0
    %1768 = vmatpush1.xpose.msra.mxu0 0.0
    %1769 = vmatprep.subr.mxu0 0.0
    %1770 = vmatpush1.xpose.msra.mxu0 0.0
    %1771 = vmatprep.subr.mxu0 0.0
    %1772 = vmatpush1.xpose.msra.mxu0 0.0
    %1773 = vmatprep.subr.mxu0 0.0
    %1774 = vmatpush1.xpose.msra.mxu0 %v1745
    %1775 = vmatprep.subr.mxu0 0.0
    %1776 = vmatpush1.xpose.msra.mxu0 %v1743
    %1777 = vmatprep.subr.mxu0 0.0
    %1778 = vmatpush1.xpose.msra.mxu0 %v1741
    %1779 = vmatprep.subr.mxu0 0.0
    %1780 = vmatpush2.xpose.msra.mxu0 0.0
    %1781 = vmatprep.subr.mxu0 0.0
    %1782 = vmatpush2.xpose.msra.mxu0 0.0
    %1783 = vmatprep.subr.mxu0 0.0
    %1784 = vmatpush2.xpose.msra.mxu0 0.0
    %1785 = vmatprep.subr.mxu0 0.0
    %1786 = vmatpush2.xpose.msra.mxu0 0.0
    %1787 = vmatprep.subr.mxu0 0.0
    %1788 = vmatpush2.xpose.msra.mxu0 0.0
    %1789 = vmatprep.subr.mxu0 0.0
    %1790 = vmatpush2.xpose.msra.mxu0 0.0
    %1791 = vmatprep.subr.mxu0 0.0
    %1792 = vmatpush2.xpose.msra.mxu0 0.0
    %1793 = vmatprep.subr.mxu0 0.0
    %1794 = vmatpush2.xpose.msra.mxu0 0.0
    %1795 = vmatprep.subr.mxu0 0.0
    %1796 = vmatpush2.xpose.msra.mxu0 0.0
    %1797 = vmatprep.subr.mxu0 0.0
    %1798 = vmatpush2.xpose.msra.mxu0 0.0
    %1799 = vmatprep.subr.mxu0 0.0
    %1800 = vmatpush2.xpose.msra.mxu0 0.0
    %1801 = vmatprep.subr.mxu0 0.0
    %1802 = vmatpush2.xpose.msra.mxu0 0.0
    %1803 = vmatprep.subr.mxu0 0.0
    %1804 = vmatpush2.xpose.msra.mxu0 0.0
    %1805 = vmatprep.subr.mxu0 0.0
    %1806 = vmatpush2.xpose.msra.mxu0 0.0
    %1807 = vmatprep.subr.mxu0 0.0
    %1808 = vmatpush2.xpose.msra.mxu0 0.0
    %1809 = vmatprep.subr.mxu0 0.0
    %1810 = vmatpush2.xpose.msra.mxu0 0.0
    %1811 = vmatprep.mubr.f32.mxu0 0.0
    %1812 = vmatmul.mubr.f32.gmra.mxu0 %v1735
    %v1813 = vpop.f32.mrf.mxu0
    %v1814 = vadd.f32 0.0, %v1813
    %v1815 = vpop.f32.mrf.mxu0
    %1816 = vmatprep.mubr.f32.mxu0 0.0
    %1817 = vmatmul.mubr.f32.gmra.mxu0 %v1737
    %v1818 = vpop.f32.mrf.mxu0
    %v1819 = vadd.f32 0.0, %v1818
    %v1820 = vpop.f32.mrf.mxu0
    %1821 = vmatprep.mubr.f32.mxu0 0.0
    %1822 = vmatmul.mubr.f32.gmra.mxu0 %v1739
    %v1823 = vpop.f32.mrf.mxu0
    %v1824 = vadd.f32 0.0, %v1823
    %v1825 = vpop.f32.mrf.mxu0
    %1826 = vdwg.mxu0
    %v1827 = vmul.f32 %v1814, 0.35355338
    %v1828 = vmul.f32 %v1819, 0.35355338
    %v1829 = vmul.f32 %v1824, 0.35355338
    %v1830 = vsel %vm1496, %v1827, -inf
    %1831 = vmax.xlane.f32.xlu0 %v1830
    %v1832 = vpop.xlane.xlu0 %1831
    %v1833 = vsel %vm1496, %v1828, -inf
    %1834 = vmax.xlane.f32.xlu0 %v1833
    %v1835 = vpop.xlane.xlu0 %1834
    %v1836 = vsel %vm1496, %v1829, -inf
    %1837 = vmax.xlane.f32.xlu0 %v1836
    %v1838 = vpop.xlane.xlu0 %1837
    %v1839 = vsub.f32 %v1827, %v1832
    %v1840 = vsub.f32 %v1828, %v1835
    %v1841 = vsub.f32 %v1829, %v1838
    %v1842 = vmul.f32 %v1839, 1.442695
    %v1843 = vpow.pop %v1842
    %v1844 = vmul.f32 %v1840, 1.442695
    %v1845 = vpow.pop %v1844
    %v1846 = vmul.f32 %v1841, 1.442695
    %v1847 = vpow.pop %v1846
    %v1848 = vsel %vm1496, %v1843, 0.0
    %1849 = vadd.xlane.f32.xlu0 %v1848
    %v1850 = vpop.xlane.xlu0 %1849
    %v1851 = vsel %vm1496, %v1845, 0.0
    %1852 = vadd.xlane.f32.xlu0 %v1851
    %v1853 = vpop.xlane.xlu0 %1852
    %v1854 = vsel %vm1496, %v1847, 0.0
    %1855 = vadd.xlane.f32.xlu0 %v1854
    %v1856 = vpop.xlane.xlu0 %1855
    %v1857 = vrcp.pop %v1850
    %v1858 = vrcp.pop %v1853
    %v1859 = vrcp.pop %v1856
    %v1860 = vmul.f32 %v1843, %v1857
    %v1861 = vmul.f32 %v1845, %v1858
    %v1862 = vmul.f32 %v1847, %v1859
    %1863 = vrot.lane.b32.xlu0 %v1266, 56
    %v1864 = vpop.permute.xlu0 %1863
    %1865 = vrot.lane.b32.xlu0 %v1271, 56
    %v1866 = vpop.permute.xlu0 %1865
    %1867 = vrot.lane.b32.xlu0 %v1276, 56
    %v1868 = vpop.permute.xlu0 %1867
    %v1873 = vsel %vm1496, %v1860, 0
    %v1876 = vsel %vm1496, %v1861, 0
    %v1879 = vsel %vm1496, %v1862, 0
    %1881 = vmatprep.subr.mxu0 0.0
    %1882 = vmatpush1.msra.mxu0 0.0
    %1883 = vmatprep.subr.mxu0 0.0
    %1884 = vmatpush1.msra.mxu0 0.0
    %1885 = vmatprep.subr.mxu0 0.0
    %1886 = vmatpush1.msra.mxu0 0.0
    %1887 = vmatprep.subr.mxu0 0.0
    %1888 = vmatpush1.msra.mxu0 0.0
    %1889 = vmatprep.subr.mxu0 0.0
    %1890 = vmatpush1.msra.mxu0 0.0
    %1891 = vmatprep.subr.mxu0 0.0
    %1892 = vmatpush1.msra.mxu0 0.0
    %1893 = vmatprep.subr.mxu0 0.0
    %1894 = vmatpush1.msra.mxu0 0.0
    %1895 = vmatprep.subr.mxu0 0.0
    %1896 = vmatpush1.msra.mxu0 0.0
    %1897 = vmatprep.subr.mxu0 0.0
    %1898 = vmatpush1.msra.mxu0 0.0
    %1899 = vmatprep.subr.mxu0 0.0
    %1900 = vmatpush1.msra.mxu0 0.0
    %1901 = vmatprep.subr.mxu0 0.0
    %1902 = vmatpush1.msra.mxu0 0.0
    %1903 = vmatprep.subr.mxu0 0.0
    %1904 = vmatpush1.msra.mxu0 0.0
    %1905 = vmatprep.subr.mxu0 0.0
    %1906 = vmatpush1.msra.mxu0 0.0
    %1907 = vmatprep.subr.mxu0 0.0
    %1908 = vmatpush1.msra.mxu0 %v1868
    %1909 = vmatprep.subr.mxu0 0.0
    %1910 = vmatpush1.msra.mxu0 %v1866
    %1911 = vmatprep.subr.mxu0 0.0
    %1912 = vmatpush1.msra.mxu0 %v1864
    %1913 = vmatprep.subr.mxu0 0.0
    %1914 = vmatpush2.msra.mxu0 0.0
    %1915 = vmatprep.subr.mxu0 0.0
    %1916 = vmatpush2.msra.mxu0 0.0
    %1917 = vmatprep.subr.mxu0 0.0
    %1918 = vmatpush2.msra.mxu0 0.0
    %1919 = vmatprep.subr.mxu0 0.0
    %1920 = vmatpush2.msra.mxu0 0.0
    %1921 = vmatprep.subr.mxu0 0.0
    %1922 = vmatpush2.msra.mxu0 0.0
    %1923 = vmatprep.subr.mxu0 0.0
    %1924 = vmatpush2.msra.mxu0 0.0
    %1925 = vmatprep.subr.mxu0 0.0
    %1926 = vmatpush2.msra.mxu0 0.0
    %1927 = vmatprep.subr.mxu0 0.0
    %1928 = vmatpush2.msra.mxu0 0.0
    %1929 = vmatprep.subr.mxu0 0.0
    %1930 = vmatpush2.msra.mxu0 0.0
    %1931 = vmatprep.subr.mxu0 0.0
    %1932 = vmatpush2.msra.mxu0 0.0
    %1933 = vmatprep.subr.mxu0 0.0
    %1934 = vmatpush2.msra.mxu0 0.0
    %1935 = vmatprep.subr.mxu0 0.0
    %1936 = vmatpush2.msra.mxu0 0.0
    %1937 = vmatprep.subr.mxu0 0.0
    %1938 = vmatpush2.msra.mxu0 0.0
    %1939 = vmatprep.subr.mxu0 0.0
    %1940 = vmatpush2.msra.mxu0 0.0
    %1941 = vmatprep.subr.mxu0 0.0
    %1942 = vmatpush2.msra.mxu0 0.0
    %1943 = vmatprep.subr.mxu0 0.0
    %1944 = vmatpush2.msra.mxu0 0.0
    %1945 = vmatprep.mubr.f32.mxu0 0.0
    %1946 = vmatmul.mubr.f32.gmra.mxu0 %v1873
    %v1947 = vpop.f32.mrf.mxu0
    %v1948 = vadd.f32 0.0, %v1947
    %v1949 = vpop.f32.mrf.mxu0
    %1950 = vmatprep.mubr.f32.mxu0 0.0
    %1951 = vmatmul.mubr.f32.gmra.mxu0 %v1876
    %v1952 = vpop.f32.mrf.mxu0
    %v1953 = vadd.f32 0.0, %v1952
    %v1954 = vpop.f32.mrf.mxu0
    %1955 = vmatprep.mubr.f32.mxu0 0.0
    %1956 = vmatmul.mubr.f32.gmra.mxu0 %v1879
    %v1957 = vpop.f32.mrf.mxu0
    %v1958 = vadd.f32 0.0, %v1957
    %v1959 = vpop.f32.mrf.mxu0
    %1960 = vdwg.mxu0
    %v1962 = vsel %vm1400, %v1948, 0
    %v1965 = vsel %vm1400, %v1953, 0
    %v1968 = vsel %vm1400, %v1958, 0
    %1970 = vmatprep.subr.mxu0 0.0
    %1971 = vmatpush1.msra.mxu0 0.0
    %1972 = vmatprep.subr.mxu0 0.0
    %1973 = vmatpush1.msra.mxu0 0.0
    %1974 = vmatprep.subr.mxu0 0.0
    %1975 = vmatpush1.msra.mxu0 0.0
    %1976 = vmatprep.subr.mxu0 0.0
    %1977 = vmatpush1.msra.mxu0 0.0
    %1978 = vmatprep.subr.mxu0 0.0
    %1979 = vmatpush1.msra.mxu0 0.0
    %1980 = vmatprep.subr.mxu0 0.0
    %1981 = vmatpush1.msra.mxu0 0.0
    %1982 = vmatprep.subr.mxu0 0.0
    %1983 = vmatpush1.msra.mxu0 0.0
    %1984 = vmatprep.subr.mxu0 0.0
    %1985 = vmatpush1.msra.mxu0 0.0
    %1986 = vmatprep.subr.mxu0 0.0
    %1987 = vmatpush1.msra.mxu0 0.0
    %1988 = vmatprep.subr.mxu0 0.0
    %1989 = vmatpush1.msra.mxu0 0.0
    %1990 = vmatprep.subr.mxu0 0.0
    %1991 = vmatpush1.msra.mxu0 0.0
    %1992 = vmatprep.subr.mxu0 0.0
    %1993 = vmatpush1.msra.mxu0 0.0
    %1994 = vmatprep.subr.mxu0 0.0
    %1995 = vmatpush1.msra.mxu0 0.0
    %1996 = vmatprep.subr.mxu0 0.0
    %1997 = vmatpush1.msra.mxu0 0.0
    %1998 = vmatprep.subr.mxu0 0.0
    %1999 = vmatpush1.msra.mxu0 0.0
    %2000 = vmatprep.subr.mxu0 0.0
    %2001 = vmatpush1.msra.mxu0 %v1380
    %2002 = vmatprep.subr.mxu0 0.0
    %2003 = vmatpush2.msra.mxu0 0.0
    %2004 = vmatprep.subr.mxu0 0.0
    %2005 = vmatpush2.msra.mxu0 0.0
    %2006 = vmatprep.subr.mxu0 0.0
    %2007 = vmatpush2.msra.mxu0 0.0
    %2008 = vmatprep.subr.mxu0 0.0
    %2009 = vmatpush2.msra.mxu0 0.0
    %2010 = vmatprep.subr.mxu0 0.0
    %2011 = vmatpush2.msra.mxu0 0.0
    %2012 = vmatprep.subr.mxu0 0.0
    %2013 = vmatpush2.msra.mxu0 0.0
    %2014 = vmatprep.subr.mxu0 0.0
    %2015 = vmatpush2.msra.mxu0 0.0
    %2016 = vmatprep.subr.mxu0 0.0
    %2017 = vmatpush2.msra.mxu0 0.0
    %2018 = vmatprep.subr.mxu0 0.0
    %2019 = vmatpush2.msra.mxu0 0.0
    %2020 = vmatprep.subr.mxu0 0.0
    %2021 = vmatpush2.msra.mxu0 0.0
    %2022 = vmatprep.subr.mxu0 0.0
    %2023 = vmatpush2.msra.mxu0 0.0
    %2024 = vmatprep.subr.mxu0 0.0
    %2025 = vmatpush2.msra.mxu0 0.0
    %2026 = vmatprep.subr.mxu0 0.0
    %2027 = vmatpush2.msra.mxu0 0.0
    %2028 = vmatprep.subr.mxu0 0.0
    %2029 = vmatpush2.msra.mxu0 0.0
    %2030 = vmatprep.subr.mxu0 0.0
    %2031 = vmatpush2.msra.mxu0 0.0
    %2032 = vmatprep.subr.mxu0 0.0
    %2033 = vmatpush2.msra.mxu0 0.0
    %2034 = vmatprep.mubr.f32.mxu0 0.0
    %2035 = vmatmul.mubr.f32.gmra.mxu0 %v1962
    %v2036 = vpop.f32.mrf.mxu0
    %v2037 = vadd.f32 0.0, %v2036
    %v2038 = vpop.f32.mrf.mxu0
    %2039 = vmatprep.mubr.f32.mxu0 0.0
    %2040 = vmatmul.mubr.f32.gmra.mxu0 %v1965
    %v2041 = vpop.f32.mrf.mxu0
    %v2042 = vadd.f32 0.0, %v2041
    %v2043 = vpop.f32.mrf.mxu0
    %2044 = vmatprep.mubr.f32.mxu0 0.0
    %2045 = vmatmul.mubr.f32.gmra.mxu0 %v1968
    %v2046 = vpop.f32.mrf.mxu0
    %v2047 = vadd.f32 0.0, %v2046
    %v2048 = vpop.f32.mrf.mxu0
    %2049 = vdwg.mxu0
    %v2050 = vadd.f32 %v1720, %v2037
    %v2051 = vadd.f32 %v1721, %v2042
    %v2052 = vadd.f32 %v1722, %v2047
    %2053 = vrot.lane.b32.xlu0 %v1376, 112
    %v2054 = vpop.permute.xlu0 %2053
    %2055 = vrot.lane.b32.xlu0 %v1377, 112
    %v2056 = vpop.permute.xlu0 %2055
    %2057 = vrot.lane.b32.xlu0 %v1378, 112
    %v2058 = vpop.permute.xlu0 %2057
    %2059 = vrot.lane.b32.xlu0 %v1376, 80
    %v2060 = vpop.permute.xlu0 %2059
    %2061 = vrot.lane.b32.xlu0 %v1377, 80
    %v2062 = vpop.permute.xlu0 %2061
    %2063 = vrot.lane.b32.xlu0 %v1378, 80
    %v2064 = vpop.permute.xlu0 %2063
    %v2065 = vsel %vm1400, %v2054, 0
    %v2067 = vsel %vm1400, %v2056, 0
    %v2069 = vsel %vm1400, %v2058, 0
    %v2071 = vsel %vm1400, %v2060, 0
    %v2073 = vsel %vm1400, %v2062, 0
    %v2075 = vsel %vm1400, %v2064, 0
    %2077 = vmatprep.subr.mxu0 0.0
    %2078 = vmatpush1.xpose.msra.mxu0 0.0
    %2079 = vmatprep.subr.mxu0 0.0
    %2080 = vmatpush1.xpose.msra.mxu0 0.0
    %2081 = vmatprep.subr.mxu0 0.0
    %2082 = vmatpush1.xpose.msra.mxu0 0.0
    %2083 = vmatprep.subr.mxu0 0.0
    %2084 = vmatpush1.xpose.msra.mxu0 0.0
    %2085 = vmatprep.subr.mxu0 0.0
    %2086 = vmatpush1.xpose.msra.mxu0 0.0
    %2087 = vmatprep.subr.mxu0 0.0
    %2088 = vmatpush1.xpose.msra.mxu0 0.0
    %2089 = vmatprep.subr.mxu0 0.0
    %2090 = vmatpush1.xpose.msra.mxu0 0.0
    %2091 = vmatprep.subr.mxu0 0.0
    %2092 = vmatpush1.xpose.msra.mxu0 0.0
    %2093 = vmatprep.subr.mxu0 0.0
    %2094 = vmatpush1.xpose.msra.mxu0 0.0
    %2095 = vmatprep.subr.mxu0 0.0
    %2096 = vmatpush1.xpose.msra.mxu0 0.0
    %2097 = vmatprep.subr.mxu0 0.0
    %2098 = vmatpush1.xpose.msra.mxu0 0.0
    %2099 = vmatprep.subr.mxu0 0.0
    %2100 = vmatpush1.xpose.msra.mxu0 0.0
    %2101 = vmatprep.subr.mxu0 0.0
    %2102 = vmatpush1.xpose.msra.mxu0 0.0
    %2103 = vmatprep.subr.mxu0 0.0
    %2104 = vmatpush1.xpose.msra.mxu0 %v2075
    %2105 = vmatprep.subr.mxu0 0.0
    %2106 = vmatpush1.xpose.msra.mxu0 %v2073
    %2107 = vmatprep.subr.mxu0 0.0
    %2108 = vmatpush1.xpose.msra.mxu0 %v2071
    %2109 = vmatprep.subr.mxu0 0.0
    %2110 = vmatpush2.xpose.msra.mxu0 0.0
    %2111 = vmatprep.subr.mxu0 0.0
    %2112 = vmatpush2.xpose.msra.mxu0 0.0
    %2113 = vmatprep.subr.mxu0 0.0
    %2114 = vmatpush2.xpose.msra.mxu0 0.0
    %2115 = vmatprep.subr.mxu0 0.0
    %2116 = vmatpush2.xpose.msra.mxu0 0.0
    %2117 = vmatprep.subr.mxu0 0.0
    %2118 = vmatpush2.xpose.msra.mxu0 0.0
    %2119 = vmatprep.subr.mxu0 0.0
    %2120 = vmatpush2.xpose.msra.mxu0 0.0
    %2121 = vmatprep.subr.mxu0 0.0
    %2122 = vmatpush2.xpose.msra.mxu0 0.0
    %2123 = vmatprep.subr.mxu0 0.0
    %2124 = vmatpush2.xpose.msra.mxu0 0.0
    %2125 = vmatprep.subr.mxu0 0.0
    %2126 = vmatpush2.xpose.msra.mxu0 0.0
    %2127 = vmatprep.subr.mxu0 0.0
    %2128 = vmatpush2.xpose.msra.mxu0 0.0
    %2129 = vmatprep.subr.mxu0 0.0
    %2130 = vmatpush2.xpose.msra.mxu0 0.0
    %2131 = vmatprep.subr.mxu0 0.0
    %2132 = vmatpush2.xpose.msra.mxu0 0.0
    %2133 = vmatprep.subr.mxu0 0.0
    %2134 = vmatpush2.xpose.msra.mxu0 0.0
    %2135 = vmatprep.subr.mxu0 0.0
    %2136 = vmatpush2.xpose.msra.mxu0 0.0
    %2137 = vmatprep.subr.mxu0 0.0
    %2138 = vmatpush2.xpose.msra.mxu0 0.0
    %2139 = vmatprep.subr.mxu0 0.0
    %2140 = vmatpush2.xpose.msra.mxu0 0.0
    %2141 = vmatprep.mubr.f32.mxu0 0.0
    %2142 = vmatmul.mubr.f32.gmra.mxu0 %v2065
    %v2143 = vpop.f32.mrf.mxu0
    %v2144 = vadd.f32 0.0, %v2143
    %v2145 = vpop.f32.mrf.mxu0
    %2146 = vmatprep.mubr.f32.mxu0 0.0
    %2147 = vmatmul.mubr.f32.gmra.mxu0 %v2067
    %v2148 = vpop.f32.mrf.mxu0
    %v2149 = vadd.f32 0.0, %v2148
    %v2150 = vpop.f32.mrf.mxu0
    %2151 = vmatprep.mubr.f32.mxu0 0.0
    %2152 = vmatmul.mubr.f32.gmra.mxu0 %v2069
    %v2153 = vpop.f32.mrf.mxu0
    %v2154 = vadd.f32 0.0, %v2153
    %v2155 = vpop.f32.mrf.mxu0
    %2156 = vdwg.mxu0
    %v2157 = vmul.f32 %v2144, 0.35355338
    %v2158 = vmul.f32 %v2149, 0.35355338
    %v2159 = vmul.f32 %v2154, 0.35355338
    %v2160 = vsel %vm1496, %v2157, -inf
    %2161 = vmax.xlane.f32.xlu0 %v2160
    %v2162 = vpop.xlane.xlu0 %2161
    %v2163 = vsel %vm1496, %v2158, -inf
    %2164 = vmax.xlane.f32.xlu0 %v2163
    %v2165 = vpop.xlane.xlu0 %2164
    %v2166 = vsel %vm1496, %v2159, -inf
    %2167 = vmax.xlane.f32.xlu0 %v2166
    %v2168 = vpop.xlane.xlu0 %2167
    %v2169 = vsub.f32 %v2157, %v2162
    %v2170 = vsub.f32 %v2158, %v2165
    %v2171 = vsub.f32 %v2159, %v2168
    %v2172 = vmul.f32 %v2169, 1.442695
    %v2173 = vpow.pop %v2172
    %v2174 = vmul.f32 %v2170, 1.442695
    %v2175 = vpow.pop %v2174
    %v2176 = vmul.f32 %v2171, 1.442695
    %v2177 = vpow.pop %v2176
    %v2178 = vsel %vm1496, %v2173, 0.0
    %2179 = vadd.xlane.f32.xlu0 %v2178
    %v2180 = vpop.xlane.xlu0 %2179
    %v2181 = vsel %vm1496, %v2175, 0.0
    %2182 = vadd.xlane.f32.xlu0 %v2181
    %v2183 = vpop.xlane.xlu0 %2182
    %v2184 = vsel %vm1496, %v2177, 0.0
    %2185 = vadd.xlane.f32.xlu0 %v2184
    %v2186 = vpop.xlane.xlu0 %2185
    %v2187 = vrcp.pop %v2180
    %v2188 = vrcp.pop %v2183
    %v2189 = vrcp.pop %v2186
    %v2190 = vmul.f32 %v2173, %v2187
    %v2191 = vmul.f32 %v2175, %v2188
    %v2192 = vmul.f32 %v2177, %v2189
    %2193 = vrot.lane.b32.xlu0 %v1266, 48
    %v2194 = vpop.permute.xlu0 %2193
    %2195 = vrot.lane.b32.xlu0 %v1271, 48
    %v2196 = vpop.permute.xlu0 %2195
    %2197 = vrot.lane.b32.xlu0 %v1276, 48
    %v2198 = vpop.permute.xlu0 %2197
    %v2203 = vsel %vm1496, %v2190, 0
    %v2206 = vsel %vm1496, %v2191, 0
    %v2209 = vsel %vm1496, %v2192, 0
    %2211 = vmatprep.subr.mxu0 0.0
    %2212 = vmatpush1.msra.mxu0 0.0
    %2213 = vmatprep.subr.mxu0 0.0
    %2214 = vmatpush1.msra.mxu0 0.0
    %2215 = vmatprep.subr.mxu0 0.0
    %2216 = vmatpush1.msra.mxu0 0.0
    %2217 = vmatprep.subr.mxu0 0.0
    %2218 = vmatpush1.msra.mxu0 0.0
    %2219 = vmatprep.subr.mxu0 0.0
    %2220 = vmatpush1.msra.mxu0 0.0
    %2221 = vmatprep.subr.mxu0 0.0
    %2222 = vmatpush1.msra.mxu0 0.0
    %2223 = vmatprep.subr.mxu0 0.0
    %2224 = vmatpush1.msra.mxu0 0.0
    %2225 = vmatprep.subr.mxu0 0.0
    %2226 = vmatpush1.msra.mxu0 0.0
    %2227 = vmatprep.subr.mxu0 0.0
    %2228 = vmatpush1.msra.mxu0 0.0
    %2229 = vmatprep.subr.mxu0 0.0
    %2230 = vmatpush1.msra.mxu0 0.0
    %2231 = vmatprep.subr.mxu0 0.0
    %2232 = vmatpush1.msra.mxu0 0.0
    %2233 = vmatprep.subr.mxu0 0.0
    %2234 = vmatpush1.msra.mxu0 0.0
    %2235 = vmatprep.subr.mxu0 0.0
    %2236 = vmatpush1.msra.mxu0 0.0
    %2237 = vmatprep.subr.mxu0 0.0
    %2238 = vmatpush1.msra.mxu0 %v2198
    %2239 = vmatprep.subr.mxu0 0.0
    %2240 = vmatpush1.msra.mxu0 %v2196
    %2241 = vmatprep.subr.mxu0 0.0
    %2242 = vmatpush1.msra.mxu0 %v2194
    %2243 = vmatprep.subr.mxu0 0.0
    %2244 = vmatpush2.msra.mxu0 0.0
    %2245 = vmatprep.subr.mxu0 0.0
    %2246 = vmatpush2.msra.mxu0 0.0
    %2247 = vmatprep.subr.mxu0 0.0
    %2248 = vmatpush2.msra.mxu0 0.0
    %2249 = vmatprep.subr.mxu0 0.0
    %2250 = vmatpush2.msra.mxu0 0.0
    %2251 = vmatprep.subr.mxu0 0.0
    %2252 = vmatpush2.msra.mxu0 0.0
    %2253 = vmatprep.subr.mxu0 0.0
    %2254 = vmatpush2.msra.mxu0 0.0
    %2255 = vmatprep.subr.mxu0 0.0
    %2256 = vmatpush2.msra.mxu0 0.0
    %2257 = vmatprep.subr.mxu0 0.0
    %2258 = vmatpush2.msra.mxu0 0.0
    %2259 = vmatprep.subr.mxu0 0.0
    %2260 = vmatpush2.msra.mxu0 0.0
    %2261 = vmatprep.subr.mxu0 0.0
    %2262 = vmatpush2.msra.mxu0 0.0
    %2263 = vmatprep.subr.mxu0 0.0
    %2264 = vmatpush2.msra.mxu0 0.0
    %2265 = vmatprep.subr.mxu0 0.0
    %2266 = vmatpush2.msra.mxu0 0.0
    %2267 = vmatprep.subr.mxu0 0.0
    %2268 = vmatpush2.msra.mxu0 0.0
    %2269 = vmatprep.subr.mxu0 0.0
    %2270 = vmatpush2.msra.mxu0 0.0
    %2271 = vmatprep.subr.mxu0 0.0
    %2272 = vmatpush2.msra.mxu0 0.0
    %2273 = vmatprep.subr.mxu0 0.0
    %2274 = vmatpush2.msra.mxu0 0.0
    %2275 = vmatprep.mubr.f32.mxu0 0.0
    %2276 = vmatmul.mubr.f32.gmra.mxu0 %v2203
    %v2277 = vpop.f32.mrf.mxu0
    %v2278 = vadd.f32 0.0, %v2277
    %v2279 = vpop.f32.mrf.mxu0
    %2280 = vmatprep.mubr.f32.mxu0 0.0
    %2281 = vmatmul.mubr.f32.gmra.mxu0 %v2206
    %v2282 = vpop.f32.mrf.mxu0
    %v2283 = vadd.f32 0.0, %v2282
    %v2284 = vpop.f32.mrf.mxu0
    %2285 = vmatprep.mubr.f32.mxu0 0.0
    %2286 = vmatmul.mubr.f32.gmra.mxu0 %v2209
    %v2287 = vpop.f32.mrf.mxu0
    %v2288 = vadd.f32 0.0, %v2287
    %v2289 = vpop.f32.mrf.mxu0
    %2290 = vdwg.mxu0
    %v2292 = vsel %vm1400, %v2278, 0
    %v2295 = vsel %vm1400, %v2283, 0
    %v2298 = vsel %vm1400, %v2288, 0
    %2300 = vmatprep.subr.mxu0 0.0
    %2301 = vmatpush1.msra.mxu0 0.0
    %2302 = vmatprep.subr.mxu0 0.0
    %2303 = vmatpush1.msra.mxu0 0.0
    %2304 = vmatprep.subr.mxu0 0.0
    %2305 = vmatpush1.msra.mxu0 0.0
    %2306 = vmatprep.subr.mxu0 0.0
    %2307 = vmatpush1.msra.mxu0 0.0
    %2308 = vmatprep.subr.mxu0 0.0
    %2309 = vmatpush1.msra.mxu0 0.0
    %2310 = vmatprep.subr.mxu0 0.0
    %2311 = vmatpush1.msra.mxu0 0.0
    %2312 = vmatprep.subr.mxu0 0.0
    %2313 = vmatpush1.msra.mxu0 0.0
    %2314 = vmatprep.subr.mxu0 0.0
    %2315 = vmatpush1.msra.mxu0 0.0
    %2316 = vmatprep.subr.mxu0 0.0
    %2317 = vmatpush1.msra.mxu0 0.0
    %2318 = vmatprep.subr.mxu0 0.0
    %2319 = vmatpush1.msra.mxu0 0.0
    %2320 = vmatprep.subr.mxu0 0.0
    %2321 = vmatpush1.msra.mxu0 0.0
    %2322 = vmatprep.subr.mxu0 0.0
    %2323 = vmatpush1.msra.mxu0 0.0
    %2324 = vmatprep.subr.mxu0 0.0
    %2325 = vmatpush1.msra.mxu0 0.0
    %2326 = vmatprep.subr.mxu0 0.0
    %2327 = vmatpush1.msra.mxu0 0.0
    %2328 = vmatprep.subr.mxu0 0.0
    %2329 = vmatpush1.msra.mxu0 0.0
    %2330 = vmatprep.subr.mxu0 0.0
    %2331 = vmatpush1.msra.mxu0 %v1381
    %2332 = vmatprep.subr.mxu0 0.0
    %2333 = vmatpush2.msra.mxu0 0.0
    %2334 = vmatprep.subr.mxu0 0.0
    %2335 = vmatpush2.msra.mxu0 0.0
    %2336 = vmatprep.subr.mxu0 0.0
    %2337 = vmatpush2.msra.mxu0 0.0
    %2338 = vmatprep.subr.mxu0 0.0
    %2339 = vmatpush2.msra.mxu0 0.0
    %2340 = vmatprep.subr.mxu0 0.0
    %2341 = vmatpush2.msra.mxu0 0.0
    %2342 = vmatprep.subr.mxu0 0.0
    %2343 = vmatpush2.msra.mxu0 0.0
    %2344 = vmatprep.subr.mxu0 0.0
    %2345 = vmatpush2.msra.mxu0 0.0
    %2346 = vmatprep.subr.mxu0 0.0
    %2347 = vmatpush2.msra.mxu0 0.0
    %2348 = vmatprep.subr.mxu0 0.0
    %2349 = vmatpush2.msra.mxu0 0.0
    %2350 = vmatprep.subr.mxu0 0.0
    %2351 = vmatpush2.msra.mxu0 0.0
    %2352 = vmatprep.subr.mxu0 0.0
    %2353 = vmatpush2.msra.mxu0 0.0
    %2354 = vmatprep.subr.mxu0 0.0
    %2355 = vmatpush2.msra.mxu0 0.0
    %2356 = vmatprep.subr.mxu0 0.0
    %2357 = vmatpush2.msra.mxu0 0.0
    %2358 = vmatprep.subr.mxu0 0.0
    %2359 = vmatpush2.msra.mxu0 0.0
    %2360 = vmatprep.subr.mxu0 0.0
    %2361 = vmatpush2.msra.mxu0 0.0
    %2362 = vmatprep.subr.mxu0 0.0
    %2363 = vmatpush2.msra.mxu0 0.0
    %2364 = vmatprep.mubr.f32.mxu0 0.0
    %2365 = vmatmul.mubr.f32.gmra.mxu0 %v2292
    %v2366 = vpop.f32.mrf.mxu0
    %v2367 = vadd.f32 0.0, %v2366
    %v2368 = vpop.f32.mrf.mxu0
    %2369 = vmatprep.mubr.f32.mxu0 0.0
    %2370 = vmatmul.mubr.f32.gmra.mxu0 %v2295
    %v2371 = vpop.f32.mrf.mxu0
    %v2372 = vadd.f32 0.0, %v2371
    %v2373 = vpop.f32.mrf.mxu0
    %2374 = vmatprep.mubr.f32.mxu0 0.0
    %2375 = vmatmul.mubr.f32.gmra.mxu0 %v2298
    %v2376 = vpop.f32.mrf.mxu0
    %v2377 = vadd.f32 0.0, %v2376
    %v2378 = vpop.f32.mrf.mxu0
    %2379 = vdwg.mxu0
    %v2380 = vadd.f32 %v2050, %v2367
    %v2381 = vadd.f32 %v2051, %v2372
    %v2382 = vadd.f32 %v2052, %v2377
    %2383 = vrot.lane.b32.xlu0 %v1376, 104
    %v2384 = vpop.permute.xlu0 %2383
    %2385 = vrot.lane.b32.xlu0 %v1377, 104
    %v2386 = vpop.permute.xlu0 %2385
    %2387 = vrot.lane.b32.xlu0 %v1378, 104
    %v2388 = vpop.permute.xlu0 %2387
    %2389 = vrot.lane.b32.xlu0 %v1376, 72
    %v2390 = vpop.permute.xlu0 %2389
    %2391 = vrot.lane.b32.xlu0 %v1377, 72
    %v2392 = vpop.permute.xlu0 %2391
    %2393 = vrot.lane.b32.xlu0 %v1378, 72
    %v2394 = vpop.permute.xlu0 %2393
    %v2395 = vsel %vm1400, %v2384, 0
    %v2397 = vsel %vm1400, %v2386, 0
    %v2399 = vsel %vm1400, %v2388, 0
    %v2401 = vsel %vm1400, %v2390, 0
    %v2403 = vsel %vm1400, %v2392, 0
    %v2405 = vsel %vm1400, %v2394, 0
    %2407 = vmatprep.subr.mxu0 0.0
    %2408 = vmatpush1.xpose.msra.mxu0 0.0
    %2409 = vmatprep.subr.mxu0 0.0
    %2410 = vmatpush1.xpose.msra.mxu0 0.0
    %2411 = vmatprep.subr.mxu0 0.0
    %2412 = vmatpush1.xpose.msra.mxu0 0.0
    %2413 = vmatprep.subr.mxu0 0.0
    %2414 = vmatpush1.xpose.msra.mxu0 0.0
    %2415 = vmatprep.subr.mxu0 0.0
    %2416 = vmatpush1.xpose.msra.mxu0 0.0
    %2417 = vmatprep.subr.mxu0 0.0
    %2418 = vmatpush1.xpose.msra.mxu0 0.0
    %2419 = vmatprep.subr.mxu0 0.0
    %2420 = vmatpush1.xpose.msra.mxu0 0.0
    %2421 = vmatprep.subr.mxu0 0.0
    %2422 = vmatpush1.xpose.msra.mxu0 0.0
    %2423 = vmatprep.subr.mxu0 0.0
    %2424 = vmatpush1.xpose.msra.mxu0 0.0
    %2425 = vmatprep.subr.mxu0 0.0
    %2426 = vmatpush1.xpose.msra.mxu0 0.0
    %2427 = vmatprep.subr.mxu0 0.0
    %2428 = vmatpush1.xpose.msra.mxu0 0.0
    %2429 = vmatprep.subr.mxu0 0.0
    %2430 = vmatpush1.xpose.msra.mxu0 0.0
    %2431 = vmatprep.subr.mxu0 0.0
    %2432 = vmatpush1.xpose.msra.mxu0 0.0
    %2433 = vmatprep.subr.mxu0 0.0
    %2434 = vmatpush1.xpose.msra.mxu0 %v2405
    %2435 = vmatprep.subr.mxu0 0.0
    %2436 = vmatpush1.xpose.msra.mxu0 %v2403
    %2437 = vmatprep.subr.mxu0 0.0
    %2438 = vmatpush1.xpose.msra.mxu0 %v2401
    %2439 = vmatprep.subr.mxu0 0.0
    %2440 = vmatpush2.xpose.msra.mxu0 0.0
    %2441 = vmatprep.subr.mxu0 0.0
    %2442 = vmatpush2.xpose.msra.mxu0 0.0
    %2443 = vmatprep.subr.mxu0 0.0
    %2444 = vmatpush2.xpose.msra.mxu0 0.0
    %2445 = vmatprep.subr.mxu0 0.0
    %2446 = vmatpush2.xpose.msra.mxu0 0.0
    %2447 = vmatprep.subr.mxu0 0.0
    %2448 = vmatpush2.xpose.msra.mxu0 0.0
    %2449 = vmatprep.subr.mxu0 0.0
    %2450 = vmatpush2.xpose.msra.mxu0 0.0
    %2451 = vmatprep.subr.mxu0 0.0
    %2452 = vmatpush2.xpose.msra.mxu0 0.0
    %2453 = vmatprep.subr.mxu0 0.0
    %2454 = vmatpush2.xpose.msra.mxu0 0.0
    %2455 = vmatprep.subr.mxu0 0.0
    %2456 = vmatpush2.xpose.msra.mxu0 0.0
    %2457 = vmatprep.subr.mxu0 0.0
    %2458 = vmatpush2.xpose.msra.mxu0 0.0
    %2459 = vmatprep.subr.mxu0 0.0
    %2460 = vmatpush2.xpose.msra.mxu0 0.0
    %2461 = vmatprep.subr.mxu0 0.0
    %2462 = vmatpush2.xpose.msra.mxu0 0.0
    %2463 = vmatprep.subr.mxu0 0.0
    %2464 = vmatpush2.xpose.msra.mxu0 0.0
    %2465 = vmatprep.subr.mxu0 0.0
    %2466 = vmatpush2.xpose.msra.mxu0 0.0
    %2467 = vmatprep.subr.mxu0 0.0
    %2468 = vmatpush2.xpose.msra.mxu0 0.0
    %2469 = vmatprep.subr.mxu0 0.0
    %2470 = vmatpush2.xpose.msra.mxu0 0.0
    %2471 = vmatprep.mubr.f32.mxu0 0.0
    %2472 = vmatmul.mubr.f32.gmra.mxu0 %v2395
    %v2473 = vpop.f32.mrf.mxu0
    %v2474 = vadd.f32 0.0, %v2473
    %v2475 = vpop.f32.mrf.mxu0
    %2476 = vmatprep.mubr.f32.mxu0 0.0
    %2477 = vmatmul.mubr.f32.gmra.mxu0 %v2397
    %v2478 = vpop.f32.mrf.mxu0
    %v2479 = vadd.f32 0.0, %v2478
    %v2480 = vpop.f32.mrf.mxu0
    %2481 = vmatprep.mubr.f32.mxu0 0.0
    %2482 = vmatmul.mubr.f32.gmra.mxu0 %v2399
    %v2483 = vpop.f32.mrf.mxu0
    %v2484 = vadd.f32 0.0, %v2483
    %v2485 = vpop.f32.mrf.mxu0
    %2486 = vdwg.mxu0
    %v2487 = vmul.f32 %v2474, 0.35355338
    %v2488 = vmul.f32 %v2479, 0.35355338
    %v2489 = vmul.f32 %v2484, 0.35355338
    %v2490 = vsel %vm1496, %v2487, -inf
    %2491 = vmax.xlane.f32.xlu0 %v2490
    %v2492 = vpop.xlane.xlu0 %2491
    %v2493 = vsel %vm1496, %v2488, -inf
    %2494 = vmax.xlane.f32.xlu0 %v2493
    %v2495 = vpop.xlane.xlu0 %2494
    %v2496 = vsel %vm1496, %v2489, -inf
    %2497 = vmax.xlane.f32.xlu0 %v2496
    %v2498 = vpop.xlane.xlu0 %2497
    %v2499 = vsub.f32 %v2487, %v2492
    %v2500 = vsub.f32 %v2488, %v2495
    %v2501 = vsub.f32 %v2489, %v2498
    %v2502 = vmul.f32 %v2499, 1.442695
    %v2503 = vpow.pop %v2502
    %v2504 = vmul.f32 %v2500, 1.442695
    %v2505 = vpow.pop %v2504
    %v2506 = vmul.f32 %v2501, 1.442695
    %v2507 = vpow.pop %v2506
    %v2508 = vsel %vm1496, %v2503, 0.0
    %2509 = vadd.xlane.f32.xlu0 %v2508
    %v2510 = vpop.xlane.xlu0 %2509
    %v2511 = vsel %vm1496, %v2505, 0.0
    %2512 = vadd.xlane.f32.xlu0 %v2511
    %v2513 = vpop.xlane.xlu0 %2512
    %v2514 = vsel %vm1496, %v2507, 0.0
    %2515 = vadd.xlane.f32.xlu0 %v2514
    %v2516 = vpop.xlane.xlu0 %2515
    %v2517 = vrcp.pop %v2510
    %v2518 = vrcp.pop %v2513
    %v2519 = vrcp.pop %v2516
    %v2520 = vmul.f32 %v2503, %v2517
    %v2521 = vmul.f32 %v2505, %v2518
    %v2522 = vmul.f32 %v2507, %v2519
    %2523 = vrot.lane.b32.xlu0 %v1266, 40
    %v2524 = vpop.permute.xlu0 %2523
    %2525 = vrot.lane.b32.xlu0 %v1271, 40
    %v2526 = vpop.permute.xlu0 %2525
    %2527 = vrot.lane.b32.xlu0 %v1276, 40
    %v2528 = vpop.permute.xlu0 %2527
    %v2533 = vsel %vm1496, %v2520, 0
    %v2536 = vsel %vm1496, %v2521, 0
    %v2539 = vsel %vm1496, %v2522, 0
    %2541 = vmatprep.subr.mxu0 0.0
    %2542 = vmatpush1.msra.mxu0 0.0
    %2543 = vmatprep.subr.mxu0 0.0
    %2544 = vmatpush1.msra.mxu0 0.0
    %2545 = vmatprep.subr.mxu0 0.0
    %2546 = vmatpush1.msra.mxu0 0.0
    %2547 = vmatprep.subr.mxu0 0.0
    %2548 = vmatpush1.msra.mxu0 0.0
    %2549 = vmatprep.subr.mxu0 0.0
    %2550 = vmatpush1.msra.mxu0 0.0
    %2551 = vmatprep.subr.mxu0 0.0
    %2552 = vmatpush1.msra.mxu0 0.0
    %2553 = vmatprep.subr.mxu0 0.0
    %2554 = vmatpush1.msra.mxu0 0.0
    %2555 = vmatprep.subr.mxu0 0.0
    %2556 = vmatpush1.msra.mxu0 0.0
    %2557 = vmatprep.subr.mxu0 0.0
    %2558 = vmatpush1.msra.mxu0 0.0
    %2559 = vmatprep.subr.mxu0 0.0
    %2560 = vmatpush1.msra.mxu0 0.0
    %2561 = vmatprep.subr.mxu0 0.0
    %2562 = vmatpush1.msra.mxu0 0.0
    %2563 = vmatprep.subr.mxu0 0.0
    %2564 = vmatpush1.msra.mxu0 0.0
    %2565 = vmatprep.subr.mxu0 0.0
    %2566 = vmatpush1.msra.mxu0 0.0
    %2567 = vmatprep.subr.mxu0 0.0
    %2568 = vmatpush1.msra.mxu0 %v2528
    %2569 = vmatprep.subr.mxu0 0.0
    %2570 = vmatpush1.msra.mxu0 %v2526
    %2571 = vmatprep.subr.mxu0 0.0
    %2572 = vmatpush1.msra.mxu0 %v2524
    %2573 = vmatprep.subr.mxu0 0.0
    %2574 = vmatpush2.msra.mxu0 0.0
    %2575 = vmatprep.subr.mxu0 0.0
    %2576 = vmatpush2.msra.mxu0 0.0
    %2577 = vmatprep.subr.mxu0 0.0
    %2578 = vmatpush2.msra.mxu0 0.0
    %2579 = vmatprep.subr.mxu0 0.0
    %2580 = vmatpush2.msra.mxu0 0.0
    %2581 = vmatprep.subr.mxu0 0.0
    %2582 = vmatpush2.msra.mxu0 0.0
    %2583 = vmatprep.subr.mxu0 0.0
    %2584 = vmatpush2.msra.mxu0 0.0
    %2585 = vmatprep.subr.mxu0 0.0
    %2586 = vmatpush2.msra.mxu0 0.0
    %2587 = vmatprep.subr.mxu0 0.0
    %2588 = vmatpush2.msra.mxu0 0.0
    %2589 = vmatprep.subr.mxu0 0.0
    %2590 = vmatpush2.msra.mxu0 0.0
    %2591 = vmatprep.subr.mxu0 0.0
    %2592 = vmatpush2.msra.mxu0 0.0
    %2593 = vmatprep.subr.mxu0 0.0
    %2594 = vmatpush2.msra.mxu0 0.0
    %2595 = vmatprep.subr.mxu0 0.0
    %2596 = vmatpush2.msra.mxu0 0.0
    %2597 = vmatprep.subr.mxu0 0.0
    %2598 = vmatpush2.msra.mxu0 0.0
    %2599 = vmatprep.subr.mxu0 0.0
    %2600 = vmatpush2.msra.mxu0 0.0
    %2601 = vmatprep.subr.mxu0 0.0
    %2602 = vmatpush2.msra.mxu0 0.0
    %2603 = vmatprep.subr.mxu0 0.0
    %2604 = vmatpush2.msra.mxu0 0.0
    %2605 = vmatprep.mubr.f32.mxu0 0.0
    %2606 = vmatmul.mubr.f32.gmra.mxu0 %v2533
    %v2607 = vpop.f32.mrf.mxu0
    %v2608 = vadd.f32 0.0, %v2607
    %v2609 = vpop.f32.mrf.mxu0
    %2610 = vmatprep.mubr.f32.mxu0 0.0
    %2611 = vmatmul.mubr.f32.gmra.mxu0 %v2536
    %v2612 = vpop.f32.mrf.mxu0
    %v2613 = vadd.f32 0.0, %v2612
    %v2614 = vpop.f32.mrf.mxu0
    %2615 = vmatprep.mubr.f32.mxu0 0.0
    %2616 = vmatmul.mubr.f32.gmra.mxu0 %v2539
    %v2617 = vpop.f32.mrf.mxu0
    %v2618 = vadd.f32 0.0, %v2617
    %v2619 = vpop.f32.mrf.mxu0
    %2620 = vdwg.mxu0
    %v2622 = vsel %vm1400, %v2608, 0
    %v2625 = vsel %vm1400, %v2613, 0
    %v2628 = vsel %vm1400, %v2618, 0
    %2630 = vmatprep.subr.mxu0 0.0
    %2631 = vmatpush1.msra.mxu0 0.0
    %2632 = vmatprep.subr.mxu0 0.0
    %2633 = vmatpush1.msra.mxu0 0.0
    %2634 = vmatprep.subr.mxu0 0.0
    %2635 = vmatpush1.msra.mxu0 0.0
    %2636 = vmatprep.subr.mxu0 0.0
    %2637 = vmatpush1.msra.mxu0 0.0
    %2638 = vmatprep.subr.mxu0 0.0
    %2639 = vmatpush1.msra.mxu0 0.0
    %2640 = vmatprep.subr.mxu0 0.0
    %2641 = vmatpush1.msra.mxu0 0.0
    %2642 = vmatprep.subr.mxu0 0.0
    %2643 = vmatpush1.msra.mxu0 0.0
    %2644 = vmatprep.subr.mxu0 0.0
    %2645 = vmatpush1.msra.mxu0 0.0
    %2646 = vmatprep.subr.mxu0 0.0
    %2647 = vmatpush1.msra.mxu0 0.0
    %2648 = vmatprep.subr.mxu0 0.0
    %2649 = vmatpush1.msra.mxu0 0.0
    %2650 = vmatprep.subr.mxu0 0.0
    %2651 = vmatpush1.msra.mxu0 0.0
    %2652 = vmatprep.subr.mxu0 0.0
    %2653 = vmatpush1.msra.mxu0 0.0
    %2654 = vmatprep.subr.mxu0 0.0
    %2655 = vmatpush1.msra.mxu0 0.0
    %2656 = vmatprep.subr.mxu0 0.0
    %2657 = vmatpush1.msra.mxu0 0.0
    %2658 = vmatprep.subr.mxu0 0.0
    %2659 = vmatpush1.msra.mxu0 0.0
    %2660 = vmatprep.subr.mxu0 0.0
    %2661 = vmatpush1.msra.mxu0 %v1382
    %2662 = vmatprep.subr.mxu0 0.0
    %2663 = vmatpush2.msra.mxu0 0.0
    %2664 = vmatprep.subr.mxu0 0.0
    %2665 = vmatpush2.msra.mxu0 0.0
    %2666 = vmatprep.subr.mxu0 0.0
    %2667 = vmatpush2.msra.mxu0 0.0
    %2668 = vmatprep.subr.mxu0 0.0
    %2669 = vmatpush2.msra.mxu0 0.0
    %2670 = vmatprep.subr.mxu0 0.0
    %2671 = vmatpush2.msra.mxu0 0.0
    %2672 = vmatprep.subr.mxu0 0.0
    %2673 = vmatpush2.msra.mxu0 0.0
    %2674 = vmatprep.subr.mxu0 0.0
    %2675 = vmatpush2.msra.mxu0 0.0
    %2676 = vmatprep.subr.mxu0 0.0
    %2677 = vmatpush2.msra.mxu0 0.0
    %2678 = vmatprep.subr.mxu0 0.0
    %2679 = vmatpush2.msra.mxu0 0.0
    %2680 = vmatprep.subr.mxu0 0.0
    %2681 = vmatpush2.msra.mxu0 0.0
    %2682 = vmatprep.subr.mxu0 0.0
    %2683 = vmatpush2.msra.mxu0 0.0
    %2684 = vmatprep.subr.mxu0 0.0
    %2685 = vmatpush2.msra.mxu0 0.0
    %2686 = vmatprep.subr.mxu0 0.0
    %2687 = vmatpush2.msra.mxu0 0.0
    %2688 = vmatprep.subr.mxu0 0.0
    %2689 = vmatpush2.msra.mxu0 0.0
    %2690 = vmatprep.subr.mxu0 0.0
    %2691 = vmatpush2.msra.mxu0 0.0
    %2692 = vmatprep.subr.mxu0 0.0
    %2693 = vmatpush2.msra.mxu0 0.0
    %2694 = vmatprep.mubr.f32.mxu0 0.0
    %2695 = vmatmul.mubr.f32.gmra.mxu0 %v2622
    %v2696 = vpop.f32.mrf.mxu0
    %v2697 = vadd.f32 0.0, %v2696
    %v2698 = vpop.f32.mrf.mxu0
    %2699 = vmatprep.mubr.f32.mxu0 0.0
    %2700 = vmatmul.mubr.f32.gmra.mxu0 %v2625
    %v2701 = vpop.f32.mrf.mxu0
    %v2702 = vadd.f32 0.0, %v2701
    %v2703 = vpop.f32.mrf.mxu0
    %2704 = vmatprep.mubr.f32.mxu0 0.0
    %2705 = vmatmul.mubr.f32.gmra.mxu0 %v2628
    %v2706 = vpop.f32.mrf.mxu0
    %v2707 = vadd.f32 0.0, %v2706
    %v2708 = vpop.f32.mrf.mxu0
    %2709 = vdwg.mxu0
    %v2710 = vadd.f32 %v2380, %v2697
    %v2711 = vadd.f32 %v2381, %v2702
    %v2712 = vadd.f32 %v2382, %v2707
    %v2713 = vadd.f32 %v1111, %v2710
    %v2714 = vadd.f32 %v1112, %v2711
    %v2715 = vadd.f32 %v1113, %v2712
    %v2716 = vld [vmem:[%s49] sm:$0x1]
    %v2717 = vld [vmem:[%s51] sm:$0x1]
    %v2718 = vsel %vm816, %v2713, 0.0
    %2719 = vadd.xlane.f32.xlu0 %v2718
    %v2720 = vpop.xlane.xlu0 %2719
    %v2721 = vsel %vm816, %v2714, 0.0
    %2722 = vadd.xlane.f32.xlu0 %v2721
    %v2723 = vpop.xlane.xlu0 %2722
    %v2724 = vsel %vm816, %v2715, 0.0
    %2725 = vadd.xlane.f32.xlu0 %v2724
    %v2726 = vpop.xlane.xlu0 %2725
    %v2727 = vmul.f32 %v2720, %v1065
    %v2728 = vmul.f32 %v2723, %v1065
    %v2729 = vmul.f32 %v2726, %v1065
    %v2730 = vsub.f32 %v2713, %v2727
    %v2731 = vsub.f32 %v2714, %v2728
    %v2732 = vsub.f32 %v2715, %v2729
    %v2733 = vmul.f32 %v2730, %v2730
    %v2734 = vmul.f32 %v2731, %v2731
    %v2735 = vmul.f32 %v2732, %v2732
    %v2736 = vsel %vm816, %v2733, 0.0
    %2737 = vadd.xlane.f32.xlu0 %v2736
    %v2738 = vpop.xlane.xlu0 %2737
    %v2739 = vsel %vm816, %v2734, 0.0
    %2740 = vadd.xlane.f32.xlu0 %v2739
    %v2741 = vpop.xlane.xlu0 %2740
    %v2742 = vsel %vm816, %v2735, 0.0
    %2743 = vadd.xlane.f32.xlu0 %v2742
    %v2744 = vpop.xlane.xlu0 %2743
    %v2745 = vmul.f32 %v2738, %v1065
    %v2746 = vmul.f32 %v2741, %v1065
    %v2747 = vmul.f32 %v2744, %v1065
    %v2748 = vadd.f32 %v2745, 1e-05
    %v2749 = vadd.f32 %v2746, 1e-05
    %v2750 = vadd.f32 %v2747, 1e-05
    %v2751 = vrsqrt.pop %v2748
    %v2752 = vrsqrt.pop %v2749
    %v2753 = vrsqrt.pop %v2750
    %v2754 = vmul.f32 %v2730, %v2751
    %v2755 = vmul.f32 %v2731, %v2752
    %v2756 = vmul.f32 %v2732, %v2753
    %v2758 = vlaneseq
    %v2759 = vshrl.u32 %v2758, 7
    %v2760 = vsub.s32 0, %v2759
    %v2761 = vrot.slane %v2716, %v2760
    %v2763 = vmul.f32 %v2754, %v2761
    %v2764 = vmul.f32 %v2755, %v2761
    %v2765 = vmul.f32 %v2756, %v2761
    %v2767 = vlaneseq
    %v2768 = vshrl.u32 %v2767, 7
    %v2769 = vsub.s32 0, %v2768
    %v2770 = vrot.slane %v2717, %v2769
    %v2772 = vadd.f32 %v2763, %v2770
    %v2773 = vadd.f32 %v2764, %v2770
    %v2774 = vadd.f32 %v2765, %v2770
    %v2775 = vld [vmem:[%s53] sm:$0xff]
    %v2776 = vld [vmem:[%s53 + $0x8] sm:$0xff]
    %v2777 = vld [vmem:[%s53 + $0x10] sm:$0xff]
    %v2778 = vld [vmem:[%s53 + $0x18] sm:$0xff]
    %v2779 = vld [vmem:[%s55] sm:$0x1]
    %v2781 = vlaneseq
    %v2782 = vshrl.u32 %v2781, 7
    %v2783 = vsub.s32 0, %v2782
    %v2784 = vrot.slane %v2779, %v2783
    %v2787 = vsel %vm816, %v2772, 0
    %v2790 = vsel %vm816, %v2773, 0
    %v2793 = vsel %vm816, %v2774, 0
    %2795 = vmatprep.subr.mxu0 0.0
    %2796 = vmatpush1.msra.mxu0 0.0
    %2797 = vmatprep.subr.mxu0 0.0
    %2798 = vmatpush1.msra.mxu0 0.0
    %2799 = vmatprep.subr.mxu0 0.0
    %2800 = vmatpush1.msra.mxu0 0.0
    %2801 = vmatprep.subr.mxu0 0.0
    %2802 = vmatpush1.msra.mxu0 0.0
    %2803 = vmatprep.subr.mxu0 0.0
    %2804 = vmatpush1.msra.mxu0 0.0
    %2805 = vmatprep.subr.mxu0 0.0
    %2806 = vmatpush1.msra.mxu0 0.0
    %2807 = vmatprep.subr.mxu0 0.0
    %2808 = vmatpush1.msra.mxu0 0.0
    %2809 = vmatprep.subr.mxu0 0.0
    %2810 = vmatpush1.msra.mxu0 0.0
    %2811 = vmatprep.subr.mxu0 0.0
    %2812 = vmatpush1.msra.mxu0 0.0
    %2813 = vmatprep.subr.mxu0 0.0
    %2814 = vmatpush1.msra.mxu0 0.0
    %2815 = vmatprep.subr.mxu0 0.0
    %2816 = vmatpush1.msra.mxu0 0.0
    %2817 = vmatprep.subr.mxu0 0.0
    %2818 = vmatpush1.msra.mxu0 0.0
    %2819 = vmatprep.subr.mxu0 0.0
    %2820 = vmatpush1.msra.mxu0 %v2778
    %2821 = vmatprep.subr.mxu0 0.0
    %2822 = vmatpush1.msra.mxu0 %v2777
    %2823 = vmatprep.subr.mxu0 0.0
    %2824 = vmatpush1.msra.mxu0 %v2776
    %2825 = vmatprep.subr.mxu0 0.0
    %2826 = vmatpush1.msra.mxu0 %v2775
    %2827 = vmatprep.subr.mxu0 0.0
    %2828 = vmatpush2.msra.mxu0 0.0
    %2829 = vmatprep.subr.mxu0 0.0
    %2830 = vmatpush2.msra.mxu0 0.0
    %2831 = vmatprep.subr.mxu0 0.0
    %2832 = vmatpush2.msra.mxu0 0.0
    %2833 = vmatprep.subr.mxu0 0.0
    %2834 = vmatpush2.msra.mxu0 0.0
    %2835 = vmatprep.subr.mxu0 0.0
    %2836 = vmatpush2.msra.mxu0 0.0
    %2837 = vmatprep.subr.mxu0 0.0
    %2838 = vmatpush2.msra.mxu0 0.0
    %2839 = vmatprep.subr.mxu0 0.0
    %2840 = vmatpush2.msra.mxu0 0.0
    %2841 = vmatprep.subr.mxu0 0.0
    %2842 = vmatpush2.msra.mxu0 0.0
    %2843 = vmatprep.subr.mxu0 0.0
    %2844 = vmatpush2.msra.mxu0 0.0
    %2845 = vmatprep.subr.mxu0 0.0
    %2846 = vmatpush2.msra.mxu0 0.0
    %2847 = vmatprep.subr.mxu0 0.0
    %2848 = vmatpush2.msra.mxu0 0.0
    %2849 = vmatprep.subr.mxu0 0.0
    %2850 = vmatpush2.msra.mxu0 0.0
    %2851 = vmatprep.subr.mxu0 0.0
    %2852 = vmatpush2.msra.mxu0 0.0
    %2853 = vmatprep.subr.mxu0 0.0
    %2854 = vmatpush2.msra.mxu0 0.0
    %2855 = vmatprep.subr.mxu0 0.0
    %2856 = vmatpush2.msra.mxu0 0.0
    %2857 = vmatprep.subr.mxu0 0.0
    %2858 = vmatpush2.msra.mxu0 0.0
    %2859 = vmatprep.mubr.f32.mxu0 0.0
    %2860 = vmatmul.mubr.f32.gmra.mxu0 %v2787
    %v2861 = vpop.f32.mrf.mxu0
    %v2862 = vadd.f32 %v2784, %v2861
    %v2863 = vpop.f32.mrf.mxu0
    %2864 = vmatprep.mubr.f32.mxu0 0.0
    %2865 = vmatmul.mubr.f32.gmra.mxu0 %v2790
    %v2866 = vpop.f32.mrf.mxu0
    %v2867 = vadd.f32 %v2784, %v2866
    %v2868 = vpop.f32.mrf.mxu0
    %2869 = vmatprep.mubr.f32.mxu0 0.0
    %2870 = vmatmul.mubr.f32.gmra.mxu0 %v2793
    %v2871 = vpop.f32.mrf.mxu0
    %v2872 = vadd.f32 %v2784, %v2871
    %v2873 = vpop.f32.mrf.mxu0
    %2874 = vdwg.mxu0
    %v2875 = vmul.f32 %v2862, %v2862
    %v2876 = vmul.f32 %v2867, %v2867
    %v2877 = vmul.f32 %v2872, %v2872
    %v2878 = vmul.f32 %v2862, %v2875
    %v2879 = vmul.f32 %v2867, %v2876
    %v2880 = vmul.f32 %v2872, %v2877
    %v2881 = vmul.f32 %v2878, 0.044715
    %v2882 = vmul.f32 %v2879, 0.044715
    %v2883 = vmul.f32 %v2880, 0.044715
    %v2884 = vadd.f32 %v2862, %v2881
    %v2885 = vadd.f32 %v2867, %v2882
    %v2886 = vadd.f32 %v2872, %v2883
    %v2887 = vmul.f32 %v2884, 0.7978846
    %v2888 = vmul.f32 %v2885, 0.7978846
    %v2889 = vmul.f32 %v2886, 0.7978846
    %v2890 = vtanh.pop %v2887
    %v2891 = vtanh.pop %v2888
    %v2892 = vtanh.pop %v2889
    %v2893 = vadd.f32 %v2890, 1.0
    %v2894 = vadd.f32 %v2891, 1.0
    %v2895 = vadd.f32 %v2892, 1.0
    %v2896 = vmul.f32 %v2893, 0.5
    %v2897 = vmul.f32 %v2894, 0.5
    %v2898 = vmul.f32 %v2895, 0.5
    %v2899 = vmul.f32 %v2862, %v2896
    %v2900 = vmul.f32 %v2867, %v2897
    %v2901 = vmul.f32 %v2872, %v2898
    %v2902 = vld [vmem:[%s57] sm:$0xff]
    %v2903 = vld [vmem:[%s57 + $0x8] sm:$0xff]
    %v2904 = vld [vmem:[%s57 + $0x10] sm:$0xff]
    %v2905 = vld [vmem:[%s57 + $0x18] sm:$0xff]
    %v2906 = vld [vmem:[%s57 + $0x20] sm:$0xff]
    %v2907 = vld [vmem:[%s57 + $0x28] sm:$0xff]
    %v2908 = vld [vmem:[%s57 + $0x30] sm:$0xff]
    %v2909 = vld [vmem:[%s57 + $0x38] sm:$0xff]
    %v2910 = vld [vmem:[%s57 + $0x40] sm:$0xff]
    %v2911 = vld [vmem:[%s57 + $0x48] sm:$0xff]
    %v2912 = vld [vmem:[%s57 + $0x50] sm:$0xff]
    %v2913 = vld [vmem:[%s57 + $0x58] sm:$0xff]
    %v2914 = vld [vmem:[%s57 + $0x60] sm:$0xff]
    %v2915 = vld [vmem:[%s57 + $0x68] sm:$0xff]
    %v2916 = vld [vmem:[%s57 + $0x70] sm:$0xff]
    %v2917 = vld [vmem:[%s57 + $0x78] sm:$0xff]
    %2918 = vmatprep.subr.mxu0 0.0
    %2919 = vmatpush1.msra.mxu0 %v2917
    %2920 = vmatprep.subr.mxu0 0.0
    %2921 = vmatpush1.msra.mxu0 %v2916
    %2922 = vmatprep.subr.mxu0 0.0
    %2923 = vmatpush1.msra.mxu0 %v2915
    %2924 = vmatprep.subr.mxu0 0.0
    %2925 = vmatpush1.msra.mxu0 %v2914
    %2926 = vmatprep.subr.mxu0 0.0
    %2927 = vmatpush1.msra.mxu0 %v2913
    %2928 = vmatprep.subr.mxu0 0.0
    %2929 = vmatpush1.msra.mxu0 %v2912
    %2930 = vmatprep.subr.mxu0 0.0
    %2931 = vmatpush1.msra.mxu0 %v2911
    %2932 = vmatprep.subr.mxu0 0.0
    %2933 = vmatpush1.msra.mxu0 %v2910
    %2934 = vmatprep.subr.mxu0 0.0
    %2935 = vmatpush1.msra.mxu0 %v2909
    %2936 = vmatprep.subr.mxu0 0.0
    %2937 = vmatpush1.msra.mxu0 %v2908
    %2938 = vmatprep.subr.mxu0 0.0
    %2939 = vmatpush1.msra.mxu0 %v2907
    %2940 = vmatprep.subr.mxu0 0.0
    %2941 = vmatpush1.msra.mxu0 %v2906
    %2942 = vmatprep.subr.mxu0 0.0
    %2943 = vmatpush1.msra.mxu0 %v2905
    %2944 = vmatprep.subr.mxu0 0.0
    %2945 = vmatpush1.msra.mxu0 %v2904
    %2946 = vmatprep.subr.mxu0 0.0
    %2947 = vmatpush1.msra.mxu0 %v2903
    %2948 = vmatprep.subr.mxu0 0.0
    %2949 = vmatpush1.msra.mxu0 %v2902
    %2950 = vmatprep.subr.mxu0 0.0
    %2951 = vmatpush2.msra.mxu0 0.0
    %2952 = vmatprep.subr.mxu0 0.0
    %2953 = vmatpush2.msra.mxu0 0.0
    %2954 = vmatprep.subr.mxu0 0.0
    %2955 = vmatpush2.msra.mxu0 0.0
    %2956 = vmatprep.subr.mxu0 0.0
    %2957 = vmatpush2.msra.mxu0 0.0
    %2958 = vmatprep.subr.mxu0 0.0
    %2959 = vmatpush2.msra.mxu0 0.0
    %2960 = vmatprep.subr.mxu0 0.0
    %2961 = vmatpush2.msra.mxu0 0.0
    %2962 = vmatprep.subr.mxu0 0.0
    %2963 = vmatpush2.msra.mxu0 0.0
    %2964 = vmatprep.subr.mxu0 0.0
    %2965 = vmatpush2.msra.mxu0 0.0
    %2966 = vmatprep.subr.mxu0 0.0
    %2967 = vmatpush2.msra.mxu0 0.0
    %2968 = vmatprep.subr.mxu0 0.0
    %2969 = vmatpush2.msra.mxu0 0.0
    %2970 = vmatprep.subr.mxu0 0.0
    %2971 = vmatpush2.msra.mxu0 0.0
    %2972 = vmatprep.subr.mxu0 0.0
    %2973 = vmatpush2.msra.mxu0 0.0
    %2974 = vmatprep.subr.mxu0 0.0
    %2975 = vmatpush2.msra.mxu0 0.0
    %2976 = vmatprep.subr.mxu0 0.0
    %2977 = vmatpush2.msra.mxu0 0.0
    %2978 = vmatprep.subr.mxu0 0.0
    %2979 = vmatpush2.msra.mxu0 0.0
    %2980 = vmatprep.subr.mxu0 0.0
    %2981 = vmatpush2.msra.mxu0 0.0
    %2982 = vmatprep.mubr.f32.mxu0 0.0
    %2983 = vmatmul.mubr.f32.gmra.mxu0 %v2899
    %v2984 = vpop.f32.mrf.mxu0
    %v2985 = vadd.f32 0.0, %v2984
    %v2986 = vpop.f32.mrf.mxu0
    %2987 = vmatprep.mubr.f32.mxu0 0.0
    %2988 = vmatmul.mubr.f32.gmra.mxu0 %v2900
    %v2989 = vpop.f32.mrf.mxu0
    %v2990 = vadd.f32 0.0, %v2989
    %v2991 = vpop.f32.mrf.mxu0
    %2992 = vmatprep.mubr.f32.mxu0 0.0
    %2993 = vmatmul.mubr.f32.gmra.mxu0 %v2901
    %v2994 = vpop.f32.mrf.mxu0
    %v2995 = vadd.f32 0.0, %v2994
    %v2996 = vpop.f32.mrf.mxu0
    %2997 = vdwg.mxu0
    %v2998 = vadd.f32 %v2713, %v2985
    %v2999 = vadd.f32 %v2714, %v2990
    %v3000 = vadd.f32 %v2715, %v2995
    %v3001 = vld [vmem:[%s59] sm:$0x1]
    %v3003 = vlaneseq
    %v3004 = vshrl.u32 %v3003, 7
    %v3005 = vsub.s32 0, %v3004
    %v3006 = vrot.slane %v3001, %v3005
    %v3008 = vadd.f32 %v2998, %v3006
    %v3009 = vadd.f32 %v2999, %v3006
    %v3010 = vadd.f32 %v3000, %v3006
    %s3011 = scalar_lea.vmem %s33, 1
    %v3012 = vld [vmem:[%s3011] sm:$0x1]
    %s3013 = scalar_lea.vmem %s35, 1
    %v3014 = vld [vmem:[%s3013] sm:$0x1]
    %v3015 = vsel %vm816, %v3008, 0.0
    %3016 = vadd.xlane.f32.xlu0 %v3015
    %v3017 = vpop.xlane.xlu0 %3016
    %v3018 = vsel %vm816, %v3009, 0.0
    %3019 = vadd.xlane.f32.xlu0 %v3018
    %v3020 = vpop.xlane.xlu0 %3019
    %v3021 = vsel %vm816, %v3010, 0.0
    %3022 = vadd.xlane.f32.xlu0 %v3021
    %v3023 = vpop.xlane.xlu0 %3022
    %v3024 = vmul.f32 %v3017, %v1065
    %v3025 = vmul.f32 %v3020, %v1065
    %v3026 = vmul.f32 %v3023, %v1065
    %v3027 = vsub.f32 %v3008, %v3024
    %v3028 = vsub.f32 %v3009, %v3025
    %v3029 = vsub.f32 %v3010, %v3026
    %v3030 = vmul.f32 %v3027, %v3027
    %v3031 = vmul.f32 %v3028, %v3028
    %v3032 = vmul.f32 %v3029, %v3029
    %v3033 = vsel %vm816, %v3030, 0.0
    %3034 = vadd.xlane.f32.xlu0 %v3033
    %v3035 = vpop.xlane.xlu0 %3034
    %v3036 = vsel %vm816, %v3031, 0.0
    %3037 = vadd.xlane.f32.xlu0 %v3036
    %v3038 = vpop.xlane.xlu0 %3037
    %v3039 = vsel %vm816, %v3032, 0.0
    %3040 = vadd.xlane.f32.xlu0 %v3039
    %v3041 = vpop.xlane.xlu0 %3040
    %v3042 = vmul.f32 %v3035, %v1065
    %v3043 = vmul.f32 %v3038, %v1065
    %v3044 = vmul.f32 %v3041, %v1065
    %v3045 = vadd.f32 %v3042, 1e-05
    %v3046 = vadd.f32 %v3043, 1e-05
    %v3047 = vadd.f32 %v3044, 1e-05
    %v3048 = vrsqrt.pop %v3045
    %v3049 = vrsqrt.pop %v3046
    %v3050 = vrsqrt.pop %v3047
    %v3051 = vmul.f32 %v3027, %v3048
    %v3052 = vmul.f32 %v3028, %v3049
    %v3053 = vmul.f32 %v3029, %v3050
    %v3055 = vlaneseq
    %v3056 = vshrl.u32 %v3055, 7
    %v3057 = vsub.s32 0, %v3056
    %v3058 = vrot.slane %v3012, %v3057
    %v3060 = vmul.f32 %v3051, %v3058
    %v3061 = vmul.f32 %v3052, %v3058
    %v3062 = vmul.f32 %v3053, %v3058
    %v3064 = vlaneseq
    %v3065 = vshrl.u32 %v3064, 7
    %v3066 = vsub.s32 0, %v3065
    %v3067 = vrot.slane %v3014, %v3066
    %v3069 = vadd.f32 %v3060, %v3067
    %v3070 = vadd.f32 %v3061, %v3067
    %v3071 = vadd.f32 %v3062, %v3067
    %s3072 = scalar_lea.vmem %s37, 32
    %v3073 = vld [vmem:[%s3072] sm:$0xff]
    %v3074 = vld [vmem:[%s3072 + $0x8] sm:$0xff]
    %v3075 = vld [vmem:[%s3072 + $0x10] sm:$0xff]
    %v3076 = vld [vmem:[%s3072 + $0x18] sm:$0xff]
    %s3077 = scalar_lea.vmem %s39, 1
    %v3078 = vld [vmem:[%s3077] sm:$0x1]
    %v3080 = vlaneseq
    %v3081 = vshrl.u32 %v3080, 7
    %v3082 = vsub.s32 0, %v3081
    %v3083 = vrot.slane %v3078, %v3082
    %v3086 = vsel %vm816, %v3069, 0
    %v3089 = vsel %vm816, %v3070, 0
    %v3092 = vsel %vm816, %v3071, 0
    %3094 = vmatprep.subr.mxu0 0.0
    %3095 = vmatpush1.msra.mxu0 0.0
    %3096 = vmatprep.subr.mxu0 0.0
    %3097 = vmatpush1.msra.mxu0 0.0
    %3098 = vmatprep.subr.mxu0 0.0
    %3099 = vmatpush1.msra.mxu0 0.0
    %3100 = vmatprep.subr.mxu0 0.0
    %3101 = vmatpush1.msra.mxu0 0.0
    %3102 = vmatprep.subr.mxu0 0.0
    %3103 = vmatpush1.msra.mxu0 0.0
    %3104 = vmatprep.subr.mxu0 0.0
    %3105 = vmatpush1.msra.mxu0 0.0
    %3106 = vmatprep.subr.mxu0 0.0
    %3107 = vmatpush1.msra.mxu0 0.0
    %3108 = vmatprep.subr.mxu0 0.0
    %3109 = vmatpush1.msra.mxu0 0.0
    %3110 = vmatprep.subr.mxu0 0.0
    %3111 = vmatpush1.msra.mxu0 0.0
    %3112 = vmatprep.subr.mxu0 0.0
    %3113 = vmatpush1.msra.mxu0 0.0
    %3114 = vmatprep.subr.mxu0 0.0
    %3115 = vmatpush1.msra.mxu0 0.0
    %3116 = vmatprep.subr.mxu0 0.0
    %3117 = vmatpush1.msra.mxu0 0.0
    %3118 = vmatprep.subr.mxu0 0.0
    %3119 = vmatpush1.msra.mxu0 %v3076
    %3120 = vmatprep.subr.mxu0 0.0
    %3121 = vmatpush1.msra.mxu0 %v3075
    %3122 = vmatprep.subr.mxu0 0.0
    %3123 = vmatpush1.msra.mxu0 %v3074
    %3124 = vmatprep.subr.mxu0 0.0
    %3125 = vmatpush1.msra.mxu0 %v3073
    %3126 = vmatprep.subr.mxu0 0.0
    %3127 = vmatpush2.msra.mxu0 0.0
    %3128 = vmatprep.subr.mxu0 0.0
    %3129 = vmatpush2.msra.mxu0 0.0
    %3130 = vmatprep.subr.mxu0 0.0
    %3131 = vmatpush2.msra.mxu0 0.0
    %3132 = vmatprep.subr.mxu0 0.0
    %3133 = vmatpush2.msra.mxu0 0.0
    %3134 = vmatprep.subr.mxu0 0.0
    %3135 = vmatpush2.msra.mxu0 0.0
    %3136 = vmatprep.subr.mxu0 0.0
    %3137 = vmatpush2.msra.mxu0 0.0
    %3138 = vmatprep.subr.mxu0 0.0
    %3139 = vmatpush2.msra.mxu0 0.0
    %3140 = vmatprep.subr.mxu0 0.0
    %3141 = vmatpush2.msra.mxu0 0.0
    %3142 = vmatprep.subr.mxu0 0.0
    %3143 = vmatpush2.msra.mxu0 0.0
    %3144 = vmatprep.subr.mxu0 0.0
    %3145 = vmatpush2.msra.mxu0 0.0
    %3146 = vmatprep.subr.mxu0 0.0
    %3147 = vmatpush2.msra.mxu0 0.0
    %3148 = vmatprep.subr.mxu0 0.0
    %3149 = vmatpush2.msra.mxu0 0.0
    %3150 = vmatprep.subr.mxu0 0.0
    %3151 = vmatpush2.msra.mxu0 0.0
    %3152 = vmatprep.subr.mxu0 0.0
    %3153 = vmatpush2.msra.mxu0 0.0
    %3154 = vmatprep.subr.mxu0 0.0
    %3155 = vmatpush2.msra.mxu0 0.0
    %3156 = vmatprep.subr.mxu0 0.0
    %3157 = vmatpush2.msra.mxu0 0.0
    %3158 = vmatprep.mubr.f32.mxu0 0.0
    %3159 = vmatmul.mubr.f32.gmra.mxu0 %v3086
    %v3160 = vpop.f32.mrf.mxu0
    %v3161 = vadd.f32 %v3083, %v3160
    %v3162 = vpop.f32.mrf.mxu0
    %3163 = vmatprep.mubr.f32.mxu0 0.0
    %3164 = vmatmul.mubr.f32.gmra.mxu0 %v3089
    %v3165 = vpop.f32.mrf.mxu0
    %v3166 = vadd.f32 %v3083, %v3165
    %v3167 = vpop.f32.mrf.mxu0
    %3168 = vmatprep.mubr.f32.mxu0 0.0
    %3169 = vmatmul.mubr.f32.gmra.mxu0 %v3092
    %v3170 = vpop.f32.mrf.mxu0
    %v3171 = vadd.f32 %v3083, %v3170
    %v3172 = vpop.f32.mrf.mxu0
    %3173 = vdwg.mxu0
    %s3174 = scalar_lea.vmem %s41, 32
    %v3175 = vld [vmem:[%s3174] sm:$0xff]
    %v3176 = vld [vmem:[%s3174 + $0x8] sm:$0xff]
    %v3177 = vld [vmem:[%s3174 + $0x10] sm:$0xff]
    %v3178 = vld [vmem:[%s3174 + $0x18] sm:$0xff]
    %s3179 = scalar_lea.vmem %s43, 1
    %v3180 = vld [vmem:[%s3179] sm:$0x1]
    %v3182 = vlaneseq
    %v3183 = vshrl.u32 %v3182, 7
    %v3184 = vsub.s32 0, %v3183
    %v3185 = vrot.slane %v3180, %v3184
    %3187 = vmatprep.subr.mxu0 0.0
    %3188 = vmatpush1.msra.mxu0 0.0
    %3189 = vmatprep.subr.mxu0 0.0
    %3190 = vmatpush1.msra.mxu0 0.0
    %3191 = vmatprep.subr.mxu0 0.0
    %3192 = vmatpush1.msra.mxu0 0.0
    %3193 = vmatprep.subr.mxu0 0.0
    %3194 = vmatpush1.msra.mxu0 0.0
    %3195 = vmatprep.subr.mxu0 0.0
    %3196 = vmatpush1.msra.mxu0 0.0
    %3197 = vmatprep.subr.mxu0 0.0
    %3198 = vmatpush1.msra.mxu0 0.0
    %3199 = vmatprep.subr.mxu0 0.0
    %3200 = vmatpush1.msra.mxu0 0.0
    %3201 = vmatprep.subr.mxu0 0.0
    %3202 = vmatpush1.msra.mxu0 0.0
    %3203 = vmatprep.subr.mxu0 0.0
    %3204 = vmatpush1.msra.mxu0 0.0
    %3205 = vmatprep.subr.mxu0 0.0
    %3206 = vmatpush1.msra.mxu0 0.0
    %3207 = vmatprep.subr.mxu0 0.0
    %3208 = vmatpush1.msra.mxu0 0.0
    %3209 = vmatprep.subr.mxu0 0.0
    %3210 = vmatpush1.msra.mxu0 0.0
    %3211 = vmatprep.subr.mxu0 0.0
    %3212 = vmatpush1.msra.mxu0 %v3178
    %3213 = vmatprep.subr.mxu0 0.0
    %3214 = vmatpush1.msra.mxu0 %v3177
    %3215 = vmatprep.subr.mxu0 0.0
    %3216 = vmatpush1.msra.mxu0 %v3176
    %3217 = vmatprep.subr.mxu0 0.0
    %3218 = vmatpush1.msra.mxu0 %v3175
    %3219 = vmatprep.subr.mxu0 0.0
    %3220 = vmatpush2.msra.mxu0 0.0
    %3221 = vmatprep.subr.mxu0 0.0
    %3222 = vmatpush2.msra.mxu0 0.0
    %3223 = vmatprep.subr.mxu0 0.0
    %3224 = vmatpush2.msra.mxu0 0.0
    %3225 = vmatprep.subr.mxu0 0.0
    %3226 = vmatpush2.msra.mxu0 0.0
    %3227 = vmatprep.subr.mxu0 0.0
    %3228 = vmatpush2.msra.mxu0 0.0
    %3229 = vmatprep.subr.mxu0 0.0
    %3230 = vmatpush2.msra.mxu0 0.0
    %3231 = vmatprep.subr.mxu0 0.0
    %3232 = vmatpush2.msra.mxu0 0.0
    %3233 = vmatprep.subr.mxu0 0.0
    %3234 = vmatpush2.msra.mxu0 0.0
    %3235 = vmatprep.subr.mxu0 0.0
    %3236 = vmatpush2.msra.mxu0 0.0
    %3237 = vmatprep.subr.mxu0 0.0
    %3238 = vmatpush2.msra.mxu0 0.0
    %3239 = vmatprep.subr.mxu0 0.0
    %3240 = vmatpush2.msra.mxu0 0.0
    %3241 = vmatprep.subr.mxu0 0.0
    %3242 = vmatpush2.msra.mxu0 0.0
    %3243 = vmatprep.subr.mxu0 0.0
    %3244 = vmatpush2.msra.mxu0 0.0
    %3245 = vmatprep.subr.mxu0 0.0
    %3246 = vmatpush2.msra.mxu0 0.0
    %3247 = vmatprep.subr.mxu0 0.0
    %3248 = vmatpush2.msra.mxu0 0.0
    %3249 = vmatprep.subr.mxu0 0.0
    %3250 = vmatpush2.msra.mxu0 0.0
    %3251 = vmatprep.mubr.f32.mxu0 0.0
    %3252 = vmatmul.mubr.f32.gmra.mxu0 %v3086
    %v3253 = vpop.f32.mrf.mxu0
    %v3254 = vadd.f32 %v3185, %v3253
    %v3255 = vpop.f32.mrf.mxu0
    %3256 = vmatprep.mubr.f32.mxu0 0.0
    %3257 = vmatmul.mubr.f32.gmra.mxu0 %v3089
    %v3258 = vpop.f32.mrf.mxu0
    %v3259 = vadd.f32 %v3185, %v3258
    %v3260 = vpop.f32.mrf.mxu0
    %3261 = vmatprep.mubr.f32.mxu0 0.0
    %3262 = vmatmul.mubr.f32.gmra.mxu0 %v3092
    %v3263 = vpop.f32.mrf.mxu0
    %v3264 = vadd.f32 %v3185, %v3263
    %v3265 = vpop.f32.mrf.mxu0
    %3266 = vdwg.mxu0
    %v3267 = vmul.f32 %v3161, %v1114
    %v3268 = vmul.f32 %v3166, %v1115
    %v3269 = vmul.f32 %v3171, %v1116
    %v3270 = vmul.f32 %v3254, %v1117
    %v3271 = vmul.f32 %v3259, %v1118
    %v3272 = vmul.f32 %v3264, %v1119
    %v3273 = vadd.f32 %v3267, %v3270
    %v3274 = vadd.f32 %v3268, %v3271
    %v3275 = vadd.f32 %v3269, %v3272
    %s3276 = scalar_lea.vmem %s45, 32
    %v3277 = vld [vmem:[%s3276] sm:$0xff]
    %v3278 = vld [vmem:[%s3276 + $0x8] sm:$0xff]
    %v3279 = vld [vmem:[%s3276 + $0x10] sm:$0xff]
    %v3280 = vld [vmem:[%s3276 + $0x18] sm:$0xff]
    %s3281 = scalar_lea.vmem %s47, 1
    %v3282 = vld [vmem:[%s3281] sm:$0x1]
    %v3284 = vlaneseq
    %v3285 = vshrl.u32 %v3284, 7
    %v3286 = vsub.s32 0, %v3285
    %v3287 = vrot.slane %v3282, %v3286
    %v3289 = vadd.f32 %v3287, 0.0
    %3293 = vrot.lane.b32.xlu0 %v3273, 96
    %v3294 = vpop.permute.xlu0 %3293
    %3295 = vrot.lane.b32.xlu0 %v3274, 96
    %v3296 = vpop.permute.xlu0 %3295
    %3297 = vrot.lane.b32.xlu0 %v3275, 96
    %v3298 = vpop.permute.xlu0 %3297
    %v3299 = vsel %vm1400, %v3273, 0
    %v3301 = vsel %vm1400, %v3274, 0
    %v3303 = vsel %vm1400, %v3275, 0
    %v3305 = vsel %vm1400, %v3294, 0
    %v3307 = vsel %vm1400, %v3296, 0
    %v3309 = vsel %vm1400, %v3298, 0
    %3311 = vmatprep.subr.mxu0 0.0
    %3312 = vmatpush1.xpose.msra.mxu0 0.0
    %3313 = vmatprep.subr.mxu0 0.0
    %3314 = vmatpush1.xpose.msra.mxu0 0.0
    %3315 = vmatprep.subr.mxu0 0.0
    %3316 = vmatpush1.xpose.msra.mxu0 0.0
    %3317 = vmatprep.subr.mxu0 0.0
    %3318 = vmatpush1.xpose.msra.mxu0 0.0
    %3319 = vmatprep.subr.mxu0 0.0
    %3320 = vmatpush1.xpose.msra.mxu0 0.0
    %3321 = vmatprep.subr.mxu0 0.0
    %3322 = vmatpush1.xpose.msra.mxu0 0.0
    %3323 = vmatprep.subr.mxu0 0.0
    %3324 = vmatpush1.xpose.msra.mxu0 0.0
    %3325 = vmatprep.subr.mxu0 0.0
    %3326 = vmatpush1.xpose.msra.mxu0 0.0
    %3327 = vmatprep.subr.mxu0 0.0
    %3328 = vmatpush1.xpose.msra.mxu0 0.0
    %3329 = vmatprep.subr.mxu0 0.0
    %3330 = vmatpush1.xpose.msra.mxu0 0.0
    %3331 = vmatprep.subr.mxu0 0.0
    %3332 = vmatpush1.xpose.msra.mxu0 0.0
    %3333 = vmatprep.subr.mxu0 0.0
    %3334 = vmatpush1.xpose.msra.mxu0 0.0
    %3335 = vmatprep.subr.mxu0 0.0
    %3336 = vmatpush1.xpose.msra.mxu0 0.0
    %3337 = vmatprep.subr.mxu0 0.0
    %3338 = vmatpush1.xpose.msra.mxu0 %v3309
    %3339 = vmatprep.subr.mxu0 0.0
    %3340 = vmatpush1.xpose.msra.mxu0 %v3307
    %3341 = vmatprep.subr.mxu0 0.0
    %3342 = vmatpush1.xpose.msra.mxu0 %v3305
    %3343 = vmatprep.subr.mxu0 0.0
    %3344 = vmatpush2.xpose.msra.mxu0 0.0
    %3345 = vmatprep.subr.mxu0 0.0
    %3346 = vmatpush2.xpose.msra.mxu0 0.0
    %3347 = vmatprep.subr.mxu0 0.0
    %3348 = vmatpush2.xpose.msra.mxu0 0.0
    %3349 = vmatprep.subr.mxu0 0.0
    %3350 = vmatpush2.xpose.msra.mxu0 0.0
    %3351 = vmatprep.subr.mxu0 0.0
    %3352 = vmatpush2.xpose.msra.mxu0 0.0
    %3353 = vmatprep.subr.mxu0 0.0
    %3354 = vmatpush2.xpose.msra.mxu0 0.0
    %3355 = vmatprep.subr.mxu0 0.0
    %3356 = vmatpush2.xpose.msra.mxu0 0.0
    %3357 = vmatprep.subr.mxu0 0.0
    %3358 = vmatpush2.xpose.msra.mxu0 0.0
    %3359 = vmatprep.subr.mxu0 0.0
    %3360 = vmatpush2.xpose.msra.mxu0 0.0
    %3361 = vmatprep.subr.mxu0 0.0
    %3362 = vmatpush2.xpose.msra.mxu0 0.0
    %3363 = vmatprep.subr.mxu0 0.0
    %3364 = vmatpush2.xpose.msra.mxu0 0.0
    %3365 = vmatprep.subr.mxu0 0.0
    %3366 = vmatpush2.xpose.msra.mxu0 0.0
    %3367 = vmatprep.subr.mxu0 0.0
    %3368 = vmatpush2.xpose.msra.mxu0 0.0
    %3369 = vmatprep.subr.mxu0 0.0
    %3370 = vmatpush2.xpose.msra.mxu0 0.0
    %3371 = vmatprep.subr.mxu0 0.0
    %3372 = vmatpush2.xpose.msra.mxu0 0.0
    %3373 = vmatprep.subr.mxu0 0.0
    %3374 = vmatpush2.xpose.msra.mxu0 0.0
    %3375 = vmatprep.mubr.f32.mxu0 0.0
    %3376 = vmatmul.mubr.f32.gmra.mxu0 %v3299
    %v3377 = vpop.f32.mrf.mxu0
    %v3378 = vadd.f32 0.0, %v3377
    %v3379 = vpop.f32.mrf.mxu0
    %3380 = vmatprep.mubr.f32.mxu0 0.0
    %3381 = vmatmul.mubr.f32.gmra.mxu0 %v3301
    %v3382 = vpop.f32.mrf.mxu0
    %v3383 = vadd.f32 0.0, %v3382
    %v3384 = vpop.f32.mrf.mxu0
    %3385 = vmatprep.mubr.f32.mxu0 0.0
    %3386 = vmatmul.mubr.f32.gmra.mxu0 %v3303
    %v3387 = vpop.f32.mrf.mxu0
    %v3388 = vadd.f32 0.0, %v3387
    %v3389 = vpop.f32.mrf.mxu0
    %3390 = vdwg.mxu0
    %v3391 = vmul.f32 %v3378, 0.35355338
    %v3392 = vmul.f32 %v3383, 0.35355338
    %v3393 = vmul.f32 %v3388, 0.35355338
    %v3394 = vsel %vm1496, %v3391, -inf
    %3395 = vmax.xlane.f32.xlu0 %v3394
    %v3396 = vpop.xlane.xlu0 %3395
    %v3397 = vsel %vm1496, %v3392, -inf
    %3398 = vmax.xlane.f32.xlu0 %v3397
    %v3399 = vpop.xlane.xlu0 %3398
    %v3400 = vsel %vm1496, %v3393, -inf
    %3401 = vmax.xlane.f32.xlu0 %v3400
    %v3402 = vpop.xlane.xlu0 %3401
    %v3403 = vsub.f32 %v3391, %v3396
    %v3404 = vsub.f32 %v3392, %v3399
    %v3405 = vsub.f32 %v3393, %v3402
    %v3406 = vmul.f32 %v3403, 1.442695
    %v3407 = vpow.pop %v3406
    %v3408 = vmul.f32 %v3404, 1.442695
    %v3409 = vpow.pop %v3408
    %v3410 = vmul.f32 %v3405, 1.442695
    %v3411 = vpow.pop %v3410
    %v3412 = vsel %vm1496, %v3407, 0.0
    %3413 = vadd.xlane.f32.xlu0 %v3412
    %v3414 = vpop.xlane.xlu0 %3413
    %v3415 = vsel %vm1496, %v3409, 0.0
    %3416 = vadd.xlane.f32.xlu0 %v3415
    %v3417 = vpop.xlane.xlu0 %3416
    %v3418 = vsel %vm1496, %v3411, 0.0
    %3419 = vadd.xlane.f32.xlu0 %v3418
    %v3420 = vpop.xlane.xlu0 %3419
    %v3421 = vrcp.pop %v3414
    %v3422 = vrcp.pop %v3417
    %v3423 = vrcp.pop %v3420
    %v3424 = vmul.f32 %v3407, %v3421
    %v3425 = vmul.f32 %v3409, %v3422
    %v3426 = vmul.f32 %v3411, %v3423
    %3430 = vrot.lane.b32.xlu0 %v3161, 64
    %v3431 = vpop.permute.xlu0 %3430
    %3432 = vrot.lane.b32.xlu0 %v3166, 64
    %v3433 = vpop.permute.xlu0 %3432
    %3434 = vrot.lane.b32.xlu0 %v3171, 64
    %v3435 = vpop.permute.xlu0 %3434
    %v3440 = vsel %vm1496, %v3424, 0
    %v3443 = vsel %vm1496, %v3425, 0
    %v3446 = vsel %vm1496, %v3426, 0
    %3448 = vmatprep.subr.mxu0 0.0
    %3449 = vmatpush1.msra.mxu0 0.0
    %3450 = vmatprep.subr.mxu0 0.0
    %3451 = vmatpush1.msra.mxu0 0.0
    %3452 = vmatprep.subr.mxu0 0.0
    %3453 = vmatpush1.msra.mxu0 0.0
    %3454 = vmatprep.subr.mxu0 0.0
    %3455 = vmatpush1.msra.mxu0 0.0
    %3456 = vmatprep.subr.mxu0 0.0
    %3457 = vmatpush1.msra.mxu0 0.0
    %3458 = vmatprep.subr.mxu0 0.0
    %3459 = vmatpush1.msra.mxu0 0.0
    %3460 = vmatprep.subr.mxu0 0.0
    %3461 = vmatpush1.msra.mxu0 0.0
    %3462 = vmatprep.subr.mxu0 0.0
    %3463 = vmatpush1.msra.mxu0 0.0
    %3464 = vmatprep.subr.mxu0 0.0
    %3465 = vmatpush1.msra.mxu0 0.0
    %3466 = vmatprep.subr.mxu0 0.0
    %3467 = vmatpush1.msra.mxu0 0.0
    %3468 = vmatprep.subr.mxu0 0.0
    %3469 = vmatpush1.msra.mxu0 0.0
    %3470 = vmatprep.subr.mxu0 0.0
    %3471 = vmatpush1.msra.mxu0 0.0
    %3472 = vmatprep.subr.mxu0 0.0
    %3473 = vmatpush1.msra.mxu0 0.0
    %3474 = vmatprep.subr.mxu0 0.0
    %3475 = vmatpush1.msra.mxu0 %v3435
    %3476 = vmatprep.subr.mxu0 0.0
    %3477 = vmatpush1.msra.mxu0 %v3433
    %3478 = vmatprep.subr.mxu0 0.0
    %3479 = vmatpush1.msra.mxu0 %v3431
    %3480 = vmatprep.subr.mxu0 0.0
    %3481 = vmatpush2.msra.mxu0 0.0
    %3482 = vmatprep.subr.mxu0 0.0
    %3483 = vmatpush2.msra.mxu0 0.0
    %3484 = vmatprep.subr.mxu0 0.0
    %3485 = vmatpush2.msra.mxu0 0.0
    %3486 = vmatprep.subr.mxu0 0.0
    %3487 = vmatpush2.msra.mxu0 0.0
    %3488 = vmatprep.subr.mxu0 0.0
    %3489 = vmatpush2.msra.mxu0 0.0
    %3490 = vmatprep.subr.mxu0 0.0
    %3491 = vmatpush2.msra.mxu0 0.0
    %3492 = vmatprep.subr.mxu0 0.0
    %3493 = vmatpush2.msra.mxu0 0.0
    %3494 = vmatprep.subr.mxu0 0.0
    %3495 = vmatpush2.msra.mxu0 0.0
    %3496 = vmatprep.subr.mxu0 0.0
    %3497 = vmatpush2.msra.mxu0 0.0
    %3498 = vmatprep.subr.mxu0 0.0
    %3499 = vmatpush2.msra.mxu0 0.0
    %3500 = vmatprep.subr.mxu0 0.0
    %3501 = vmatpush2.msra.mxu0 0.0
    %3502 = vmatprep.subr.mxu0 0.0
    %3503 = vmatpush2.msra.mxu0 0.0
    %3504 = vmatprep.subr.mxu0 0.0
    %3505 = vmatpush2.msra.mxu0 0.0
    %3506 = vmatprep.subr.mxu0 0.0
    %3507 = vmatpush2.msra.mxu0 0.0
    %3508 = vmatprep.subr.mxu0 0.0
    %3509 = vmatpush2.msra.mxu0 0.0
    %3510 = vmatprep.subr.mxu0 0.0
    %3511 = vmatpush2.msra.mxu0 0.0
    %3512 = vmatprep.mubr.f32.mxu0 0.0
    %3513 = vmatmul.mubr.f32.gmra.mxu0 %v3440
    %v3514 = vpop.f32.mrf.mxu0
    %v3515 = vadd.f32 0.0, %v3514
    %v3516 = vpop.f32.mrf.mxu0
    %3517 = vmatprep.mubr.f32.mxu0 0.0
    %3518 = vmatmul.mubr.f32.gmra.mxu0 %v3443
    %v3519 = vpop.f32.mrf.mxu0
    %v3520 = vadd.f32 0.0, %v3519
    %v3521 = vpop.f32.mrf.mxu0
    %3522 = vmatprep.mubr.f32.mxu0 0.0
    %3523 = vmatmul.mubr.f32.gmra.mxu0 %v3446
    %v3524 = vpop.f32.mrf.mxu0
    %v3525 = vadd.f32 0.0, %v3524
    %v3526 = vpop.f32.mrf.mxu0
    %3527 = vdwg.mxu0
    %v3529 = vsel %vm1400, %v3515, 0
    %v3532 = vsel %vm1400, %v3520, 0
    %v3535 = vsel %vm1400, %v3525, 0
    %3537 = vmatprep.subr.mxu0 0.0
    %3538 = vmatpush1.msra.mxu0 0.0
    %3539 = vmatprep.subr.mxu0 0.0
    %3540 = vmatpush1.msra.mxu0 0.0
    %3541 = vmatprep.subr.mxu0 0.0
    %3542 = vmatpush1.msra.mxu0 0.0
    %3543 = vmatprep.subr.mxu0 0.0
    %3544 = vmatpush1.msra.mxu0 0.0
    %3545 = vmatprep.subr.mxu0 0.0
    %3546 = vmatpush1.msra.mxu0 0.0
    %3547 = vmatprep.subr.mxu0 0.0
    %3548 = vmatpush1.msra.mxu0 0.0
    %3549 = vmatprep.subr.mxu0 0.0
    %3550 = vmatpush1.msra.mxu0 0.0
    %3551 = vmatprep.subr.mxu0 0.0
    %3552 = vmatpush1.msra.mxu0 0.0
    %3553 = vmatprep.subr.mxu0 0.0
    %3554 = vmatpush1.msra.mxu0 0.0
    %3555 = vmatprep.subr.mxu0 0.0
    %3556 = vmatpush1.msra.mxu0 0.0
    %3557 = vmatprep.subr.mxu0 0.0
    %3558 = vmatpush1.msra.mxu0 0.0
    %3559 = vmatprep.subr.mxu0 0.0
    %3560 = vmatpush1.msra.mxu0 0.0
    %3561 = vmatprep.subr.mxu0 0.0
    %3562 = vmatpush1.msra.mxu0 0.0
    %3563 = vmatprep.subr.mxu0 0.0
    %3564 = vmatpush1.msra.mxu0 0.0
    %3565 = vmatprep.subr.mxu0 0.0
    %3566 = vmatpush1.msra.mxu0 0.0
    %3567 = vmatprep.subr.mxu0 0.0
    %3568 = vmatpush1.msra.mxu0 %v3277
    %3569 = vmatprep.subr.mxu0 0.0
    %3570 = vmatpush2.msra.mxu0 0.0
    %3571 = vmatprep.subr.mxu0 0.0
    %3572 = vmatpush2.msra.mxu0 0.0
    %3573 = vmatprep.subr.mxu0 0.0
    %3574 = vmatpush2.msra.mxu0 0.0
    %3575 = vmatprep.subr.mxu0 0.0
    %3576 = vmatpush2.msra.mxu0 0.0
    %3577 = vmatprep.subr.mxu0 0.0
    %3578 = vmatpush2.msra.mxu0 0.0
    %3579 = vmatprep.subr.mxu0 0.0
    %3580 = vmatpush2.msra.mxu0 0.0
    %3581 = vmatprep.subr.mxu0 0.0
    %3582 = vmatpush2.msra.mxu0 0.0
    %3583 = vmatprep.subr.mxu0 0.0
    %3584 = vmatpush2.msra.mxu0 0.0
    %3585 = vmatprep.subr.mxu0 0.0
    %3586 = vmatpush2.msra.mxu0 0.0
    %3587 = vmatprep.subr.mxu0 0.0
    %3588 = vmatpush2.msra.mxu0 0.0
    %3589 = vmatprep.subr.mxu0 0.0
    %3590 = vmatpush2.msra.mxu0 0.0
    %3591 = vmatprep.subr.mxu0 0.0
    %3592 = vmatpush2.msra.mxu0 0.0
    %3593 = vmatprep.subr.mxu0 0.0
    %3594 = vmatpush2.msra.mxu0 0.0
    %3595 = vmatprep.subr.mxu0 0.0
    %3596 = vmatpush2.msra.mxu0 0.0
    %3597 = vmatprep.subr.mxu0 0.0
    %3598 = vmatpush2.msra.mxu0 0.0
    %3599 = vmatprep.subr.mxu0 0.0
    %3600 = vmatpush2.msra.mxu0 0.0
    %3601 = vmatprep.mubr.f32.mxu0 0.0
    %3602 = vmatmul.mubr.f32.gmra.mxu0 %v3529
    %v3603 = vpop.f32.mrf.mxu0
    %v3604 = vadd.f32 0.0, %v3603
    %v3605 = vpop.f32.mrf.mxu0
    %3606 = vmatprep.mubr.f32.mxu0 0.0
    %3607 = vmatmul.mubr.f32.gmra.mxu0 %v3532
    %v3608 = vpop.f32.mrf.mxu0
    %v3609 = vadd.f32 0.0, %v3608
    %v3610 = vpop.f32.mrf.mxu0
    %3611 = vmatprep.mubr.f32.mxu0 0.0
    %3612 = vmatmul.mubr.f32.gmra.mxu0 %v3535
    %v3613 = vpop.f32.mrf.mxu0
    %v3614 = vadd.f32 0.0, %v3613
    %v3615 = vpop.f32.mrf.mxu0
    %3616 = vdwg.mxu0
    %v3617 = vadd.f32 %v3289, %v3604
    %v3618 = vadd.f32 %v3289, %v3609
    %v3619 = vadd.f32 %v3289, %v3614
    %3620 = vrot.lane.b32.xlu0 %v3273, 120
    %v3621 = vpop.permute.xlu0 %3620
    %3622 = vrot.lane.b32.xlu0 %v3274, 120
    %v3623 = vpop.permute.xlu0 %3622
    %3624 = vrot.lane.b32.xlu0 %v3275, 120
    %v3625 = vpop.permute.xlu0 %3624
    %3626 = vrot.lane.b32.xlu0 %v3273, 88
    %v3627 = vpop.permute.xlu0 %3626
    %3628 = vrot.lane.b32.xlu0 %v3274, 88
    %v3629 = vpop.permute.xlu0 %3628
    %3630 = vrot.lane.b32.xlu0 %v3275, 88
    %v3631 = vpop.permute.xlu0 %3630
    %v3632 = vsel %vm1400, %v3621, 0
    %v3634 = vsel %vm1400, %v3623, 0
    %v3636 = vsel %vm1400, %v3625, 0
    %v3638 = vsel %vm1400, %v3627, 0
    %v3640 = vsel %vm1400, %v3629, 0
    %v3642 = vsel %vm1400, %v3631, 0
    %3644 = vmatprep.subr.mxu0 0.0
    %3645 = vmatpush1.xpose.msra.mxu0 0.0
    %3646 = vmatprep.subr.mxu0 0.0
    %3647 = vmatpush1.xpose.msra.mxu0 0.0
    %3648 = vmatprep.subr.mxu0 0.0
    %3649 = vmatpush1.xpose.msra.mxu0 0.0
    %3650 = vmatprep.subr.mxu0 0.0
    %3651 = vmatpush1.xpose.msra.mxu0 0.0
    %3652 = vmatprep.subr.mxu0 0.0
    %3653 = vmatpush1.xpose.msra.mxu0 0.0
    %3654 = vmatprep.subr.mxu0 0.0
    %3655 = vmatpush1.xpose.msra.mxu0 0.0
    %3656 = vmatprep.subr.mxu0 0.0
    %3657 = vmatpush1.xpose.msra.mxu0 0.0
    %3658 = vmatprep.subr.mxu0 0.0
    %3659 = vmatpush1.xpose.msra.mxu0 0.0
    %3660 = vmatprep.subr.mxu0 0.0
    %3661 = vmatpush1.xpose.msra.mxu0 0.0
    %3662 = vmatprep.subr.mxu0 0.0
    %3663 = vmatpush1.xpose.msra.mxu0 0.0
    %3664 = vmatprep.subr.mxu0 0.0
    %3665 = vmatpush1.xpose.msra.mxu0 0.0
    %3666 = vmatprep.subr.mxu0 0.0
    %3667 = vmatpush1.xpose.msra.mxu0 0.0
    %3668 = vmatprep.subr.mxu0 0.0
    %3669 = vmatpush1.xpose.msra.mxu0 0.0
    %3670 = vmatprep.subr.mxu0 0.0
    %3671 = vmatpush1.xpose.msra.mxu0 %v3642
    %3672 = vmatprep.subr.mxu0 0.0
    %3673 = vmatpush1.xpose.msra.mxu0 %v3640
    %3674 = vmatprep.subr.mxu0 0.0
    %3675 = vmatpush1.xpose.msra.mxu0 %v3638
    %3676 = vmatprep.subr.mxu0 0.0
    %3677 = vmatpush2.xpose.msra.mxu0 0.0
    %3678 = vmatprep.subr.mxu0 0.0
    %3679 = vmatpush2.xpose.msra.mxu0 0.0
    %3680 = vmatprep.subr.mxu0 0.0
    %3681 = vmatpush2.xpose.msra.mxu0 0.0
    %3682 = vmatprep.subr.mxu0 0.0
    %3683 = vmatpush2.xpose.msra.mxu0 0.0
    %3684 = vmatprep.subr.mxu0 0.0
    %3685 = vmatpush2.xpose.msra.mxu0 0.0
    %3686 = vmatprep.subr.mxu0 0.0
    %3687 = vmatpush2.xpose.msra.mxu0 0.0
    %3688 = vmatprep.subr.mxu0 0.0
    %3689 = vmatpush2.xpose.msra.mxu0 0.0
    %3690 = vmatprep.subr.mxu0 0.0
    %3691 = vmatpush2.xpose.msra.mxu0 0.0
    %3692 = vmatprep.subr.mxu0 0.0
    %3693 = vmatpush2.xpose.msra.mxu0 0.0
    %3694 = vmatprep.subr.mxu0 0.0
    %3695 = vmatpush2.xpose.msra.mxu0 0.0
    %3696 = vmatprep.subr.mxu0 0.0
    %3697 = vmatpush2.xpose.msra.mxu0 0.0
    %3698 = vmatprep.subr.mxu0 0.0
    %3699 = vmatpush2.xpose.msra.mxu0 0.0
    %3700 = vmatprep.subr.mxu0 0.0
    %3701 = vmatpush2.xpose.msra.mxu0 0.0
    %3702 = vmatprep.subr.mxu0 0.0
    %3703 = vmatpush2.xpose.msra.mxu0 0.0
    %3704 = vmatprep.subr.mxu0 0.0
    %3705 = vmatpush2.xpose.msra.mxu0 0.0
    %3706 = vmatprep.subr.mxu0 0.0
    %3707 = vmatpush2.xpose.msra.mxu0 0.0
    %3708 = vmatprep.mubr.f32.mxu0 0.0
    %3709 = vmatmul.mubr.f32.gmra.mxu0 %v3632
    %v3710 = vpop.f32.mrf.mxu0
    %v3711 = vadd.f32 0.0, %v3710
    %v3712 = vpop.f32.mrf.mxu0
    %3713 = vmatprep.mubr.f32.mxu0 0.0
    %3714 = vmatmul.mubr.f32.gmra.mxu0 %v3634
    %v3715 = vpop.f32.mrf.mxu0
    %v3716 = vadd.f32 0.0, %v3715
    %v3717 = vpop.f32.mrf.mxu0
    %3718 = vmatprep.mubr.f32.mxu0 0.0
    %3719 = vmatmul.mubr.f32.gmra.mxu0 %v3636
    %v3720 = vpop.f32.mrf.mxu0
    %v3721 = vadd.f32 0.0, %v3720
    %v3722 = vpop.f32.mrf.mxu0
    %3723 = vdwg.mxu0
    %v3724 = vmul.f32 %v3711, 0.35355338
    %v3725 = vmul.f32 %v3716, 0.35355338
    %v3726 = vmul.f32 %v3721, 0.35355338
    %v3727 = vsel %vm1496, %v3724, -inf
    %3728 = vmax.xlane.f32.xlu0 %v3727
    %v3729 = vpop.xlane.xlu0 %3728
    %v3730 = vsel %vm1496, %v3725, -inf
    %3731 = vmax.xlane.f32.xlu0 %v3730
    %v3732 = vpop.xlane.xlu0 %3731
    %v3733 = vsel %vm1496, %v3726, -inf
    %3734 = vmax.xlane.f32.xlu0 %v3733
    %v3735 = vpop.xlane.xlu0 %3734
    %v3736 = vsub.f32 %v3724, %v3729
    %v3737 = vsub.f32 %v3725, %v3732
    %v3738 = vsub.f32 %v3726, %v3735
    %v3739 = vmul.f32 %v3736, 1.442695
    %v3740 = vpow.pop %v3739
    %v3741 = vmul.f32 %v3737, 1.442695
    %v3742 = vpow.pop %v3741
    %v3743 = vmul.f32 %v3738, 1.442695
    %v3744 = vpow.pop %v3743
    %v3745 = vsel %vm1496, %v3740, 0.0
    %3746 = vadd.xlane.f32.xlu0 %v3745
    %v3747 = vpop.xlane.xlu0 %3746
    %v3748 = vsel %vm1496, %v3742, 0.0
    %3749 = vadd.xlane.f32.xlu0 %v3748
    %v3750 = vpop.xlane.xlu0 %3749
    %v3751 = vsel %vm1496, %v3744, 0.0
    %3752 = vadd.xlane.f32.xlu0 %v3751
    %v3753 = vpop.xlane.xlu0 %3752
    %v3754 = vrcp.pop %v3747
    %v3755 = vrcp.pop %v3750
    %v3756 = vrcp.pop %v3753
    %v3757 = vmul.f32 %v3740, %v3754
    %v3758 = vmul.f32 %v3742, %v3755
    %v3759 = vmul.f32 %v3744, %v3756
    %3760 = vrot.lane.b32.xlu0 %v3161, 56
    %v3761 = vpop.permute.xlu0 %3760
    %3762 = vrot.lane.b32.xlu0 %v3166, 56
    %v3763 = vpop.permute.xlu0 %3762
    %3764 = vrot.lane.b32.xlu0 %v3171, 56
    %v3765 = vpop.permute.xlu0 %3764
    %v3770 = vsel %vm1496, %v3757, 0
    %v3773 = vsel %vm1496, %v3758, 0
    %v3776 = vsel %vm1496, %v3759, 0
    %3778 = vmatprep.subr.mxu0 0.0
    %3779 = vmatpush1.msra.mxu0 0.0
    %3780 = vmatprep.subr.mxu0 0.0
    %3781 = vmatpush1.msra.mxu0 0.0
    %3782 = vmatprep.subr.mxu0 0.0
    %3783 = vmatpush1.msra.mxu0 0.0
    %3784 = vmatprep.subr.mxu0 0.0
    %3785 = vmatpush1.msra.mxu0 0.0
    %3786 = vmatprep.subr.mxu0 0.0
    %3787 = vmatpush1.msra.mxu0 0.0
    %3788 = vmatprep.subr.mxu0 0.0
    %3789 = vmatpush1.msra.mxu0 0.0
    %3790 = vmatprep.subr.mxu0 0.0
    %3791 = vmatpush1.msra.mxu0 0.0
    %3792 = vmatprep.subr.mxu0 0.0
    %3793 = vmatpush1.msra.mxu0 0.0
    %3794 = vmatprep.subr.mxu0 0.0
    %3795 = vmatpush1.msra.mxu0 0.0
    %3796 = vmatprep.subr.mxu0 0.0
    %3797 = vmatpush1.msra.mxu0 0.0
    %3798 = vmatprep.subr.mxu0 0.0
    %3799 = vmatpush1.msra.mxu0 0.0
    %3800 = vmatprep.subr.mxu0 0.0
    %3801 = vmatpush1.msra.mxu0 0.0
    %3802 = vmatprep.subr.mxu0 0.0
    %3803 = vmatpush1.msra.mxu0 0.0
    %3804 = vmatprep.subr.mxu0 0.0
    %3805 = vmatpush1.msra.mxu0 %v3765
    %3806 = vmatprep.subr.mxu0 0.0
    %3807 = vmatpush1.msra.mxu0 %v3763
    %3808 = vmatprep.subr.mxu0 0.0
    %3809 = vmatpush1.msra.mxu0 %v3761
    %3810 = vmatprep.subr.mxu0 0.0
    %3811 = vmatpush2.msra.mxu0 0.0
    %3812 = vmatprep.subr.mxu0 0.0
    %3813 = vmatpush2.msra.mxu0 0.0
    %3814 = vmatprep.subr.mxu0 0.0
    %3815 = vmatpush2.msra.mxu0 0.0
    %3816 = vmatprep.subr.mxu0 0.0
    %3817 = vmatpush2.msra.mxu0 0.0
    %3818 = vmatprep.subr.mxu0 0.0
    %3819 = vmatpush2.msra.mxu0 0.0
    %3820 = vmatprep.subr.mxu0 0.0
    %3821 = vmatpush2.msra.mxu0 0.0
    %3822 = vmatprep.subr.mxu0 0.0
    %3823 = vmatpush2.msra.mxu0 0.0
    %3824 = vmatprep.subr.mxu0 0.0
    %3825 = vmatpush2.msra.mxu0 0.0
    %3826 = vmatprep.subr.mxu0 0.0
    %3827 = vmatpush2.msra.mxu0 0.0
    %3828 = vmatprep.subr.mxu0 0.0
    %3829 = vmatpush2.msra.mxu0 0.0
    %3830 = vmatprep.subr.mxu0 0.0
    %3831 = vmatpush2.msra.mxu0 0.0
    %3832 = vmatprep.subr.mxu0 0.0
    %3833 = vmatpush2.msra.mxu0 0.0
    %3834 = vmatprep.subr.mxu0 0.0
    %3835 = vmatpush2.msra.mxu0 0.0
    %3836 = vmatprep.subr.mxu0 0.0
    %3837 = vmatpush2.msra.mxu0 0.0
    %3838 = vmatprep.subr.mxu0 0.0
    %3839 = vmatpush2.msra.mxu0 0.0
    %3840 = vmatprep.subr.mxu0 0.0
    %3841 = vmatpush2.msra.mxu0 0.0
    %3842 = vmatprep.mubr.f32.mxu0 0.0
    %3843 = vmatmul.mubr.f32.gmra.mxu0 %v3770
    %v3844 = vpop.f32.mrf.mxu0
    %v3845 = vadd.f32 0.0, %v3844
    %v3846 = vpop.f32.mrf.mxu0
    %3847 = vmatprep.mubr.f32.mxu0 0.0
    %3848 = vmatmul.mubr.f32.gmra.mxu0 %v3773
    %v3849 = vpop.f32.mrf.mxu0
    %v3850 = vadd.f32 0.0, %v3849
    %v3851 = vpop.f32.mrf.mxu0
    %3852 = vmatprep.mubr.f32.mxu0 0.0
    %3853 = vmatmul.mubr.f32.gmra.mxu0 %v3776
    %v3854 = vpop.f32.mrf.mxu0
    %v3855 = vadd.f32 0.0, %v3854
    %v3856 = vpop.f32.mrf.mxu0
    %3857 = vdwg.mxu0
    %v3859 = vsel %vm1400, %v3845, 0
    %v3862 = vsel %vm1400, %v3850, 0
    %v3865 = vsel %vm1400, %v3855, 0
    %3867 = vmatprep.subr.mxu0 0.0
    %3868 = vmatpush1.msra.mxu0 0.0
    %3869 = vmatprep.subr.mxu0 0.0
    %3870 = vmatpush1.msra.mxu0 0.0
    %3871 = vmatprep.subr.mxu0 0.0
    %3872 = vmatpush1.msra.mxu0 0.0
    %3873 = vmatprep.subr.mxu0 0.0
    %3874 = vmatpush1.msra.mxu0 0.0
    %3875 = vmatprep.subr.mxu0 0.0
    %3876 = vmatpush1.msra.mxu0 0.0
    %3877 = vmatprep.subr.mxu0 0.0
    %3878 = vmatpush1.msra.mxu0 0.0
    %3879 = vmatprep.subr.mxu0 0.0
    %3880 = vmatpush1.msra.mxu0 0.0
    %3881 = vmatprep.subr.mxu0 0.0
    %3882 = vmatpush1.msra.mxu0 0.0
    %3883 = vmatprep.subr.mxu0 0.0
    %3884 = vmatpush1.msra.mxu0 0.0
    %3885 = vmatprep.subr.mxu0 0.0
    %3886 = vmatpush1.msra.mxu0 0.0
    %3887 = vmatprep.subr.mxu0 0.0
    %3888 = vmatpush1.msra.mxu0 0.0
    %3889 = vmatprep.subr.mxu0 0.0
    %3890 = vmatpush1.msra.mxu0 0.0
    %3891 = vmatprep.subr.mxu0 0.0
    %3892 = vmatpush1.msra.mxu0 0.0
    %3893 = vmatprep.subr.mxu0 0.0
    %3894 = vmatpush1.msra.mxu0 0.0
    %3895 = vmatprep.subr.mxu0 0.0
    %3896 = vmatpush1.msra.mxu0 0.0
    %3897 = vmatprep.subr.mxu0 0.0
    %3898 = vmatpush1.msra.mxu0 %v3278
    %3899 = vmatprep.subr.mxu0 0.0
    %3900 = vmatpush2.msra.mxu0 0.0
    %3901 = vmatprep.subr.mxu0 0.0
    %3902 = vmatpush2.msra.mxu0 0.0
    %3903 = vmatprep.subr.mxu0 0.0
    %3904 = vmatpush2.msra.mxu0 0.0
    %3905 = vmatprep.subr.mxu0 0.0
    %3906 = vmatpush2.msra.mxu0 0.0
    %3907 = vmatprep.subr.mxu0 0.0
    %3908 = vmatpush2.msra.mxu0 0.0
    %3909 = vmatprep.subr.mxu0 0.0
    %3910 = vmatpush2.msra.mxu0 0.0
    %3911 = vmatprep.subr.mxu0 0.0
    %3912 = vmatpush2.msra.mxu0 0.0
    %3913 = vmatprep.subr.mxu0 0.0
    %3914 = vmatpush2.msra.mxu0 0.0
    %3915 = vmatprep.subr.mxu0 0.0
    %3916 = vmatpush2.msra.mxu0 0.0
    %3917 = vmatprep.subr.mxu0 0.0
    %3918 = vmatpush2.msra.mxu0 0.0
    %3919 = vmatprep.subr.mxu0 0.0
    %3920 = vmatpush2.msra.mxu0 0.0
    %3921 = vmatprep.subr.mxu0 0.0
    %3922 = vmatpush2.msra.mxu0 0.0
    %3923 = vmatprep.subr.mxu0 0.0
    %3924 = vmatpush2.msra.mxu0 0.0
    %3925 = vmatprep.subr.mxu0 0.0
    %3926 = vmatpush2.msra.mxu0 0.0
    %3927 = vmatprep.subr.mxu0 0.0
    %3928 = vmatpush2.msra.mxu0 0.0
    %3929 = vmatprep.subr.mxu0 0.0
    %3930 = vmatpush2.msra.mxu0 0.0
    %3931 = vmatprep.mubr.f32.mxu0 0.0
    %3932 = vmatmul.mubr.f32.gmra.mxu0 %v3859
    %v3933 = vpop.f32.mrf.mxu0
    %v3934 = vadd.f32 0.0, %v3933
    %v3935 = vpop.f32.mrf.mxu0
    %3936 = vmatprep.mubr.f32.mxu0 0.0
    %3937 = vmatmul.mubr.f32.gmra.mxu0 %v3862
    %v3938 = vpop.f32.mrf.mxu0
    %v3939 = vadd.f32 0.0, %v3938
    %v3940 = vpop.f32.mrf.mxu0
    %3941 = vmatprep.mubr.f32.mxu0 0.0
    %3942 = vmatmul.mubr.f32.gmra.mxu0 %v3865
    %v3943 = vpop.f32.mrf.mxu0
    %v3944 = vadd.f32 0.0, %v3943
    %v3945 = vpop.f32.mrf.mxu0
    %3946 = vdwg.mxu0
    %v3947 = vadd.f32 %v3617, %v3934
    %v3948 = vadd.f32 %v3618, %v3939
    %v3949 = vadd.f32 %v3619, %v3944
    %3950 = vrot.lane.b32.xlu0 %v3273, 112
    %v3951 = vpop.permute.xlu0 %3950
    %3952 = vrot.lane.b32.xlu0 %v3274, 112
    %v3953 = vpop.permute.xlu0 %3952
    %3954 = vrot.lane.b32.xlu0 %v3275, 112
    %v3955 = vpop.permute.xlu0 %3954
    %3956 = vrot.lane.b32.xlu0 %v3273, 80
    %v3957 = vpop.permute.xlu0 %3956
    %3958 = vrot.lane.b32.xlu0 %v3274, 80
    %v3959 = vpop.permute.xlu0 %3958
    %3960 = vrot.lane.b32.xlu0 %v3275, 80
    %v3961 = vpop.permute.xlu0 %3960
    %v3962 = vsel %vm1400, %v3951, 0
    %v3964 = vsel %vm1400, %v3953, 0
    %v3966 = vsel %vm1400, %v3955, 0
    %v3968 = vsel %vm1400, %v3957, 0
    %v3970 = vsel %vm1400, %v3959, 0
    %v3972 = vsel %vm1400, %v3961, 0
    %3974 = vmatprep.subr.mxu0 0.0
    %3975 = vmatpush1.xpose.msra.mxu0 0.0
    %3976 = vmatprep.subr.mxu0 0.0
    %3977 = vmatpush1.xpose.msra.mxu0 0.0
    %3978 = vmatprep.subr.mxu0 0.0
    %3979 = vmatpush1.xpose.msra.mxu0 0.0
    %3980 = vmatprep.subr.mxu0 0.0
    %3981 = vmatpush1.xpose.msra.mxu0 0.0
    %3982 = vmatprep.subr.mxu0 0.0
    %3983 = vmatpush1.xpose.msra.mxu0 0.0
    %3984 = vmatprep.subr.mxu0 0.0
    %3985 = vmatpush1.xpose.msra.mxu0 0.0
    %3986 = vmatprep.subr.mxu0 0.0
    %3987 = vmatpush1.xpose.msra.mxu0 0.0
    %3988 = vmatprep.subr.mxu0 0.0
    %3989 = vmatpush1.xpose.msra.mxu0 0.0
    %3990 = vmatprep.subr.mxu0 0.0
    %3991 = vmatpush1.xpose.msra.mxu0 0.0
    %3992 = vmatprep.subr.mxu0 0.0
    %3993 = vmatpush1.xpose.msra.mxu0 0.0
    %3994 = vmatprep.subr.mxu0 0.0
    %3995 = vmatpush1.xpose.msra.mxu0 0.0
    %3996 = vmatprep.subr.mxu0 0.0
    %3997 = vmatpush1.xpose.msra.mxu0 0.0
    %3998 = vmatprep.subr.mxu0 0.0
    %3999 = vmatpush1.xpose.msra.mxu0 0.0
    %4000 = vmatprep.subr.mxu0 0.0
    %4001 = vmatpush1.xpose.msra.mxu0 %v3972
    %4002 = vmatprep.subr.mxu0 0.0
    %4003 = vmatpush1.xpose.msra.mxu0 %v3970
    %4004 = vmatprep.subr.mxu0 0.0
    %4005 = vmatpush1.xpose.msra.mxu0 %v3968
    %4006 = vmatprep.subr.mxu0 0.0
    %4007 = vmatpush2.xpose.msra.mxu0 0.0
    %4008 = vmatprep.subr.mxu0 0.0
    %4009 = vmatpush2.xpose.msra.mxu0 0.0
    %4010 = vmatprep.subr.mxu0 0.0
    %4011 = vmatpush2.xpose.msra.mxu0 0.0
    %4012 = vmatprep.subr.mxu0 0.0
    %4013 = vmatpush2.xpose.msra.mxu0 0.0
    %4014 = vmatprep.subr.mxu0 0.0
    %4015 = vmatpush2.xpose.msra.mxu0 0.0
    %4016 = vmatprep.subr.mxu0 0.0
    %4017 = vmatpush2.xpose.msra.mxu0 0.0
    %4018 = vmatprep.subr.mxu0 0.0
    %4019 = vmatpush2.xpose.msra.mxu0 0.0
    %4020 = vmatprep.subr.mxu0 0.0
    %4021 = vmatpush2.xpose.msra.mxu0 0.0
    %4022 = vmatprep.subr.mxu0 0.0
    %4023 = vmatpush2.xpose.msra.mxu0 0.0
    %4024 = vmatprep.subr.mxu0 0.0
    %4025 = vmatpush2.xpose.msra.mxu0 0.0
    %4026 = vmatprep.subr.mxu0 0.0
    %4027 = vmatpush2.xpose.msra.mxu0 0.0
    %4028 = vmatprep.subr.mxu0 0.0
    %4029 = vmatpush2.xpose.msra.mxu0 0.0
    %4030 = vmatprep.subr.mxu0 0.0
    %4031 = vmatpush2.xpose.msra.mxu0 0.0
    %4032 = vmatprep.subr.mxu0 0.0
    %4033 = vmatpush2.xpose.msra.mxu0 0.0
    %4034 = vmatprep.subr.mxu0 0.0
    %4035 = vmatpush2.xpose.msra.mxu0 0.0
    %4036 = vmatprep.subr.mxu0 0.0
    %4037 = vmatpush2.xpose.msra.mxu0 0.0
    %4038 = vmatprep.mubr.f32.mxu0 0.0
    %4039 = vmatmul.mubr.f32.gmra.mxu0 %v3962
    %v4040 = vpop.f32.mrf.mxu0
    %v4041 = vadd.f32 0.0, %v4040
    %v4042 = vpop.f32.mrf.mxu0
    %4043 = vmatprep.mubr.f32.mxu0 0.0
    %4044 = vmatmul.mubr.f32.gmra.mxu0 %v3964
    %v4045 = vpop.f32.mrf.mxu0
    %v4046 = vadd.f32 0.0, %v4045
    %v4047 = vpop.f32.mrf.mxu0
    %4048 = vmatprep.mubr.f32.mxu0 0.0
    %4049 = vmatmul.mubr.f32.gmra.mxu0 %v3966
    %v4050 = vpop.f32.mrf.mxu0
    %v4051 = vadd.f32 0.0, %v4050
    %v4052 = vpop.f32.mrf.mxu0
    %4053 = vdwg.mxu0
    %v4054 = vmul.f32 %v4041, 0.35355338
    %v4055 = vmul.f32 %v4046, 0.35355338
    %v4056 = vmul.f32 %v4051, 0.35355338
    %v4057 = vsel %vm1496, %v4054, -inf
    %4058 = vmax.xlane.f32.xlu0 %v4057
    %v4059 = vpop.xlane.xlu0 %4058
    %v4060 = vsel %vm1496, %v4055, -inf
    %4061 = vmax.xlane.f32.xlu0 %v4060
    %v4062 = vpop.xlane.xlu0 %4061
    %v4063 = vsel %vm1496, %v4056, -inf
    %4064 = vmax.xlane.f32.xlu0 %v4063
    %v4065 = vpop.xlane.xlu0 %4064
    %v4066 = vsub.f32 %v4054, %v4059
    %v4067 = vsub.f32 %v4055, %v4062
    %v4068 = vsub.f32 %v4056, %v4065
    %v4069 = vmul.f32 %v4066, 1.442695
    %v4070 = vpow.pop %v4069
    %v4071 = vmul.f32 %v4067, 1.442695
    %v4072 = vpow.pop %v4071
    %v4073 = vmul.f32 %v4068, 1.442695
    %v4074 = vpow.pop %v4073
    %v4075 = vsel %vm1496, %v4070, 0.0
    %4076 = vadd.xlane.f32.xlu0 %v4075
    %v4077 = vpop.xlane.xlu0 %4076
    %v4078 = vsel %vm1496, %v4072, 0.0
    %4079 = vadd.xlane.f32.xlu0 %v4078
    %v4080 = vpop.xlane.xlu0 %4079
    %v4081 = vsel %vm1496, %v4074, 0.0
    %4082 = vadd.xlane.f32.xlu0 %v4081
    %v4083 = vpop.xlane.xlu0 %4082
    %v4084 = vrcp.pop %v4077
    %v4085 = vrcp.pop %v4080
    %v4086 = vrcp.pop %v4083
    %v4087 = vmul.f32 %v4070, %v4084
    %v4088 = vmul.f32 %v4072, %v4085
    %v4089 = vmul.f32 %v4074, %v4086
    %4090 = vrot.lane.b32.xlu0 %v3161, 48
    %v4091 = vpop.permute.xlu0 %4090
    %4092 = vrot.lane.b32.xlu0 %v3166, 48
    %v4093 = vpop.permute.xlu0 %4092
    %4094 = vrot.lane.b32.xlu0 %v3171, 48
    %v4095 = vpop.permute.xlu0 %4094
    %v4100 = vsel %vm1496, %v4087, 0
    %v4103 = vsel %vm1496, %v4088, 0
    %v4106 = vsel %vm1496, %v4089, 0
    %4108 = vmatprep.subr.mxu0 0.0
    %4109 = vmatpush1.msra.mxu0 0.0
    %4110 = vmatprep.subr.mxu0 0.0
    %4111 = vmatpush1.msra.mxu0 0.0
    %4112 = vmatprep.subr.mxu0 0.0
    %4113 = vmatpush1.msra.mxu0 0.0
    %4114 = vmatprep.subr.mxu0 0.0
    %4115 = vmatpush1.msra.mxu0 0.0
    %4116 = vmatprep.subr.mxu0 0.0
    %4117 = vmatpush1.msra.mxu0 0.0
    %4118 = vmatprep.subr.mxu0 0.0
    %4119 = vmatpush1.msra.mxu0 0.0
    %4120 = vmatprep.subr.mxu0 0.0
    %4121 = vmatpush1.msra.mxu0 0.0
    %4122 = vmatprep.subr.mxu0 0.0
    %4123 = vmatpush1.msra.mxu0 0.0
    %4124 = vmatprep.subr.mxu0 0.0
    %4125 = vmatpush1.msra.mxu0 0.0
    %4126 = vmatprep.subr.mxu0 0.0
    %4127 = vmatpush1.msra.mxu0 0.0
    %4128 = vmatprep.subr.mxu0 0.0
    %4129 = vmatpush1.msra.mxu0 0.0
    %4130 = vmatprep.subr.mxu0 0.0
    %4131 = vmatpush1.msra.mxu0 0.0
    %4132 = vmatprep.subr.mxu0 0.0
    %4133 = vmatpush1.msra.mxu0 0.0
    %4134 = vmatprep.subr.mxu0 0.0
    %4135 = vmatpush1.msra.mxu0 %v4095
    %4136 = vmatprep.subr.mxu0 0.0
    %4137 = vmatpush1.msra.mxu0 %v4093
    %4138 = vmatprep.subr.mxu0 0.0
    %4139 = vmatpush1.msra.mxu0 %v4091
    %4140 = vmatprep.subr.mxu0 0.0
    %4141 = vmatpush2.msra.mxu0 0.0
    %4142 = vmatprep.subr.mxu0 0.0
    %4143 = vmatpush2.msra.mxu0 0.0
    %4144 = vmatprep.subr.mxu0 0.0
    %4145 = vmatpush2.msra.mxu0 0.0
    %4146 = vmatprep.subr.mxu0 0.0
    %4147 = vmatpush2.msra.mxu0 0.0
    %4148 = vmatprep.subr.mxu0 0.0
    %4149 = vmatpush2.msra.mxu0 0.0
    %4150 = vmatprep.subr.mxu0 0.0
    %4151 = vmatpush2.msra.mxu0 0.0
    %4152 = vmatprep.subr.mxu0 0.0
    %4153 = vmatpush2.msra.mxu0 0.0
    %4154 = vmatprep.subr.mxu0 0.0
    %4155 = vmatpush2.msra.mxu0 0.0
    %4156 = vmatprep.subr.mxu0 0.0
    %4157 = vmatpush2.msra.mxu0 0.0
    %4158 = vmatprep.subr.mxu0 0.0
    %4159 = vmatpush2.msra.mxu0 0.0
    %4160 = vmatprep.subr.mxu0 0.0
    %4161 = vmatpush2.msra.mxu0 0.0
    %4162 = vmatprep.subr.mxu0 0.0
    %4163 = vmatpush2.msra.mxu0 0.0
    %4164 = vmatprep.subr.mxu0 0.0
    %4165 = vmatpush2.msra.mxu0 0.0
    %4166 = vmatprep.subr.mxu0 0.0
    %4167 = vmatpush2.msra.mxu0 0.0
    %4168 = vmatprep.subr.mxu0 0.0
    %4169 = vmatpush2.msra.mxu0 0.0
    %4170 = vmatprep.subr.mxu0 0.0
    %4171 = vmatpush2.msra.mxu0 0.0
    %4172 = vmatprep.mubr.f32.mxu0 0.0
    %4173 = vmatmul.mubr.f32.gmra.mxu0 %v4100
    %v4174 = vpop.f32.mrf.mxu0
    %v4175 = vadd.f32 0.0, %v4174
    %v4176 = vpop.f32.mrf.mxu0
    %4177 = vmatprep.mubr.f32.mxu0 0.0
    %4178 = vmatmul.mubr.f32.gmra.mxu0 %v4103
    %v4179 = vpop.f32.mrf.mxu0
    %v4180 = vadd.f32 0.0, %v4179
    %v4181 = vpop.f32.mrf.mxu0
    %4182 = vmatprep.mubr.f32.mxu0 0.0
    %4183 = vmatmul.mubr.f32.gmra.mxu0 %v4106
    %v4184 = vpop.f32.mrf.mxu0
    %v4185 = vadd.f32 0.0, %v4184
    %v4186 = vpop.f32.mrf.mxu0
    %4187 = vdwg.mxu0
    %v4189 = vsel %vm1400, %v4175, 0
    %v4192 = vsel %vm1400, %v4180, 0
    %v4195 = vsel %vm1400, %v4185, 0
    %4197 = vmatprep.subr.mxu0 0.0
    %4198 = vmatpush1.msra.mxu0 0.0
    %4199 = vmatprep.subr.mxu0 0.0
    %4200 = vmatpush1.msra.mxu0 0.0
    %4201 = vmatprep.subr.mxu0 0.0
    %4202 = vmatpush1.msra.mxu0 0.0
    %4203 = vmatprep.subr.mxu0 0.0
    %4204 = vmatpush1.msra.mxu0 0.0
    %4205 = vmatprep.subr.mxu0 0.0
    %4206 = vmatpush1.msra.mxu0 0.0
    %4207 = vmatprep.subr.mxu0 0.0
    %4208 = vmatpush1.msra.mxu0 0.0
    %4209 = vmatprep.subr.mxu0 0.0
    %4210 = vmatpush1.msra.mxu0 0.0
    %4211 = vmatprep.subr.mxu0 0.0
    %4212 = vmatpush1.msra.mxu0 0.0
    %4213 = vmatprep.subr.mxu0 0.0
    %4214 = vmatpush1.msra.mxu0 0.0
    %4215 = vmatprep.subr.mxu0 0.0
    %4216 = vmatpush1.msra.mxu0 0.0
    %4217 = vmatprep.subr.mxu0 0.0
    %4218 = vmatpush1.msra.mxu0 0.0
    %4219 = vmatprep.subr.mxu0 0.0
    %4220 = vmatpush1.msra.mxu0 0.0
    %4221 = vmatprep.subr.mxu0 0.0
    %4222 = vmatpush1.msra.mxu0 0.0
    %4223 = vmatprep.subr.mxu0 0.0
    %4224 = vmatpush1.msra.mxu0 0.0
    %4225 = vmatprep.subr.mxu0 0.0
    %4226 = vmatpush1.msra.mxu0 0.0
    %4227 = vmatprep.subr.mxu0 0.0
    %4228 = vmatpush1.msra.mxu0 %v3279
    %4229 = vmatprep.subr.mxu0 0.0
    %4230 = vmatpush2.msra.mxu0 0.0
    %4231 = vmatprep.subr.mxu0 0.0
    %4232 = vmatpush2.msra.mxu0 0.0
    %4233 = vmatprep.subr.mxu0 0.0
    %4234 = vmatpush2.msra.mxu0 0.0
    %4235 = vmatprep.subr.mxu0 0.0
    %4236 = vmatpush2.msra.mxu0 0.0
    %4237 = vmatprep.subr.mxu0 0.0
    %4238 = vmatpush2.msra.mxu0 0.0
    %4239 = vmatprep.subr.mxu0 0.0
    %4240 = vmatpush2.msra.mxu0 0.0
    %4241 = vmatprep.subr.mxu0 0.0
    %4242 = vmatpush2.msra.mxu0 0.0
    %4243 = vmatprep.subr.mxu0 0.0
    %4244 = vmatpush2.msra.mxu0 0.0
    %4245 = vmatprep.subr.mxu0 0.0
    %4246 = vmatpush2.msra.mxu0 0.0
    %4247 = vmatprep.subr.mxu0 0.0
    %4248 = vmatpush2.msra.mxu0 0.0
    %4249 = vmatprep.subr.mxu0 0.0
    %4250 = vmatpush2.msra.mxu0 0.0
    %4251 = vmatprep.subr.mxu0 0.0
    %4252 = vmatpush2.msra.mxu0 0.0
    %4253 = vmatprep.subr.mxu0 0.0
    %4254 = vmatpush2.msra.mxu0 0.0
    %4255 = vmatprep.subr.mxu0 0.0
    %4256 = vmatpush2.msra.mxu0 0.0
    %4257 = vmatprep.subr.mxu0 0.0
    %4258 = vmatpush2.msra.mxu0 0.0
    %4259 = vmatprep.subr.mxu0 0.0
    %4260 = vmatpush2.msra.mxu0 0.0
    %4261 = vmatprep.mubr.f32.mxu0 0.0
    %4262 = vmatmul.mubr.f32.gmra.mxu0 %v4189
    %v4263 = vpop.f32.mrf.mxu0
    %v4264 = vadd.f32 0.0, %v4263
    %v4265 = vpop.f32.mrf.mxu0
    %4266 = vmatprep.mubr.f32.mxu0 0.0
    %4267 = vmatmul.mubr.f32.gmra.mxu0 %v4192
    %v4268 = vpop.f32.mrf.mxu0
    %v4269 = vadd.f32 0.0, %v4268
    %v4270 = vpop.f32.mrf.mxu0
    %4271 = vmatprep.mubr.f32.mxu0 0.0
    %4272 = vmatmul.mubr.f32.gmra.mxu0 %v4195
    %v4273 = vpop.f32.mrf.mxu0
    %v4274 = vadd.f32 0.0, %v4273
    %v4275 = vpop.f32.mrf.mxu0
    %4276 = vdwg.mxu0
    %v4277 = vadd.f32 %v3947, %v4264
    %v4278 = vadd.f32 %v3948, %v4269
    %v4279 = vadd.f32 %v3949, %v4274
    %4280 = vrot.lane.b32.xlu0 %v3273, 104
    %v4281 = vpop.permute.xlu0 %4280
    %4282 = vrot.lane.b32.xlu0 %v3274, 104
    %v4283 = vpop.permute.xlu0 %4282
    %4284 = vrot.lane.b32.xlu0 %v3275, 104
    %v4285 = vpop.permute.xlu0 %4284
    %4286 = vrot.lane.b32.xlu0 %v3273, 72
    %v4287 = vpop.permute.xlu0 %4286
    %4288 = vrot.lane.b32.xlu0 %v3274, 72
    %v4289 = vpop.permute.xlu0 %4288
    %4290 = vrot.lane.b32.xlu0 %v3275, 72
    %v4291 = vpop.permute.xlu0 %4290
    %v4292 = vsel %vm1400, %v4281, 0
    %v4294 = vsel %vm1400, %v4283, 0
    %v4296 = vsel %vm1400, %v4285, 0
    %v4298 = vsel %vm1400, %v4287, 0
    %v4300 = vsel %vm1400, %v4289, 0
    %v4302 = vsel %vm1400, %v4291, 0
    %4304 = vmatprep.subr.mxu0 0.0
    %4305 = vmatpush1.xpose.msra.mxu0 0.0
    %4306 = vmatprep.subr.mxu0 0.0
    %4307 = vmatpush1.xpose.msra.mxu0 0.0
    %4308 = vmatprep.subr.mxu0 0.0
    %4309 = vmatpush1.xpose.msra.mxu0 0.0
    %4310 = vmatprep.subr.mxu0 0.0
    %4311 = vmatpush1.xpose.msra.mxu0 0.0
    %4312 = vmatprep.subr.mxu0 0.0
    %4313 = vmatpush1.xpose.msra.mxu0 0.0
    %4314 = vmatprep.subr.mxu0 0.0
    %4315 = vmatpush1.xpose.msra.mxu0 0.0
    %4316 = vmatprep.subr.mxu0 0.0
    %4317 = vmatpush1.xpose.msra.mxu0 0.0
    %4318 = vmatprep.subr.mxu0 0.0
    %4319 = vmatpush1.xpose.msra.mxu0 0.0
    %4320 = vmatprep.subr.mxu0 0.0
    %4321 = vmatpush1.xpose.msra.mxu0 0.0
    %4322 = vmatprep.subr.mxu0 0.0
    %4323 = vmatpush1.xpose.msra.mxu0 0.0
    %4324 = vmatprep.subr.mxu0 0.0
    %4325 = vmatpush1.xpose.msra.mxu0 0.0
    %4326 = vmatprep.subr.mxu0 0.0
    %4327 = vmatpush1.xpose.msra.mxu0 0.0
    %4328 = vmatprep.subr.mxu0 0.0
    %4329 = vmatpush1.xpose.msra.mxu0 0.0
    %4330 = vmatprep.subr.mxu0 0.0
    %4331 = vmatpush1.xpose.msra.mxu0 %v4302
    %4332 = vmatprep.subr.mxu0 0.0
    %4333 = vmatpush1.xpose.msra.mxu0 %v4300
    %4334 = vmatprep.subr.mxu0 0.0
    %4335 = vmatpush1.xpose.msra.mxu0 %v4298
    %4336 = vmatprep.subr.mxu0 0.0
    %4337 = vmatpush2.xpose.msra.mxu0 0.0
    %4338 = vmatprep.subr.mxu0 0.0
    %4339 = vmatpush2.xpose.msra.mxu0 0.0
    %4340 = vmatprep.subr.mxu0 0.0
    %4341 = vmatpush2.xpose.msra.mxu0 0.0
    %4342 = vmatprep.subr.mxu0 0.0
    %4343 = vmatpush2.xpose.msra.mxu0 0.0
    %4344 = vmatprep.subr.mxu0 0.0
    %4345 = vmatpush2.xpose.msra.mxu0 0.0
    %4346 = vmatprep.subr.mxu0 0.0
    %4347 = vmatpush2.xpose.msra.mxu0 0.0
    %4348 = vmatprep.subr.mxu0 0.0
    %4349 = vmatpush2.xpose.msra.mxu0 0.0
    %4350 = vmatprep.subr.mxu0 0.0
    %4351 = vmatpush2.xpose.msra.mxu0 0.0
    %4352 = vmatprep.subr.mxu0 0.0
    %4353 = vmatpush2.xpose.msra.mxu0 0.0
    %4354 = vmatprep.subr.mxu0 0.0
    %4355 = vmatpush2.xpose.msra.mxu0 0.0
    %4356 = vmatprep.subr.mxu0 0.0
    %4357 = vmatpush2.xpose.msra.mxu0 0.0
    %4358 = vmatprep.subr.mxu0 0.0
    %4359 = vmatpush2.xpose.msra.mxu0 0.0
    %4360 = vmatprep.subr.mxu0 0.0
    %4361 = vmatpush2.xpose.msra.mxu0 0.0
    %4362 = vmatprep.subr.mxu0 0.0
    %4363 = vmatpush2.xpose.msra.mxu0 0.0
    %4364 = vmatprep.subr.mxu0 0.0
    %4365 = vmatpush2.xpose.msra.mxu0 0.0
    %4366 = vmatprep.subr.mxu0 0.0
    %4367 = vmatpush2.xpose.msra.mxu0 0.0
    %4368 = vmatprep.mubr.f32.mxu0 0.0
    %4369 = vmatmul.mubr.f32.gmra.mxu0 %v4292
    %v4370 = vpop.f32.mrf.mxu0
    %v4371 = vadd.f32 0.0, %v4370
    %v4372 = vpop.f32.mrf.mxu0
    %4373 = vmatprep.mubr.f32.mxu0 0.0
    %4374 = vmatmul.mubr.f32.gmra.mxu0 %v4294
    %v4375 = vpop.f32.mrf.mxu0
    %v4376 = vadd.f32 0.0, %v4375
    %v4377 = vpop.f32.mrf.mxu0
    %4378 = vmatprep.mubr.f32.mxu0 0.0
    %4379 = vmatmul.mubr.f32.gmra.mxu0 %v4296
    %v4380 = vpop.f32.mrf.mxu0
    %v4381 = vadd.f32 0.0, %v4380
    %v4382 = vpop.f32.mrf.mxu0
    %4383 = vdwg.mxu0
    %v4384 = vmul.f32 %v4371, 0.35355338
    %v4385 = vmul.f32 %v4376, 0.35355338
    %v4386 = vmul.f32 %v4381, 0.35355338
    %v4387 = vsel %vm1496, %v4384, -inf
    %4388 = vmax.xlane.f32.xlu0 %v4387
    %v4389 = vpop.xlane.xlu0 %4388
    %v4390 = vsel %vm1496, %v4385, -inf
    %4391 = vmax.xlane.f32.xlu0 %v4390
    %v4392 = vpop.xlane.xlu0 %4391
    %v4393 = vsel %vm1496, %v4386, -inf
    %4394 = vmax.xlane.f32.xlu0 %v4393
    %v4395 = vpop.xlane.xlu0 %4394
    %v4396 = vsub.f32 %v4384, %v4389
    %v4397 = vsub.f32 %v4385, %v4392
    %v4398 = vsub.f32 %v4386, %v4395
    %v4399 = vmul.f32 %v4396, 1.442695
    %v4400 = vpow.pop %v4399
    %v4401 = vmul.f32 %v4397, 1.442695
    %v4402 = vpow.pop %v4401
    %v4403 = vmul.f32 %v4398, 1.442695
    %v4404 = vpow.pop %v4403
    %v4405 = vsel %vm1496, %v4400, 0.0
    %4406 = vadd.xlane.f32.xlu0 %v4405
    %v4407 = vpop.xlane.xlu0 %4406
    %v4408 = vsel %vm1496, %v4402, 0.0
    %4409 = vadd.xlane.f32.xlu0 %v4408
    %v4410 = vpop.xlane.xlu0 %4409
    %v4411 = vsel %vm1496, %v4404, 0.0
    %4412 = vadd.xlane.f32.xlu0 %v4411
    %v4413 = vpop.xlane.xlu0 %4412
    %v4414 = vrcp.pop %v4407
    %v4415 = vrcp.pop %v4410
    %v4416 = vrcp.pop %v4413
    %v4417 = vmul.f32 %v4400, %v4414
    %v4418 = vmul.f32 %v4402, %v4415
    %v4419 = vmul.f32 %v4404, %v4416
    %4420 = vrot.lane.b32.xlu0 %v3161, 40
    %v4421 = vpop.permute.xlu0 %4420
    %4422 = vrot.lane.b32.xlu0 %v3166, 40
    %v4423 = vpop.permute.xlu0 %4422
    %4424 = vrot.lane.b32.xlu0 %v3171, 40
    %v4425 = vpop.permute.xlu0 %4424
    %v4430 = vsel %vm1496, %v4417, 0
    %v4433 = vsel %vm1496, %v4418, 0
    %v4436 = vsel %vm1496, %v4419, 0
    %4438 = vmatprep.subr.mxu0 0.0
    %4439 = vmatpush1.msra.mxu0 0.0
    %4440 = vmatprep.subr.mxu0 0.0
    %4441 = vmatpush1.msra.mxu0 0.0
    %4442 = vmatprep.subr.mxu0 0.0
    %4443 = vmatpush1.msra.mxu0 0.0
    %4444 = vmatprep.subr.mxu0 0.0
    %4445 = vmatpush1.msra.mxu0 0.0
    %4446 = vmatprep.subr.mxu0 0.0
    %4447 = vmatpush1.msra.mxu0 0.0
    %4448 = vmatprep.subr.mxu0 0.0
    %4449 = vmatpush1.msra.mxu0 0.0
    %4450 = vmatprep.subr.mxu0 0.0
    %4451 = vmatpush1.msra.mxu0 0.0
    %4452 = vmatprep.subr.mxu0 0.0
    %4453 = vmatpush1.msra.mxu0 0.0
    %4454 = vmatprep.subr.mxu0 0.0
    %4455 = vmatpush1.msra.mxu0 0.0
    %4456 = vmatprep.subr.mxu0 0.0
    %4457 = vmatpush1.msra.mxu0 0.0
    %4458 = vmatprep.subr.mxu0 0.0
    %4459 = vmatpush1.msra.mxu0 0.0
    %4460 = vmatprep.subr.mxu0 0.0
    %4461 = vmatpush1.msra.mxu0 0.0
    %4462 = vmatprep.subr.mxu0 0.0
    %4463 = vmatpush1.msra.mxu0 0.0
    %4464 = vmatprep.subr.mxu0 0.0
    %4465 = vmatpush1.msra.mxu0 %v4425
    %4466 = vmatprep.subr.mxu0 0.0
    %4467 = vmatpush1.msra.mxu0 %v4423
    %4468 = vmatprep.subr.mxu0 0.0
    %4469 = vmatpush1.msra.mxu0 %v4421
    %4470 = vmatprep.subr.mxu0 0.0
    %4471 = vmatpush2.msra.mxu0 0.0
    %4472 = vmatprep.subr.mxu0 0.0
    %4473 = vmatpush2.msra.mxu0 0.0
    %4474 = vmatprep.subr.mxu0 0.0
    %4475 = vmatpush2.msra.mxu0 0.0
    %4476 = vmatprep.subr.mxu0 0.0
    %4477 = vmatpush2.msra.mxu0 0.0
    %4478 = vmatprep.subr.mxu0 0.0
    %4479 = vmatpush2.msra.mxu0 0.0
    %4480 = vmatprep.subr.mxu0 0.0
    %4481 = vmatpush2.msra.mxu0 0.0
    %4482 = vmatprep.subr.mxu0 0.0
    %4483 = vmatpush2.msra.mxu0 0.0
    %4484 = vmatprep.subr.mxu0 0.0
    %4485 = vmatpush2.msra.mxu0 0.0
    %4486 = vmatprep.subr.mxu0 0.0
    %4487 = vmatpush2.msra.mxu0 0.0
    %4488 = vmatprep.subr.mxu0 0.0
    %4489 = vmatpush2.msra.mxu0 0.0
    %4490 = vmatprep.subr.mxu0 0.0
    %4491 = vmatpush2.msra.mxu0 0.0
    %4492 = vmatprep.subr.mxu0 0.0
    %4493 = vmatpush2.msra.mxu0 0.0
    %4494 = vmatprep.subr.mxu0 0.0
    %4495 = vmatpush2.msra.mxu0 0.0
    %4496 = vmatprep.subr.mxu0 0.0
    %4497 = vmatpush2.msra.mxu0 0.0
    %4498 = vmatprep.subr.mxu0 0.0
    %4499 = vmatpush2.msra.mxu0 0.0
    %4500 = vmatprep.subr.mxu0 0.0
    %4501 = vmatpush2.msra.mxu0 0.0
    %4502 = vmatprep.mubr.f32.mxu0 0.0
    %4503 = vmatmul.mubr.f32.gmra.mxu0 %v4430
    %v4504 = vpop.f32.mrf.mxu0
    %v4505 = vadd.f32 0.0, %v4504
    %v4506 = vpop.f32.mrf.mxu0
    %4507 = vmatprep.mubr.f32.mxu0 0.0
    %4508 = vmatmul.mubr.f32.gmra.mxu0 %v4433
    %v4509 = vpop.f32.mrf.mxu0
    %v4510 = vadd.f32 0.0, %v4509
    %v4511 = vpop.f32.mrf.mxu0
    %4512 = vmatprep.mubr.f32.mxu0 0.0
    %4513 = vmatmul.mubr.f32.gmra.mxu0 %v4436
    %v4514 = vpop.f32.mrf.mxu0
    %v4515 = vadd.f32 0.0, %v4514
    %v4516 = vpop.f32.mrf.mxu0
    %4517 = vdwg.mxu0
    %v4519 = vsel %vm1400, %v4505, 0
    %v4522 = vsel %vm1400, %v4510, 0
    %v4525 = vsel %vm1400, %v4515, 0
    %4527 = vmatprep.subr.mxu0 0.0
    %4528 = vmatpush1.msra.mxu0 0.0
    %4529 = vmatprep.subr.mxu0 0.0
    %4530 = vmatpush1.msra.mxu0 0.0
    %4531 = vmatprep.subr.mxu0 0.0
    %4532 = vmatpush1.msra.mxu0 0.0
    %4533 = vmatprep.subr.mxu0 0.0
    %4534 = vmatpush1.msra.mxu0 0.0
    %4535 = vmatprep.subr.mxu0 0.0
    %4536 = vmatpush1.msra.mxu0 0.0
    %4537 = vmatprep.subr.mxu0 0.0
    %4538 = vmatpush1.msra.mxu0 0.0
    %4539 = vmatprep.subr.mxu0 0.0
    %4540 = vmatpush1.msra.mxu0 0.0
    %4541 = vmatprep.subr.mxu0 0.0
    %4542 = vmatpush1.msra.mxu0 0.0
    %4543 = vmatprep.subr.mxu0 0.0
    %4544 = vmatpush1.msra.mxu0 0.0
    %4545 = vmatprep.subr.mxu0 0.0
    %4546 = vmatpush1.msra.mxu0 0.0
    %4547 = vmatprep.subr.mxu0 0.0
    %4548 = vmatpush1.msra.mxu0 0.0
    %4549 = vmatprep.subr.mxu0 0.0
    %4550 = vmatpush1.msra.mxu0 0.0
    %4551 = vmatprep.subr.mxu0 0.0
    %4552 = vmatpush1.msra.mxu0 0.0
    %4553 = vmatprep.subr.mxu0 0.0
    %4554 = vmatpush1.msra.mxu0 0.0
    %4555 = vmatprep.subr.mxu0 0.0
    %4556 = vmatpush1.msra.mxu0 0.0
    %4557 = vmatprep.subr.mxu0 0.0
    %4558 = vmatpush1.msra.mxu0 %v3280
    %4559 = vmatprep.subr.mxu0 0.0
    %4560 = vmatpush2.msra.mxu0 0.0
    %4561 = vmatprep.subr.mxu0 0.0
    %4562 = vmatpush2.msra.mxu0 0.0
    %4563 = vmatprep.subr.mxu0 0.0
    %4564 = vmatpush2.msra.mxu0 0.0
    %4565 = vmatprep.subr.mxu0 0.0
    %4566 = vmatpush2.msra.mxu0 0.0
    %4567 = vmatprep.subr.mxu0 0.0
    %4568 = vmatpush2.msra.mxu0 0.0
    %4569 = vmatprep.subr.mxu0 0.0
    %4570 = vmatpush2.msra.mxu0 0.0
    %4571 = vmatprep.subr.mxu0 0.0
    %4572 = vmatpush2.msra.mxu0 0.0
    %4573 = vmatprep.subr.mxu0 0.0
    %4574 = vmatpush2.msra.mxu0 0.0
    %4575 = vmatprep.subr.mxu0 0.0
    %4576 = vmatpush2.msra.mxu0 0.0
    %4577 = vmatprep.subr.mxu0 0.0
    %4578 = vmatpush2.msra.mxu0 0.0
    %4579 = vmatprep.subr.mxu0 0.0
    %4580 = vmatpush2.msra.mxu0 0.0
    %4581 = vmatprep.subr.mxu0 0.0
    %4582 = vmatpush2.msra.mxu0 0.0
    %4583 = vmatprep.subr.mxu0 0.0
    %4584 = vmatpush2.msra.mxu0 0.0
    %4585 = vmatprep.subr.mxu0 0.0
    %4586 = vmatpush2.msra.mxu0 0.0
    %4587 = vmatprep.subr.mxu0 0.0
    %4588 = vmatpush2.msra.mxu0 0.0
    %4589 = vmatprep.subr.mxu0 0.0
    %4590 = vmatpush2.msra.mxu0 0.0
    %4591 = vmatprep.mubr.f32.mxu0 0.0
    %4592 = vmatmul.mubr.f32.gmra.mxu0 %v4519
    %v4593 = vpop.f32.mrf.mxu0
    %v4594 = vadd.f32 0.0, %v4593
    %v4595 = vpop.f32.mrf.mxu0
    %4596 = vmatprep.mubr.f32.mxu0 0.0
    %4597 = vmatmul.mubr.f32.gmra.mxu0 %v4522
    %v4598 = vpop.f32.mrf.mxu0
    %v4599 = vadd.f32 0.0, %v4598
    %v4600 = vpop.f32.mrf.mxu0
    %4601 = vmatprep.mubr.f32.mxu0 0.0
    %4602 = vmatmul.mubr.f32.gmra.mxu0 %v4525
    %v4603 = vpop.f32.mrf.mxu0
    %v4604 = vadd.f32 0.0, %v4603
    %v4605 = vpop.f32.mrf.mxu0
    %4606 = vdwg.mxu0
    %v4607 = vadd.f32 %v4277, %v4594
    %v4608 = vadd.f32 %v4278, %v4599
    %v4609 = vadd.f32 %v4279, %v4604
    %v4610 = vadd.f32 %v3008, %v4607
    %v4611 = vadd.f32 %v3009, %v4608
    %v4612 = vadd.f32 %v3010, %v4609
    %s4613 = scalar_lea.vmem %s49, 1
    %v4614 = vld [vmem:[%s4613] sm:$0x1]
    %s4615 = scalar_lea.vmem %s51, 1
    %v4616 = vld [vmem:[%s4615] sm:$0x1]
    %v4617 = vsel %vm816, %v4610, 0.0
    %4618 = vadd.xlane.f32.xlu0 %v4617
    %v4619 = vpop.xlane.xlu0 %4618
    %v4620 = vsel %vm816, %v4611, 0.0
    %4621 = vadd.xlane.f32.xlu0 %v4620
    %v4622 = vpop.xlane.xlu0 %4621
    %v4623 = vsel %vm816, %v4612, 0.0
    %4624 = vadd.xlane.f32.xlu0 %v4623
    %v4625 = vpop.xlane.xlu0 %4624
    %v4626 = vmul.f32 %v4619, %v1065
    %v4627 = vmul.f32 %v4622, %v1065
    %v4628 = vmul.f32 %v4625, %v1065
    %v4629 = vsub.f32 %v4610, %v4626
    %v4630 = vsub.f32 %v4611, %v4627
    %v4631 = vsub.f32 %v4612, %v4628
    %v4632 = vmul.f32 %v4629, %v4629
    %v4633 = vmul.f32 %v4630, %v4630
    %v4634 = vmul.f32 %v4631, %v4631
    %v4635 = vsel %vm816, %v4632, 0.0
    %4636 = vadd.xlane.f32.xlu0 %v4635
    %v4637 = vpop.xlane.xlu0 %4636
    %v4638 = vsel %vm816, %v4633, 0.0
    %4639 = vadd.xlane.f32.xlu0 %v4638
    %v4640 = vpop.xlane.xlu0 %4639
    %v4641 = vsel %vm816, %v4634, 0.0
    %4642 = vadd.xlane.f32.xlu0 %v4641
    %v4643 = vpop.xlane.xlu0 %4642
    %v4644 = vmul.f32 %v4637, %v1065
    %v4645 = vmul.f32 %v4640, %v1065
    %v4646 = vmul.f32 %v4643, %v1065
    %v4647 = vadd.f32 %v4644, 1e-05
    %v4648 = vadd.f32 %v4645, 1e-05
    %v4649 = vadd.f32 %v4646, 1e-05
    %v4650 = vrsqrt.pop %v4647
    %v4651 = vrsqrt.pop %v4648
    %v4652 = vrsqrt.pop %v4649
    %v4653 = vmul.f32 %v4629, %v4650
    %v4654 = vmul.f32 %v4630, %v4651
    %v4655 = vmul.f32 %v4631, %v4652
    %v4657 = vlaneseq
    %v4658 = vshrl.u32 %v4657, 7
    %v4659 = vsub.s32 0, %v4658
    %v4660 = vrot.slane %v4614, %v4659
    %v4662 = vmul.f32 %v4653, %v4660
    %v4663 = vmul.f32 %v4654, %v4660
    %v4664 = vmul.f32 %v4655, %v4660
    %v4666 = vlaneseq
    %v4667 = vshrl.u32 %v4666, 7
    %v4668 = vsub.s32 0, %v4667
    %v4669 = vrot.slane %v4616, %v4668
    %v4671 = vadd.f32 %v4662, %v4669
    %v4672 = vadd.f32 %v4663, %v4669
    %v4673 = vadd.f32 %v4664, %v4669
    %s4674 = scalar_lea.vmem %s53, 32
    %v4675 = vld [vmem:[%s4674] sm:$0xff]
    %v4676 = vld [vmem:[%s4674 + $0x8] sm:$0xff]
    %v4677 = vld [vmem:[%s4674 + $0x10] sm:$0xff]
    %v4678 = vld [vmem:[%s4674 + $0x18] sm:$0xff]
    %s4679 = scalar_lea.vmem %s55, 1
    %v4680 = vld [vmem:[%s4679] sm:$0x1]
    %v4682 = vlaneseq
    %v4683 = vshrl.u32 %v4682, 7
    %v4684 = vsub.s32 0, %v4683
    %v4685 = vrot.slane %v4680, %v4684
    %v4688 = vsel %vm816, %v4671, 0
    %v4691 = vsel %vm816, %v4672, 0
    %v4694 = vsel %vm816, %v4673, 0
    %4696 = vmatprep.subr.mxu0 0.0
    %4697 = vmatpush1.msra.mxu0 0.0
    %4698 = vmatprep.subr.mxu0 0.0
    %4699 = vmatpush1.msra.mxu0 0.0
    %4700 = vmatprep.subr.mxu0 0.0
    %4701 = vmatpush1.msra.mxu0 0.0
    %4702 = vmatprep.subr.mxu0 0.0
    %4703 = vmatpush1.msra.mxu0 0.0
    %4704 = vmatprep.subr.mxu0 0.0
    %4705 = vmatpush1.msra.mxu0 0.0
    %4706 = vmatprep.subr.mxu0 0.0
    %4707 = vmatpush1.msra.mxu0 0.0
    %4708 = vmatprep.subr.mxu0 0.0
    %4709 = vmatpush1.msra.mxu0 0.0
    %4710 = vmatprep.subr.mxu0 0.0
    %4711 = vmatpush1.msra.mxu0 0.0
    %4712 = vmatprep.subr.mxu0 0.0
    %4713 = vmatpush1.msra.mxu0 0.0
    %4714 = vmatprep.subr.mxu0 0.0
    %4715 = vmatpush1.msra.mxu0 0.0
    %4716 = vmatprep.subr.mxu0 0.0
    %4717 = vmatpush1.msra.mxu0 0.0
    %4718 = vmatprep.subr.mxu0 0.0
    %4719 = vmatpush1.msra.mxu0 0.0
    %4720 = vmatprep.subr.mxu0 0.0
    %4721 = vmatpush1.msra.mxu0 %v4678
    %4722 = vmatprep.subr.mxu0 0.0
    %4723 = vmatpush1.msra.mxu0 %v4677
    %4724 = vmatprep.subr.mxu0 0.0
    %4725 = vmatpush1.msra.mxu0 %v4676
    %4726 = vmatprep.subr.mxu0 0.0
    %4727 = vmatpush1.msra.mxu0 %v4675
    %4728 = vmatprep.subr.mxu0 0.0
    %4729 = vmatpush2.msra.mxu0 0.0
    %4730 = vmatprep.subr.mxu0 0.0
    %4731 = vmatpush2.msra.mxu0 0.0
    %4732 = vmatprep.subr.mxu0 0.0
    %4733 = vmatpush2.msra.mxu0 0.0
    %4734 = vmatprep.subr.mxu0 0.0
    %4735 = vmatpush2.msra.mxu0 0.0
    %4736 = vmatprep.subr.mxu0 0.0
    %4737 = vmatpush2.msra.mxu0 0.0
    %4738 = vmatprep.subr.mxu0 0.0
    %4739 = vmatpush2.msra.mxu0 0.0
    %4740 = vmatprep.subr.mxu0 0.0
    %4741 = vmatpush2.msra.mxu0 0.0
    %4742 = vmatprep.subr.mxu0 0.0
    %4743 = vmatpush2.msra.mxu0 0.0
    %4744 = vmatprep.subr.mxu0 0.0
    %4745 = vmatpush2.msra.mxu0 0.0
    %4746 = vmatprep.subr.mxu0 0.0
    %4747 = vmatpush2.msra.mxu0 0.0
    %4748 = vmatprep.subr.mxu0 0.0
    %4749 = vmatpush2.msra.mxu0 0.0
    %4750 = vmatprep.subr.mxu0 0.0
    %4751 = vmatpush2.msra.mxu0 0.0
    %4752 = vmatprep.subr.mxu0 0.0
    %4753 = vmatpush2.msra.mxu0 0.0
    %4754 = vmatprep.subr.mxu0 0.0
    %4755 = vmatpush2.msra.mxu0 0.0
    %4756 = vmatprep.subr.mxu0 0.0
    %4757 = vmatpush2.msra.mxu0 0.0
    %4758 = vmatprep.subr.mxu0 0.0
    %4759 = vmatpush2.msra.mxu0 0.0
    %4760 = vmatprep.mubr.f32.mxu0 0.0
    %4761 = vmatmul.mubr.f32.gmra.mxu0 %v4688
    %v4762 = vpop.f32.mrf.mxu0
    %v4763 = vadd.f32 %v4685, %v4762
    %v4764 = vpop.f32.mrf.mxu0
    %4765 = vmatprep.mubr.f32.mxu0 0.0
    %4766 = vmatmul.mubr.f32.gmra.mxu0 %v4691
    %v4767 = vpop.f32.mrf.mxu0
    %v4768 = vadd.f32 %v4685, %v4767
    %v4769 = vpop.f32.mrf.mxu0
    %4770 = vmatprep.mubr.f32.mxu0 0.0
    %4771 = vmatmul.mubr.f32.gmra.mxu0 %v4694
    %v4772 = vpop.f32.mrf.mxu0
    %v4773 = vadd.f32 %v4685, %v4772
    %v4774 = vpop.f32.mrf.mxu0
    %4775 = vdwg.mxu0
    %v4776 = vmul.f32 %v4763, %v4763
    %v4777 = vmul.f32 %v4768, %v4768
    %v4778 = vmul.f32 %v4773, %v4773
    %v4779 = vmul.f32 %v4763, %v4776
    %v4780 = vmul.f32 %v4768, %v4777
    %v4781 = vmul.f32 %v4773, %v4778
    %v4782 = vmul.f32 %v4779, 0.044715
    %v4783 = vmul.f32 %v4780, 0.044715
    %v4784 = vmul.f32 %v4781, 0.044715
    %v4785 = vadd.f32 %v4763, %v4782
    %v4786 = vadd.f32 %v4768, %v4783
    %v4787 = vadd.f32 %v4773, %v4784
    %v4788 = vmul.f32 %v4785, 0.7978846
    %v4789 = vmul.f32 %v4786, 0.7978846
    %v4790 = vmul.f32 %v4787, 0.7978846
    %v4791 = vtanh.pop %v4788
    %v4792 = vtanh.pop %v4789
    %v4793 = vtanh.pop %v4790
    %v4794 = vadd.f32 %v4791, 1.0
    %v4795 = vadd.f32 %v4792, 1.0
    %v4796 = vadd.f32 %v4793, 1.0
    %v4797 = vmul.f32 %v4794, 0.5
    %v4798 = vmul.f32 %v4795, 0.5
    %v4799 = vmul.f32 %v4796, 0.5
    %v4800 = vmul.f32 %v4763, %v4797
    %v4801 = vmul.f32 %v4768, %v4798
    %v4802 = vmul.f32 %v4773, %v4799
    %s4803 = scalar_lea.vmem %s57, 128
    %v4804 = vld [vmem:[%s4803] sm:$0xff]
    %v4805 = vld [vmem:[%s4803 + $0x8] sm:$0xff]
    %v4806 = vld [vmem:[%s4803 + $0x10] sm:$0xff]
    %v4807 = vld [vmem:[%s4803 + $0x18] sm:$0xff]
    %v4808 = vld [vmem:[%s4803 + $0x20] sm:$0xff]
    %v4809 = vld [vmem:[%s4803 + $0x28] sm:$0xff]
    %v4810 = vld [vmem:[%s4803 + $0x30] sm:$0xff]
    %v4811 = vld [vmem:[%s4803 + $0x38] sm:$0xff]
    %v4812 = vld [vmem:[%s4803 + $0x40] sm:$0xff]
    %v4813 = vld [vmem:[%s4803 + $0x48] sm:$0xff]
    %v4814 = vld [vmem:[%s4803 + $0x50] sm:$0xff]
    %v4815 = vld [vmem:[%s4803 + $0x58] sm:$0xff]
    %v4816 = vld [vmem:[%s4803 + $0x60] sm:$0xff]
    %v4817 = vld [vmem:[%s4803 + $0x68] sm:$0xff]
    %v4818 = vld [vmem:[%s4803 + $0x70] sm:$0xff]
    %v4819 = vld [vmem:[%s4803 + $0x78] sm:$0xff]
    %4820 = vmatprep.subr.mxu0 0.0
    %4821 = vmatpush1.msra.mxu0 %v4819
    %4822 = vmatprep.subr.mxu0 0.0
    %4823 = vmatpush1.msra.mxu0 %v4818
    %4824 = vmatprep.subr.mxu0 0.0
    %4825 = vmatpush1.msra.mxu0 %v4817
    %4826 = vmatprep.subr.mxu0 0.0
    %4827 = vmatpush1.msra.mxu0 %v4816
    %4828 = vmatprep.subr.mxu0 0.0
    %4829 = vmatpush1.msra.mxu0 %v4815
    %4830 = vmatprep.subr.mxu0 0.0
    %4831 = vmatpush1.msra.mxu0 %v4814
    %4832 = vmatprep.subr.mxu0 0.0
    %4833 = vmatpush1.msra.mxu0 %v4813
    %4834 = vmatprep.subr.mxu0 0.0
    %4835 = vmatpush1.msra.mxu0 %v4812
    %4836 = vmatprep.subr.mxu0 0.0
    %4837 = vmatpush1.msra.mxu0 %v4811
    %4838 = vmatprep.subr.mxu0 0.0
    %4839 = vmatpush1.msra.mxu0 %v4810
    %4840 = vmatprep.subr.mxu0 0.0
    %4841 = vmatpush1.msra.mxu0 %v4809
    %4842 = vmatprep.subr.mxu0 0.0
    %4843 = vmatpush1.msra.mxu0 %v4808
    %4844 = vmatprep.subr.mxu0 0.0
    %4845 = vmatpush1.msra.mxu0 %v4807
    %4846 = vmatprep.subr.mxu0 0.0
    %4847 = vmatpush1.msra.mxu0 %v4806
    %4848 = vmatprep.subr.mxu0 0.0
    %4849 = vmatpush1.msra.mxu0 %v4805
    %4850 = vmatprep.subr.mxu0 0.0
    %4851 = vmatpush1.msra.mxu0 %v4804
    %4852 = vmatprep.subr.mxu0 0.0
    %4853 = vmatpush2.msra.mxu0 0.0
    %4854 = vmatprep.subr.mxu0 0.0
    %4855 = vmatpush2.msra.mxu0 0.0
    %4856 = vmatprep.subr.mxu0 0.0
    %4857 = vmatpush2.msra.mxu0 0.0
    %4858 = vmatprep.subr.mxu0 0.0
    %4859 = vmatpush2.msra.mxu0 0.0
    %4860 = vmatprep.subr.mxu0 0.0
    %4861 = vmatpush2.msra.mxu0 0.0
    %4862 = vmatprep.subr.mxu0 0.0
    %4863 = vmatpush2.msra.mxu0 0.0
    %4864 = vmatprep.subr.mxu0 0.0
    %4865 = vmatpush2.msra.mxu0 0.0
    %4866 = vmatprep.subr.mxu0 0.0
    %4867 = vmatpush2.msra.mxu0 0.0
    %4868 = vmatprep.subr.mxu0 0.0
    %4869 = vmatpush2.msra.mxu0 0.0
    %4870 = vmatprep.subr.mxu0 0.0
    %4871 = vmatpush2.msra.mxu0 0.0
    %4872 = vmatprep.subr.mxu0 0.0
    %4873 = vmatpush2.msra.mxu0 0.0
    %4874 = vmatprep.subr.mxu0 0.0
    %4875 = vmatpush2.msra.mxu0 0.0
    %4876 = vmatprep.subr.mxu0 0.0
    %4877 = vmatpush2.msra.mxu0 0.0
    %4878 = vmatprep.subr.mxu0 0.0
    %4879 = vmatpush2.msra.mxu0 0.0
    %4880 = vmatprep.subr.mxu0 0.0
    %4881 = vmatpush2.msra.mxu0 0.0
    %4882 = vmatprep.subr.mxu0 0.0
    %4883 = vmatpush2.msra.mxu0 0.0
    %4884 = vmatprep.mubr.f32.mxu0 0.0
    %4885 = vmatmul.mubr.f32.gmra.mxu0 %v4800
    %v4886 = vpop.f32.mrf.mxu0
    %v4887 = vadd.f32 0.0, %v4886
    %v4888 = vpop.f32.mrf.mxu0
    %4889 = vmatprep.mubr.f32.mxu0 0.0
    %4890 = vmatmul.mubr.f32.gmra.mxu0 %v4801
    %v4891 = vpop.f32.mrf.mxu0
    %v4892 = vadd.f32 0.0, %v4891
    %v4893 = vpop.f32.mrf.mxu0
    %4894 = vmatprep.mubr.f32.mxu0 0.0
    %4895 = vmatmul.mubr.f32.gmra.mxu0 %v4802
    %v4896 = vpop.f32.mrf.mxu0
    %v4897 = vadd.f32 0.0, %v4896
    %v4898 = vpop.f32.mrf.mxu0
    %4899 = vdwg.mxu0
    %v4900 = vadd.f32 %v4610, %v4887
    %v4901 = vadd.f32 %v4611, %v4892
    %v4902 = vadd.f32 %v4612, %v4897
    %s4903 = scalar_lea.vmem %s59, 1
    %v4904 = vld [vmem:[%s4903] sm:$0x1]
    %v4906 = vlaneseq
    %v4907 = vshrl.u32 %v4906, 7
    %v4908 = vsub.s32 0, %v4907
    %v4909 = vrot.slane %v4904, %v4908
    %v4911 = vadd.f32 %v4900, %v4909
    %v4912 = vadd.f32 %v4901, %v4909
    %v4913 = vadd.f32 %v4902, %v4909
    %v4914 = vld [vmem:[%s61] sm:$0x1]
    %v4915 = vld [vmem:[%s63] sm:$0x1]
    %v4916 = vsel %vm816, %v4911, 0.0
    %4917 = vadd.xlane.f32.xlu0 %v4916
    %v4918 = vpop.xlane.xlu0 %4917
    %v4919 = vsel %vm816, %v4912, 0.0
    %4920 = vadd.xlane.f32.xlu0 %v4919
    %v4921 = vpop.xlane.xlu0 %4920
    %v4922 = vsel %vm816, %v4913, 0.0
    %4923 = vadd.xlane.f32.xlu0 %v4922
    %v4924 = vpop.xlane.xlu0 %4923
    %v4925 = vmul.f32 %v4918, %v1065
    %v4926 = vmul.f32 %v4921, %v1065
    %v4927 = vmul.f32 %v4924, %v1065
    %v4928 = vsub.f32 %v4911, %v4925
    %v4929 = vsub.f32 %v4912, %v4926
    %v4930 = vsub.f32 %v4913, %v4927
    %v4931 = vmul.f32 %v4928, %v4928
    %v4932 = vmul.f32 %v4929, %v4929
    %v4933 = vmul.f32 %v4930, %v4930
    %v4934 = vsel %vm816, %v4931, 0.0
    %4935 = vadd.xlane.f32.xlu0 %v4934
    %v4936 = vpop.xlane.xlu0 %4935
    %v4937 = vsel %vm816, %v4932, 0.0
    %4938 = vadd.xlane.f32.xlu0 %v4937
    %v4939 = vpop.xlane.xlu0 %4938
    %v4940 = vsel %vm816, %v4933, 0.0
    %4941 = vadd.xlane.f32.xlu0 %v4940
    %v4942 = vpop.xlane.xlu0 %4941
    %v4943 = vmul.f32 %v4936, %v1065
    %v4944 = vmul.f32 %v4939, %v1065
    %v4945 = vmul.f32 %v4942, %v1065
    %v4946 = vadd.f32 %v4943, 1e-05
    %v4947 = vadd.f32 %v4944, 1e-05
    %v4948 = vadd.f32 %v4945, 1e-05
    %v4949 = vrsqrt.pop %v4946
    %v4950 = vrsqrt.pop %v4947
    %v4951 = vrsqrt.pop %v4948
    %v4952 = vmul.f32 %v4928, %v4949
    %v4953 = vmul.f32 %v4929, %v4950
    %v4954 = vmul.f32 %v4930, %v4951
    %v4956 = vlaneseq
    %v4957 = vshrl.u32 %v4956, 7
    %v4958 = vsub.s32 0, %v4957
    %v4959 = vrot.slane %v4914, %v4958
    %v4961 = vmul.f32 %v4952, %v4959
    %v4962 = vmul.f32 %v4953, %v4959
    %v4963 = vmul.f32 %v4954, %v4959
    %v4965 = vlaneseq
    %v4966 = vshrl.u32 %v4965, 7
    %v4967 = vsub.s32 0, %v4966
    %v4968 = vrot.slane %v4915, %v4967
    %v4970 = vadd.f32 %v4961, %v4968
    %v4971 = vadd.f32 %v4962, %v4968
    %v4972 = vadd.f32 %v4963, %v4968
    %4973 = vst.msk [vmem:[#allocation3] sm:$0xff] %vm816, %v4970
    %4974 = vst.msk [vmem:[#allocation3 + $0x8] sm:$0xff] %vm816, %v4971
    %4975 = vst.msk [vmem:[#allocation3 + $0x10] sm:$0xff] %vm816, %v4972
    // Predicated region
    $region130: #{forward_fn.1} parent=1 // pred_check
      _
    $region131: #{forward_fn.1} parent=1 // pred_check_branch
      %4977 = sbr.rel (0) target = $region133
    $region132: #{forward_fn.1} parent=1 // pred_region
      %s4979 = ssub.s32 384, 384
      %4980 = vsyncadd [#allocation4], %s4979
      %s4981 = sshll.u32 [#allocation3], 4
      %s4982 = int_to_ptr.vmem [resolvable:$true] %s4981
      %4987 = dma.vmem_to_hbm [thread:$0]  %s4982, 384, %s65, [#allocation4], 128, 128, 8
    $region133: #{forward_fn.1} parent=1 // pred_fallthru
      _
    // Predicated region
    $region134: #{forward_fn.1} parent=1 // pred_check
      _
    $region135: #{forward_fn.1} parent=1 // pred_check_branch
      %4989 = sbr.rel (0) target = $region137
    $region136: #{forward_fn.1} parent=1 // pred_region
      %4990 = dma.done [#allocation4], 384
    $region137: #{forward_fn.1} parent=1 // pred_fallthru
      _
    %4991 = vsyncpa [#allocation4], 1

</llo_original>
